<compile_context>
chip_gen: v5e
topology: v5e:2x2
jax: 0.10.0
libtpu: 0.0.40
codegen_flags: <defaults>
</compile_context>

<pallas_src>
import numpy as np
import jax
import jax.numpy as jnp
from jax import lax
from jax.experimental import pallas as pl
from jax.experimental.pallas import tpu as pltpu

_SUB = 8      # f32 sublane extent
_LANE = 128   # f32 lane extent


def _round_up(x, m):
    return ((x + m - 1) // m) * m


def _cdiv(a, b):
    return -(-a // b)


def _dihedral_kernel(s_ref, g_ref, o_ref):
    """s_ref: [3, TD, A] ±1 selection rows; g_ref: [3, A, TC] xyz coords; o_ref: [2, TD, TC]."""
    gx = g_ref[0].astype(jnp.float32)   # [A, TC]
    gy = g_ref[1].astype(jnp.float32)
    gz = g_ref[2].astype(jnp.float32)

    def bond(b):
        # Fused gather + difference: bond vectors via MXU (selection-matrix matmul).
        s = s_ref[b]                    # [TD, A]
        mm = lambda g: jnp.dot(s, g, preferred_element_type=jnp.float32,
                               precision=lax.Precision.HIGHEST)
        return mm(gx), mm(gy), mm(gz)   # each [TD, TC]

    a12 = bond(0)
    a23 = bond(1)
    a34 = bond(2)

    def cross(a, b):
        ax, ay, az = a
        bx, by, bz = b
        return (ay * bz - az * by, az * bx - ax * bz, ax * by - ay * bx)

    def dot3(a, b):
        return a[0] * b[0] + a[1] * b[1] + a[2] * b[2]

    def inv_norm(v):
        # torch.nn.functional.normalize: v / max(||v||, 1e-12)
        #   -> 1/max(||v||,1e-12) == rsqrt(max(||v||^2, 1e-24)): one EUP op.
        return lax.rsqrt(jnp.maximum(dot3(v, v), 1e-24))

    c1 = cross(a12, a23)   # ∝ vp1
    c2 = cross(a23, a34)   # ∝ vp2
    c3 = cross(c1, a23)    # ∝ vp3 (positive vp1 scale cancels under normalisation)
    inv1 = inv_norm(c1)
    inv2 = inv_norm(c2)
    inv3 = inv_norm(c3)

    sp1 = dot3(c1, c2) * (inv1 * inv2)   # [TD, TC]
    sp2 = dot3(c3, c2) * (inv3 * inv2)   # [TD, TC]

    o_ref[0] = (-sp2).astype(o_ref.dtype)
    o_ref[1] = sp1.astype(o_ref.dtype)


def _vmem_config():
    """(per-plane block element target, vmem_limit_bytes) derived from chip VMEM."""
    try:
        cap = int(getattr(pltpu.get_tpu_info(), "vmem_capacity_bytes", 0))
    except Exception:
        cap = 0
    if cap > 96 * 1024 * 1024:              # v5e / v6e: 128 MiB VMEM per TensorCore
        return 256 * 1024, 64 * 1024 * 1024
    # v7x (64 MiB per TensorCore) or unknown: conservative headroom against spills.
    return 64 * 1024, 40 * 1024 * 1024


def _pick_tiles(d, c, a_pad, target_elems, vmem_limit):
    """Lane/sublane-aligned (TD, D_pad, n_db, TC, C_pad, n_cb) with no masked tail blocks."""
    budget = vmem_limit // 3                # per-operand double-buffered budget
    op_cap = max(1, budget // (2 * 4 * 3 * a_pad))   # elems along the blocked axis

    # --- dihedral (sublane) axis: selection block is [3, TD, A_pad] ---
    td_cap = min(256, max(_SUB, (op_cap // _SUB) * _SUB))
    d8 = _round_up(max(d, 1), _SUB)
    n_db = _cdiv(d8, td_cap)
    td = _round_up(_cdiv(d, n_db), _SUB)
    d_pad = n_db * td

    # --- conformation (lane) axis: geoms block is [3, A_pad, TC] ---
    c128 = _round_up(max(c, 1), _LANE)
    tc_cap = max(_LANE, (op_cap // _LANE) * _LANE)
    tc_target = max(_LANE, min(tc_cap, (target_elems // td) // _LANE * _LANE))
    n_cb = _cdiv(c128, tc_target)
    if c128 >= 2 * _LANE:
        n_cb = max(n_cb, 2)   # >=2 parallel blocks so both v7x TensorCores get work
    tc = _round_up(_cdiv(c, n_cb), _LANE)
    c_pad = n_cb * tc
    return td, d_pad, n_db, tc, c_pad, n_cb


def dihedral_forward(geoms, atoms):
    """geoms: [n_atoms, 3, C] float; atoms: array-like [D, 4] int. Returns [2*D, C]."""
    atoms = np.asarray(atoms).reshape(-1, 4)
    d = atoms.shape[0]
    n_atoms, three, c = geoms.shape
    assert three == 3
    dtype = geoms.dtype

    a_pad = _round_up(n_atoms, _SUB)
    target_elems, vmem_limit = _vmem_config()
    td, d_pad, n_db, tc, c_pad, n_cb = _pick_tiles(d, c, a_pad, target_elems, vmem_limit)

    # ±1 selection matrices (static, host-side): bond_b[d] = geoms[atoms[d,b+1]] - geoms[atoms[d,b]].
    # Padded dihedral rows are all-zero -> zero bonds -> finite zeros downstream.
    sel = np.zeros((3, d_pad, a_pad), dtype=np.float32)
    rows = np.arange(d)
    for b in range(3):
        sel[b, rows, atoms[:, b + 1]] += 1.0
        sel[b, rows, atoms[:, b]] -= 1.0
    sel = jnp.asarray(sel)

    # geoms -> [3(xyz), A_pad, C_pad], zero-padded (padded atoms/columns stay finite, sliced off later).
    g = jnp.transpose(geoms, (1, 0, 2))
    g = jnp.pad(g, ((0, 0), (0, a_pad - n_atoms), (0, c_pad - c)))

    # C blocks outer / D blocks inner: the geoms column block is fetched exactly once per column,
    # only the (smaller) selection block is re-streamed across column blocks.
    grid = (n_cb, n_db)
    in_specs = [
        pl.BlockSpec((3, td, a_pad), lambda j, i: (0, i, 0)),   # selection rows (per D block)
        pl.BlockSpec((3, a_pad, tc), lambda j, i: (0, 0, j)),   # coordinates    (per C block)
    ]
    out_spec = pl.BlockSpec((2, td, tc), lambda j, i: (0, i, j))

    cost = pl.CostEstimate(
        flops=18 * d_pad * a_pad * c_pad + 61 * d_pad * c_pad,
        transcendentals=3 * d_pad * c_pad,
        bytes_accessed=4 * (n_cb * 3 * d_pad * a_pad + 3 * a_pad * c_pad + 2 * d_pad * c_pad),
    )

    out = pl.pallas_call(
        _dihedral_kernel,
        out_shape=jax.ShapeDtypeStruct((2, d_pad, c_pad), dtype),
        grid=grid,
        in_specs=in_specs,
        out_specs=out_spec,
        compiler_params=pltpu.CompilerParams(
            dimension_semantics=("parallel", "parallel"),
            vmem_limit_bytes=vmem_limit,
        ),
        cost_estimate=cost,
    )(sel, g)

    if d_pad != d or c_pad != c:
        out = out[:, :d, :c]
    # stack([-sp2, sp1]) -> [2, D, C] -> reshape(2*D, C)  (row-major, same as torch)
    return out.reshape(2 * d, c)


def _dihedral_reference(geoms, atoms):
    """Pure-JAX reference mirroring the PyTorch forward (for verification)."""
    atoms = np.asarray(atoms).reshape(-1, 4)
    a12 = geoms[atoms[:, 1]] - geoms[atoms[:, 0]]
    a23 = geoms[atoms[:, 2]] - geoms[atoms[:, 1]]
    a34 = geoms[atoms[:, 3]] - geoms[atoms[:, 2]]

    def norm(v):
        n = jnp.sqrt(jnp.sum(v * v, axis=1, keepdims=True))
        return v / jnp.maximum(n, 1e-12)

    vp1 = norm(jnp.cross(a12, a23, axis=1))
    vp2 = norm(jnp.cross(a23, a34, axis=1))
    vp3 = norm(jnp.cross(vp1, a23, axis=1))
    sp1 = jnp.sum(vp1 * vp2, axis=1)
    sp2 = jnp.sum(vp3 * vp2, axis=1)
    return jnp.stack([-sp2, sp1]).reshape(2 * atoms.shape[0], geoms.shape[2])


if __name__ == "__main__":
    # Small deterministic example exercising sublane padding (D=10 -> 16), lane
    # padding (C=320 -> 512 split into two 256-wide parallel blocks) and atom
    # padding (16 atoms -> contraction dim 16).
    n_atoms = 16
    n_conf = 320
    n_dih = 10
    atoms = np.array([[i, i + 1, i + 2, i + 3] for i in range(n_dih)], dtype=np.int32)

    key = jax.random.PRNGKey(0)
    geoms = jax.random.normal(key, (n_atoms, 3, n_conf), dtype=jnp.float32)

    fwd = jax.jit(lambda g: dihedral_forward(g, atoms))
    out = jax.block_until_ready(fwd(geoms))

    ref = jax.block_until_ready(_dihedral_reference(geoms, atoms))
    assert out.shape == (2 * n_dih, n_conf), out.shape
    np.testing.assert_allclose(np.asarray(out), np.asarray(ref), rtol=1e-5, atol=1e-5)

    print("KERNEL_OK")
</pallas_src>

<mosaic_0001>
module attributes {stable_mosaic.version = 11 : i64} {
  func.func @_dihedral_kernel(%arg0: i32, %arg1: i32, %arg2: memref<3x16x16xf32, #tpu.memory_space<vmem>>, %arg3: memref<3x16x256xf32, #tpu.memory_space<vmem>>, %arg4: memref<2x16x256xf32, #tpu.memory_space<vmem>>) attributes {dimension_semantics = [#tpu.dimension_semantics<parallel>, #tpu.dimension_semantics<parallel>], iteration_bounds = array<i64: 2, 1>, scalar_prefetch = 0 : i64, scratch_operands = 0 : i64, tpu.core_type = #tpu.core_type<tc>, window_params = [{transform_indices = @transform_0, window_bounds = array<i64: 3, 16, 16>}, {transform_indices = @transform_1, window_bounds = array<i64: 3, 16, 256>}, {transform_indices = @transform_2, window_bounds = array<i64: 2, 16, 256>}]} {
    %c0 = arith.constant 0 : index
    %c0_0 = arith.constant 0 : index
    %c0_1 = arith.constant 0 : index
    %0 = vector.load %arg3[%c0, %c0_0, %c0_1] : memref<3x16x256xf32, #tpu.memory_space<vmem>>, vector<1x16x256xf32>
    %1 = vector.shape_cast %0 : vector<1x16x256xf32> to vector<16x256xf32>
    %c1 = arith.constant 1 : index
    %c0_2 = arith.constant 0 : index
    %c0_3 = arith.constant 0 : index
    %2 = vector.load %arg3[%c1, %c0_2, %c0_3] : memref<3x16x256xf32, #tpu.memory_space<vmem>>, vector<1x16x256xf32>
    %3 = vector.shape_cast %2 : vector<1x16x256xf32> to vector<16x256xf32>
    %c2 = arith.constant 2 : index
    %c0_4 = arith.constant 0 : index
    %c0_5 = arith.constant 0 : index
    %4 = vector.load %arg3[%c2, %c0_4, %c0_5] : memref<3x16x256xf32, #tpu.memory_space<vmem>>, vector<1x16x256xf32>
    %5 = vector.shape_cast %4 : vector<1x16x256xf32> to vector<16x256xf32>
    %c0_6 = arith.constant 0 : index
    %c0_7 = arith.constant 0 : index
    %c0_8 = arith.constant 0 : index
    %6 = vector.load %arg2[%c0_6, %c0_7, %c0_8] : memref<3x16x16xf32, #tpu.memory_space<vmem>>, vector<1x16x16xf32>
    %7 = vector.shape_cast %6 : vector<1x16x16xf32> to vector<16x16xf32>
    %cst = arith.constant dense<0.000000e+00> : vector<16x256xf32>
    %8 = tpu.matmul %7, %1, %cst {dimension_numbers = #tpu.dot_dimension_numbers<[1], [0], [0], [1], [0, 0, 1, 1], [], []>, precision = #tpu.contract_precision<fp32>} : vector<16x16xf32>, vector<16x256xf32>, vector<16x256xf32> -> vector<16x256xf32>
    %cst_9 = arith.constant dense<0.000000e+00> : vector<16x256xf32>
    %9 = tpu.matmul %7, %3, %cst_9 {dimension_numbers = #tpu.dot_dimension_numbers<[1], [0], [0], [1], [0, 0, 1, 1], [], []>, precision = #tpu.contract_precision<fp32>} : vector<16x16xf32>, vector<16x256xf32>, vector<16x256xf32> -> vector<16x256xf32>
    %cst_10 = arith.constant dense<0.000000e+00> : vector<16x256xf32>
    %10 = tpu.matmul %7, %5, %cst_10 {dimension_numbers = #tpu.dot_dimension_numbers<[1], [0], [0], [1], [0, 0, 1, 1], [], []>, precision = #tpu.contract_precision<fp32>} : vector<16x16xf32>, vector<16x256xf32>, vector<16x256xf32> -> vector<16x256xf32>
    %c1_11 = arith.constant 1 : index
    %c0_12 = arith.constant 0 : index
    %c0_13 = arith.constant 0 : index
    %11 = vector.load %arg2[%c1_11, %c0_12, %c0_13] : memref<3x16x16xf32, #tpu.memory_space<vmem>>, vector<1x16x16xf32>
    %12 = vector.shape_cast %11 : vector<1x16x16xf32> to vector<16x16xf32>
    %cst_14 = arith.constant dense<0.000000e+00> : vector<16x256xf32>
    %13 = tpu.matmul %12, %1, %cst_14 {dimension_numbers = #tpu.dot_dimension_numbers<[1], [0], [0], [1], [0, 0, 1, 1], [], []>, precision = #tpu.contract_precision<fp32>} : vector<16x16xf32>, vector<16x256xf32>, vector<16x256xf32> -> vector<16x256xf32>
    %cst_15 = arith.constant dense<0.000000e+00> : vector<16x256xf32>
    %14 = tpu.matmul %12, %3, %cst_15 {dimension_numbers = #tpu.dot_dimension_numbers<[1], [0], [0], [1], [0, 0, 1, 1], [], []>, precision = #tpu.contract_precision<fp32>} : vector<16x16xf32>, vector<16x256xf32>, vector<16x256xf32> -> vector<16x256xf32>
    %cst_16 = arith.constant dense<0.000000e+00> : vector<16x256xf32>
    %15 = tpu.matmul %12, %5, %cst_16 {dimension_numbers = #tpu.dot_dimension_numbers<[1], [0], [0], [1], [0, 0, 1, 1], [], []>, precision = #tpu.contract_precision<fp32>} : vector<16x16xf32>, vector<16x256xf32>, vector<16x256xf32> -> vector<16x256xf32>
    %c2_17 = arith.constant 2 : index
    %c0_18 = arith.constant 0 : index
    %c0_19 = arith.constant 0 : index
    %16 = vector.load %arg2[%c2_17, %c0_18, %c0_19] : memref<3x16x16xf32, #tpu.memory_space<vmem>>, vector<1x16x16xf32>
    %17 = vector.shape_cast %16 : vector<1x16x16xf32> to vector<16x16xf32>
    %cst_20 = arith.constant dense<0.000000e+00> : vector<16x256xf32>
    %18 = tpu.matmul %17, %1, %cst_20 {dimension_numbers = #tpu.dot_dimension_numbers<[1], [0], [0], [1], [0, 0, 1, 1], [], []>, precision = #tpu.contract_precision<fp32>} : vector<16x16xf32>, vector<16x256xf32>, vector<16x256xf32> -> vector<16x256xf32>
    %cst_21 = arith.constant dense<0.000000e+00> : vector<16x256xf32>
    %19 = tpu.matmul %17, %3, %cst_21 {dimension_numbers = #tpu.dot_dimension_numbers<[1], [0], [0], [1], [0, 0, 1, 1], [], []>, precision = #tpu.contract_precision<fp32>} : vector<16x16xf32>, vector<16x256xf32>, vector<16x256xf32> -> vector<16x256xf32>
    %cst_22 = arith.constant dense<0.000000e+00> : vector<16x256xf32>
    %20 = tpu.matmul %17, %5, %cst_22 {dimension_numbers = #tpu.dot_dimension_numbers<[1], [0], [0], [1], [0, 0, 1, 1], [], []>, precision = #tpu.contract_precision<fp32>} : vector<16x16xf32>, vector<16x256xf32>, vector<16x256xf32> -> vector<16x256xf32>
    %21 = arith.mulf %9, %15 : vector<16x256xf32>
    %22 = arith.mulf %10, %14 : vector<16x256xf32>
    %23 = arith.subf %21, %22 : vector<16x256xf32>
    %24 = arith.mulf %10, %13 : vector<16x256xf32>
    %25 = arith.mulf %8, %15 : vector<16x256xf32>
    %26 = arith.subf %24, %25 : vector<16x256xf32>
    %27 = arith.mulf %8, %14 : vector<16x256xf32>
    %28 = arith.mulf %9, %13 : vector<16x256xf32>
    %29 = arith.subf %27, %28 : vector<16x256xf32>
    %30 = arith.mulf %14, %20 : vector<16x256xf32>
    %31 = arith.mulf %15, %19 : vector<16x256xf32>
    %32 = arith.subf %30, %31 : vector<16x256xf32>
    %33 = arith.mulf %15, %18 : vector<16x256xf32>
    %34 = arith.mulf %13, %20 : vector<16x256xf32>
    %35 = arith.subf %33, %34 : vector<16x256xf32>
    %36 = arith.mulf %13, %19 : vector<16x256xf32>
    %37 = arith.mulf %14, %18 : vector<16x256xf32>
    %38 = arith.subf %36, %37 : vector<16x256xf32>
    %39 = arith.mulf %26, %15 : vector<16x256xf32>
    %40 = arith.mulf %29, %14 : vector<16x256xf32>
    %41 = arith.subf %39, %40 : vector<16x256xf32>
    %42 = arith.mulf %29, %13 : vector<16x256xf32>
    %43 = arith.mulf %23, %15 : vector<16x256xf32>
    %44 = arith.subf %42, %43 : vector<16x256xf32>
    %45 = arith.mulf %23, %14 : vector<16x256xf32>
    %46 = arith.mulf %26, %13 : vector<16x256xf32>
    %47 = arith.subf %45, %46 : vector<16x256xf32>
    %48 = arith.mulf %23, %23 : vector<16x256xf32>
    %49 = arith.mulf %26, %26 : vector<16x256xf32>
    %50 = arith.addf %48, %49 : vector<16x256xf32>
    %51 = arith.mulf %29, %29 : vector<16x256xf32>
    %52 = arith.addf %50, %51 : vector<16x256xf32>
    %cst_23 = arith.constant 1.000000e-24 : f32
    %53 = vector.broadcast %cst_23 : f32 to vector<16x256xf32>
    %54 = arith.maximumf %52, %53 : vector<16x256xf32>
    %55 = math.rsqrt %54 : vector<16x256xf32>
    %56 = arith.mulf %32, %32 : vector<16x256xf32>
    %57 = arith.mulf %35, %35 : vector<16x256xf32>
    %58 = arith.addf %56, %57 : vector<16x256xf32>
    %59 = arith.mulf %38, %38 : vector<16x256xf32>
    %60 = arith.addf %58, %59 : vector<16x256xf32>
    %cst_24 = arith.constant 1.000000e-24 : f32
    %61 = vector.broadcast %cst_24 : f32 to vector<16x256xf32>
    %62 = arith.maximumf %60, %61 : vector<16x256xf32>
    %63 = math.rsqrt %62 : vector<16x256xf32>
    %64 = arith.mulf %41, %41 : vector<16x256xf32>
    %65 = arith.mulf %44, %44 : vector<16x256xf32>
    %66 = arith.addf %64, %65 : vector<16x256xf32>
    %67 = arith.mulf %47, %47 : vector<16x256xf32>
    %68 = arith.addf %66, %67 : vector<16x256xf32>
    %cst_25 = arith.constant 1.000000e-24 : f32
    %69 = vector.broadcast %cst_25 : f32 to vector<16x256xf32>
    %70 = arith.maximumf %68, %69 : vector<16x256xf32>
    %71 = math.rsqrt %70 : vector<16x256xf32>
    %72 = arith.mulf %23, %32 : vector<16x256xf32>
    %73 = arith.mulf %26, %35 : vector<16x256xf32>
    %74 = arith.addf %72, %73 : vector<16x256xf32>
    %75 = arith.mulf %29, %38 : vector<16x256xf32>
    %76 = arith.addf %74, %75 : vector<16x256xf32>
    %77 = arith.mulf %55, %63 : vector<16x256xf32>
    %78 = arith.mulf %76, %77 : vector<16x256xf32>
    %79 = arith.mulf %41, %32 : vector<16x256xf32>
    %80 = arith.mulf %44, %35 : vector<16x256xf32>
    %81 = arith.addf %79, %80 : vector<16x256xf32>
    %82 = arith.mulf %47, %38 : vector<16x256xf32>
    %83 = arith.addf %81, %82 : vector<16x256xf32>
    %84 = arith.mulf %71, %63 : vector<16x256xf32>
    %85 = arith.mulf %83, %84 : vector<16x256xf32>
    %cst_26 = arith.constant 0.000000e+00 : f32
    %86 = vector.broadcast %cst_26 : f32 to vector<16x256xf32>
    %87 = arith.subf %86, %85 : vector<16x256xf32>
    %c0_27 = arith.constant 0 : index
    %c0_28 = arith.constant 0 : index
    %c0_29 = arith.constant 0 : index
    %88 = vector.load %arg4[%c0_27, %c0_28, %c0_29] : memref<2x16x256xf32, #tpu.memory_space<vmem>>, vector<1x16x256xf32>
    %89 = vector.shape_cast %88 : vector<1x16x256xf32> to vector<16x256xf32>
    %90 = vector.shape_cast %87 : vector<16x256xf32> to vector<1x16x256xf32>
    tpu.vector_store %arg4[%c0_27, %c0_28, %c0_29], %90 {strides = array<i32>} : memref<2x16x256xf32, #tpu.memory_space<vmem>>, vector<1x16x256xf32>,
    %c1_30 = arith.constant 1 : index
    %c0_31 = arith.constant 0 : index
    %c0_32 = arith.constant 0 : index
    %91 = vector.load %arg4[%c1_30, %c0_31, %c0_32] : memref<2x16x256xf32, #tpu.memory_space<vmem>>, vector<1x16x256xf32>
    %92 = vector.shape_cast %91 : vector<1x16x256xf32> to vector<16x256xf32>
    %93 = vector.shape_cast %78 : vector<16x256xf32> to vector<1x16x256xf32>
    tpu.vector_store %arg4[%c1_30, %c0_31, %c0_32], %93 {strides = array<i32>} : memref<2x16x256xf32, #tpu.memory_space<vmem>>, vector<1x16x256xf32>,
    return
  }
  func.func @transform_0(%arg0: i32, %arg1: i32) -> (i32, i32, i32) {
    %c0_i32 = arith.constant 0 : i32
    %c0_i32_0 = arith.constant 0 : i32
    %c0_i32_1 = arith.constant 0 : i32
    return %c0_i32, %arg1, %c0_i32_0 : i32, i32, i32
  }
  func.func @transform_1(%arg0: i32, %arg1: i32) -> (i32, i32, i32) {
    %c0_i32 = arith.constant 0 : i32
    %c0_i32_0 = arith.constant 0 : i32
    %c0_i32_1 = arith.constant 0 : i32
    return %c0_i32, %c0_i32_0, %arg0 : i32, i32, i32
  }
  func.func @transform_2(%arg0: i32, %arg1: i32) -> (i32, i32, i32) {
    %c0_i32 = arith.constant 0 : i32
    %c0_i32_0 = arith.constant 0 : i32
    return %c0_i32, %arg1, %arg0 : i32, i32, i32
  }
}

</mosaic_0001>

<llo_original>
// kernel: _lambda_.1
$region0: #{_lambda_.1}
  #allocation0 [shape = 'u32[]', space=smem, size = 0x4, offset = 0x4, fixed_abs, tag = 'smem constant byte address 0x4 - core index']
  #allocation1 [shape = 'u32[72,128]{1,0:T(1,128)}', space=vmem, size = 0x9000, scoped, tag = 'internal scratch']
  %s0 = inlined_call_operand.vmem [shape: f32[3,16,16], index: 0, kind: input, shape index: {}]
  %s1 = inlined_call_operand.vmem [shape: f32[3,16,512], index: 1, kind: input, shape index: {}]
  %s2 = inlined_call_operand.vmem [shape: f32[2,16,512], index: 2, kind: output, shape index: {}]
  %s3 = sld [smem:[#allocation0]]
  $region83: #{_lambda_.1} parent=0
    _
  %s5 = ssub.s32 1, %s3
  %s6 = scalar_select 0, %s5, %s3
  $region1: #{_lambda_.1} parent=0
    #allocation2 [shape = 'u8[98304]{0}', space=vmem, size = 0x18000, scoped, tag = 'input window, operand 1']
    #allocation3 [shape = 'u8[65536]{0}', space=vmem, size = 0x10000, scoped, tag = 'output window, operand 0']
    loop: start=0, step=1, limit=4
    $region2: #{_lambda_.1} parent=1 // loop_pre_header
      _
    $region3: #{_lambda_.1} parent=1 // loop_header
      %s8 = sphi 0, %s12
      %p9 = scmp.ge.s32.totalorder %s8, 4
      %s15 = sphi 0, %s27
      %s16 = sphi 0, %s23
      %s17 = sphi 0, %s15
      %s18 = sphi 0, %s16
      %s19 = sphi 0, %s17
      %s20 = sphi 0, %s18
      %s30 = sphi 0, %s32
      %s33 = sphi 0, %s30
      %s34 = sphi 0, %s33
      %s50 = sphi 0, %s34
      %s56 = sphi 0, %s58
      %s59 = sphi 0, %s56
      %s60 = sphi 0, %s59
      %s76 = sphi 0, %s60
      %s84 = sphi 0, %s86
      %s87 = sphi 0, %s84
      %s88 = sphi 0, %s87
      %s104 = sphi 0, %s88
    $region4: #{_lambda_.1} parent=1 // loop_header_branch
      %11 = sbr.rel (%p9) target = $region8
    $region5: #{_lambda_.1} parent=1 // loop_body
      %s13 = ssub.s32 %s8, 1
      %s14 = ssub.s32 %s8, 2
      %s21 = sadd.s32 1, %s16
      %p22 = scmp.ge.s32.totalorder %s21, 1
      %s23 = scalar_select %p22, 0, %s21
      %s24 = sadd.s32 1, %s15
      %s25 = scalar_select %p22, %s24, %s15
      %p26 = scmp.ge.s32.totalorder %s25, 2
      %s27 = scalar_select %p26, 0, %s25
      %s28 = ssub.s32 %s16, %s23
      %p29 = scmp.eq.s32.totalorder %s28, 0
      %s31 = sadd.s32 %s30, 1
      %s32 = scalar_select %p29, %s30, %s31
      %p35 = pneg %p29
      %p36 = scmp.eq.s32.totalorder %s8, 1
      %p37 = por %p35, %p36
      %p38 = scmp.ne.s32.totalorder %s30, %s33
      %p39 = scmp.eq.s32.totalorder %s8, 0
      %p40 = por %p38, %p39
      %p41 = scmp.ne.s32.totalorder %s30, %s33
      %p42 = scmp.eq.s32.totalorder %s13, 1
      %p43 = por %p41, %p42
      %p44 = scmp.ne.s32.totalorder %s33, %s34
      %p45 = scmp.eq.s32.totalorder %s13, 0
      %p46 = por %p44, %p45
      %p47 = scmp.ne.s32.totalorder %s33, %s34
      %p48 = scmp.eq.s32.totalorder %s14, 1
      %p49 = por %p47, %p48
      %p51 = scmp.ne.s32.totalorder %s34, %s50
      %p52 = scmp.eq.s32.totalorder %s14, 0
      %p53 = por %p51, %p52
      %s54 = ssub.s32 %s15, %s27
      %p55 = scmp.eq.s32.totalorder %s54, 0
      %s57 = sadd.s32 %s56, 1
      %s58 = scalar_select %p55, %s56, %s57
      %p61 = pneg %p55
      %p62 = scmp.eq.s32.totalorder %s8, 1
      %p63 = por %p61, %p62
      %p64 = scmp.ne.s32.totalorder %s56, %s59
      %p65 = scmp.eq.s32.totalorder %s8, 0
      %p66 = por %p64, %p65
      %p67 = scmp.ne.s32.totalorder %s56, %s59
      %p68 = scmp.eq.s32.totalorder %s13, 1
      %p69 = por %p67, %p68
      %p70 = scmp.ne.s32.totalorder %s59, %s60
      %p71 = scmp.eq.s32.totalorder %s13, 0
      %p72 = por %p70, %p71
      %p73 = scmp.ne.s32.totalorder %s59, %s60
      %p74 = scmp.eq.s32.totalorder %s14, 1
      %p75 = por %p73, %p74
      %p77 = scmp.ne.s32.totalorder %s60, %s76
      %p78 = scmp.eq.s32.totalorder %s14, 0
      %p79 = por %p77, %p78
      %s80 = ssub.s32 %s16, %s23
      %s81 = ssub.s32 %s15, %s27
      %s82 = sor.u32 %s80, %s81
      %p83 = scmp.eq.s32.totalorder %s82, 0
      %s85 = sadd.s32 %s84, 1
      %s86 = scalar_select %p83, %s84, %s85
      %p89 = pneg %p83
      %p90 = scmp.eq.s32.totalorder %s8, 1
      %p91 = por %p89, %p90
      %p92 = scmp.ne.s32.totalorder %s84, %s87
      %p93 = scmp.eq.s32.totalorder %s8, 0
      %p94 = por %p92, %p93
      %p95 = scmp.ne.s32.totalorder %s84, %s87
      %p96 = scmp.eq.s32.totalorder %s13, 1
      %p97 = por %p95, %p96
      %p98 = scmp.ne.s32.totalorder %s87, %s88
      %p99 = scmp.eq.s32.totalorder %s13, 0
      %p100 = por %p98, %p99
      %p101 = scmp.ne.s32.totalorder %s87, %s88
      %p102 = scmp.eq.s32.totalorder %s14, 1
      %p103 = por %p101, %p102
      %p105 = scmp.ne.s32.totalorder %s88, %s104
      %p106 = scmp.eq.s32.totalorder %s14, 0
      %p107 = por %p105, %p106
      %p108 = scmp.le.s32.totalorder 1, %s8
      %p109 = scmp.lt.s32.totalorder %s8, 3
      %p110 = pnand %p108, %p109
      %p111 = pneg %p110
      // Predicated region
      $region9: #{_lambda_.1} parent=5 // pred_check
        _
      $region10: #{_lambda_.1} parent=5 // pred_check_branch
        %113 = sbr.rel (%p110) target = $region12
      $region11: #{_lambda_.1} parent=5 // pred_region
        %s114 = ssub.s32 %s8, 1
        // Predicated region
        $region13: #{_lambda_.1} parent=11 // pred_check
          %p115 = pneg %p46
        $region14: #{_lambda_.1} parent=11 // pred_check_branch
          %117 = sbr.rel (%p115) target = $region16
        $region15: #{_lambda_.1} parent=11 // pred_region
          %s118 = smul.u32 2, %s18
          %p119 = scmp.lt.s32.totalorder %s118, 1
          %s120 = scalar_select %p119, %s118, 1
          %s121 = smul.addr %s120, 8
          %s122 = scalar_lea.vmem %s0, %s121
          %s123 = smul.u32 2, %s18
        $region16: #{_lambda_.1} parent=11 // pred_fallthru
          _
      $region12: #{_lambda_.1} parent=5 // pred_fallthru
        _
      %p124 = scmp.lt.s32.totalorder %s8, 2
      // Predicated region
      $region17: #{_lambda_.1} parent=5 // pred_check
        %p125 = pneg %p124
      $region18: #{_lambda_.1} parent=5 // pred_check_branch
        %127 = sbr.rel (%p125) target = $region20
      $region19: #{_lambda_.1} parent=5 // pred_region
        // Predicated region
        $region21: #{_lambda_.1} parent=19 // pred_check
          %p128 = pneg %p66
        $region22: #{_lambda_.1} parent=19 // pred_check_branch
          %130 = sbr.rel (%p128) target = $region24
        $region23: #{_lambda_.1} parent=19 // pred_region
          %s131 = sand.u32 %s56, 1
          %s132 = sand.u32 %s56, 1
          %s133 = smul.addr %s132, 96
          %s134 = scalar_lea.vmem [#allocation2], %s133
          %s135 = smul.u32 2, %s15
          %s136 = smul.addr %s135, 8
          %s137 = scalar_lea.vmem %s1, %s136
          // Predicated region
          $region25: #{_lambda_.1} parent=23 // pred_check
            _
          $region26: #{_lambda_.1} parent=23 // pred_check_branch
            %139 = sbr.rel (0) target = $region28
          $region27: #{_lambda_.1} parent=23 // pred_region
            // Predicated region
            $region29: #{_lambda_.1} parent=27 // pred_check
              _
            $region30: #{_lambda_.1} parent=27 // pred_check_branch
              %141 = sbr.rel (0) target = $region32
            $region31: #{_lambda_.1} parent=27 // pred_region
              loop: start=0, step=1, limit=1
              $region33: #{_lambda_.1} parent=31 // loop_pre_header
                _
              $region34: #{_lambda_.1} parent=31 // loop_header
                %s143 = sphi 0, %s147
                %p144 = scmp.ge.s32.totalorder %s143, 1
                %s148 = sphi %s137, %s137
                %s149 = sphi %s134, %s134
              $region35: #{_lambda_.1} parent=31 // loop_header_branch
                %146 = sbr.rel (%p144) target = $region39
              $region36: #{_lambda_.1} parent=31 // loop_body
                %v150 = vld [vmem:[%s148] sm:$0xff]
                %151 = vst [vmem:[%s149] sm:$0xff] %v150
                %v152 = vld [vmem:[%s148 + $0x8] sm:$0xff]
                %153 = vst [vmem:[%s149 + $0x8] sm:$0xff] %v152
                %v154 = vld [vmem:[%s148 + $0x20] sm:$0xff]
                %155 = vst [vmem:[%s149 + $0x10] sm:$0xff] %v154
                %v156 = vld [vmem:[%s148 + $0x28] sm:$0xff]
                %157 = vst [vmem:[%s149 + $0x18] sm:$0xff] %v156
                %v158 = vld [vmem:[%s148 + $0x40] sm:$0xff]
                %159 = vst [vmem:[%s149 + $0x20] sm:$0xff] %v158
                %v160 = vld [vmem:[%s148 + $0x48] sm:$0xff]
                %161 = vst [vmem:[%s149 + $0x28] sm:$0xff] %v160
                %v162 = vld [vmem:[%s148 + $0x60] sm:$0xff]
                %163 = vst [vmem:[%s149 + $0x30] sm:$0xff] %v162
                %v164 = vld [vmem:[%s148 + $0x68] sm:$0xff]
                %165 = vst [vmem:[%s149 + $0x38] sm:$0xff] %v164
                %v166 = vld [vmem:[%s148 + $0x80] sm:$0xff]
                %167 = vst [vmem:[%s149 + $0x40] sm:$0xff] %v166
                %v168 = vld [vmem:[%s148 + $0x88] sm:$0xff]
                %169 = vst [vmem:[%s149 + $0x48] sm:$0xff] %v168
                %v170 = vld [vmem:[%s148 + $0xa0] sm:$0xff]
                %171 = vst [vmem:[%s149 + $0x50] sm:$0xff] %v170
                %v172 = vld [vmem:[%s148 + $0xa8] sm:$0xff]
                %173 = vst [vmem:[%s149 + $0x58] sm:$0xff] %v172
              $region37: #{_lambda_.1} parent=31 // loop_footer
                %s147 = sadd.s32 1, %s143
              $region38: #{_lambda_.1} parent=31 // loop_footer_branch
                %142 = sbr.rel target = $region34
              $region39: #{_lambda_.1} parent=31 // loop_exit
                _
            $region32: #{_lambda_.1} parent=27 // pred_fallthru
              _
            // Predicated region
            $region40: #{_lambda_.1} parent=27 // pred_check
              _
            $region41: #{_lambda_.1} parent=27 // pred_check_branch
              %175 = sbr.rel target = $region43
            $region42: #{_lambda_.1} parent=27 // pred_region
              _
            $region43: #{_lambda_.1} parent=27 // pred_fallthru
              _
          $region28: #{_lambda_.1} parent=23 // pred_fallthru
            _
          %176 = vnop
        $region24: #{_lambda_.1} parent=19 // pred_fallthru
          _
      $region20: #{_lambda_.1} parent=5 // pred_fallthru
        _
      %p177 = scmp.le.s32.totalorder 1, %s8
      %p178 = scmp.lt.s32.totalorder %s8, 3
      %p179 = pnand %p177, %p178
      %p180 = pneg %p179
      // Predicated region
      $region44: #{_lambda_.1} parent=5 // pred_check
        _
      $region45: #{_lambda_.1} parent=5 // pred_check_branch
        %182 = sbr.rel (%p179) target = $region47
      $region46: #{_lambda_.1} parent=5 // pred_region
        %s183 = ssub.s32 %s8, 1
        %s184 = sand.u32 %s59, 1
        %s185 = sand.u32 %s59, 1
        %s186 = smul.addr %s185, 96
        %s187 = scalar_lea.vmem [#allocation2], %s186
        // Predicated region
        $region48: #{_lambda_.1} parent=46 // pred_check
          %p188 = pneg %p72
        $region49: #{_lambda_.1} parent=46 // pred_check_branch
          %190 = sbr.rel (%p188) target = $region51
        $region50: #{_lambda_.1} parent=46 // pred_region
          _
        $region51: #{_lambda_.1} parent=46 // pred_fallthru
          _
        %s191 = smul.u32 2, %s18
        %p192 = scmp.lt.s32.totalorder %s191, 1
        %s193 = scalar_select %p192, %s191, 1
        %s194 = smul.addr %s193, 8
        %s195 = scalar_lea.vmem %s0, %s194
        %p196 = pneg %p46
        %p197 = pneg %p43
        %s198 = sand.u32 %s59, 1
        %s199 = sand.u32 %s59, 1
        %s200 = smul.addr %s199, 96
        %s201 = scalar_lea.vmem [#allocation2], %s200
        %p202 = pneg %p72
        %p203 = pneg %p69
        %p204 = pneg %p100
        %p205 = pneg %p97
        %s206 = sand.u32 %s87, 1
        %s207 = sand.u32 %s87, 1
        %s208 = smul.addr %s207, 64
        %s209 = scalar_lea.vmem [#allocation3], %s208
        %s210 = smul.u32 2, %s18
        %p211 = scmp.lt.s32.totalorder %s210, 1
        %s212 = scalar_select %p211, %s210, 1
        %s213 = smul.addr %s212, 8
        %s214 = scalar_lea.vmem %s0, %s213
        %s215 = smul.u32 2, %s18
        %s216 = smul.u32 2, %s17
        %s217 = smul.u32 2, %s18
        %s218 = smul.u32 2, %s17
        %v219 = vld [vmem:[%s187] sm:$0xff]
        %v220 = vld [vmem:[%s187 + $0x8] sm:$0xff]
        %v221 = vld [vmem:[%s187 + $0x10] sm:$0xff]
        %v222 = vld [vmem:[%s187 + $0x18] sm:$0xff]
        %s223 = scalar_lea.vmem %s187, 32 [#allocation2]
        %v224 = vld [vmem:[%s223] sm:$0xff]
        %v225 = vld [vmem:[%s223 + $0x8] sm:$0xff]
        %v226 = vld [vmem:[%s223 + $0x10] sm:$0xff]
        %v227 = vld [vmem:[%s223 + $0x18] sm:$0xff]
        %s228 = scalar_lea.vmem %s187, 64 [#allocation2]
        %v229 = vld [vmem:[%s228] sm:$0xff]
        %v230 = vld [vmem:[%s228 + $0x8] sm:$0xff]
        %v231 = vld [vmem:[%s228 + $0x10] sm:$0xff]
        %v232 = vld [vmem:[%s228 + $0x18] sm:$0xff]
        %v233 = vld [vmem:[%s214] sm:$0xff]
        %v234 = vld [vmem:[%s214 + $0x8] sm:$0xff]
        %vm235 = vcmask 130048
        %v237 = vsel %vm235, %v233, 0
        %v240 = vsel %vm235, %v234, 0
        %242 = vmatpush.msra.mxu0 0.0
        %243 = vmatpush.msra.mxu0 0.0
        %244 = vmatpush.msra.mxu0 0.0
        %245 = vmatpush.msra.mxu0 0.0
        %246 = vmatpush.msra.mxu0 0.0
        %247 = vmatpush.msra.mxu0 0.0
        %248 = vmatpush.msra.mxu0 0.0
        %249 = vmatpush.msra.mxu0 0.0
        %250 = vmatpush.msra.mxu0 0.0
        %251 = vmatpush.msra.mxu0 0.0
        %252 = vmatpush.msra.mxu0 0.0
        %253 = vmatpush.msra.mxu0 0.0
        %254 = vmatpush.msra.mxu0 0.0
        %255 = vmatpush.msra.mxu0 0.0
        %v256 = vand.u32 %v221, 4294901760
        %257 = vmatpush.msra.mxu0 %v256
        %v258 = vand.u32 %v219, 4294901760
        %259 = vmatpush.msra.mxu0 %v258
        %v260 = vand.u32 %v237, 4294901760
        %v261 = vsub.f32 %v237, %v260
        %v262 = vand.u32 %v261, 4294901760
        %v263 = vsub.f32 %v261, %v262
        %v264 = vand.u32 %v263, 4294901760
        %265 = vmatmul.f32.gmra.mxu0 %v264
        %v266 = vpop.f32.mrf.mxu0
        %v267 = vadd.f32 0.0, %v266
        %v268 = vand.u32 %v240, 4294901760
        %v269 = vsub.f32 %v240, %v268
        %v270 = vand.u32 %v269, 4294901760
        %v271 = vsub.f32 %v269, %v270
        %v272 = vand.u32 %v271, 4294901760
        %273 = vmatmul.f32.gmra.mxu0 %v272
        %v274 = vpop.f32.mrf.mxu0
        %v275 = vadd.f32 0.0, %v274
        %276 = vdwg.mxu0
        %277 = vmatpush.msra.mxu0 0.0
        %278 = vmatpush.msra.mxu0 0.0
        %279 = vmatpush.msra.mxu0 0.0
        %280 = vmatpush.msra.mxu0 0.0
        %281 = vmatpush.msra.mxu0 0.0
        %282 = vmatpush.msra.mxu0 0.0
        %283 = vmatpush.msra.mxu0 0.0
        %284 = vmatpush.msra.mxu0 0.0
        %285 = vmatpush.msra.mxu0 0.0
        %286 = vmatpush.msra.mxu0 0.0
        %287 = vmatpush.msra.mxu0 0.0
        %288 = vmatpush.msra.mxu0 0.0
        %289 = vmatpush.msra.mxu0 0.0
        %290 = vmatpush.msra.mxu0 0.0
        %v291 = vand.u32 %v221, 4294901760
        %v292 = vsub.f32 %v221, %v291
        %v293 = vand.u32 %v292, 4294901760
        %v294 = vsub.f32 %v292, %v293
        %v295 = vand.u32 %v294, 4294901760
        %296 = vmatpush.msra.mxu0 %v295
        %v297 = vand.u32 %v219, 4294901760
        %v298 = vsub.f32 %v219, %v297
        %v299 = vand.u32 %v298, 4294901760
        %v300 = vsub.f32 %v298, %v299
        %v301 = vand.u32 %v300, 4294901760
        %302 = vmatpush.msra.mxu0 %v301
        %v303 = vand.u32 %v237, 4294901760
        %304 = vmatmul.f32.gmra.mxu0 %v303
        %v305 = vpop.f32.mrf.mxu0
        %v306 = vadd.f32 %v267, %v305
        %v307 = vand.u32 %v240, 4294901760
        %308 = vmatmul.f32.gmra.mxu0 %v307
        %v309 = vpop.f32.mrf.mxu0
        %v310 = vadd.f32 %v275, %v309
        %311 = vdwg.mxu0
        %312 = vmatpush.msra.mxu0 0.0
        %313 = vmatpush.msra.mxu0 0.0
        %314 = vmatpush.msra.mxu0 0.0
        %315 = vmatpush.msra.mxu0 0.0
        %316 = vmatpush.msra.mxu0 0.0
        %317 = vmatpush.msra.mxu0 0.0
        %318 = vmatpush.msra.mxu0 0.0
        %319 = vmatpush.msra.mxu0 0.0
        %320 = vmatpush.msra.mxu0 0.0
        %321 = vmatpush.msra.mxu0 0.0
        %322 = vmatpush.msra.mxu0 0.0
        %323 = vmatpush.msra.mxu0 0.0
        %324 = vmatpush.msra.mxu0 0.0
        %325 = vmatpush.msra.mxu0 0.0
        %v326 = vand.u32 %v221, 4294901760
        %v327 = vsub.f32 %v221, %v326
        %328 = vmatpush.msra.mxu0 %v327
        %v329 = vand.u32 %v219, 4294901760
        %v330 = vsub.f32 %v219, %v329
        %331 = vmatpush.msra.mxu0 %v330
        %v332 = vand.u32 %v237, 4294901760
        %v333 = vsub.f32 %v237, %v332
        %334 = vmatmul.f32.gmra.mxu0 %v333
        %v335 = vpop.f32.mrf.mxu0
        %v336 = vadd.f32 %v306, %v335
        %v337 = vand.u32 %v240, 4294901760
        %v338 = vsub.f32 %v240, %v337
        %339 = vmatmul.f32.gmra.mxu0 %v338
        %v340 = vpop.f32.mrf.mxu0
        %v341 = vadd.f32 %v310, %v340
        %342 = vdwg.mxu0
        %343 = vmatpush.msra.mxu0 0.0
        %344 = vmatpush.msra.mxu0 0.0
        %345 = vmatpush.msra.mxu0 0.0
        %346 = vmatpush.msra.mxu0 0.0
        %347 = vmatpush.msra.mxu0 0.0
        %348 = vmatpush.msra.mxu0 0.0
        %349 = vmatpush.msra.mxu0 0.0
        %350 = vmatpush.msra.mxu0 0.0
        %351 = vmatpush.msra.mxu0 0.0
        %352 = vmatpush.msra.mxu0 0.0
        %353 = vmatpush.msra.mxu0 0.0
        %354 = vmatpush.msra.mxu0 0.0
        %355 = vmatpush.msra.mxu0 0.0
        %356 = vmatpush.msra.mxu0 0.0
        %v357 = vand.u32 %v221, 4294901760
        %358 = vmatpush.msra.mxu0 %v357
        %v359 = vand.u32 %v219, 4294901760
        %360 = vmatpush.msra.mxu0 %v359
        %v361 = vand.u32 %v237, 4294901760
        %v362 = vsub.f32 %v237, %v361
        %v363 = vand.u32 %v362, 4294901760
        %364 = vmatmul.f32.gmra.mxu0 %v363
        %v365 = vpop.f32.mrf.mxu0
        %v366 = vadd.f32 %v336, %v365
        %v367 = vand.u32 %v240, 4294901760
        %v368 = vsub.f32 %v240, %v367
        %v369 = vand.u32 %v368, 4294901760
        %370 = vmatmul.f32.gmra.mxu0 %v369
        %v371 = vpop.f32.mrf.mxu0
        %v372 = vadd.f32 %v341, %v371
        %373 = vdwg.mxu0
        %374 = vmatpush.msra.mxu0 0.0
        %375 = vmatpush.msra.mxu0 0.0
        %376 = vmatpush.msra.mxu0 0.0
        %377 = vmatpush.msra.mxu0 0.0
        %378 = vmatpush.msra.mxu0 0.0
        %379 = vmatpush.msra.mxu0 0.0
        %380 = vmatpush.msra.mxu0 0.0
        %381 = vmatpush.msra.mxu0 0.0
        %382 = vmatpush.msra.mxu0 0.0
        %383 = vmatpush.msra.mxu0 0.0
        %384 = vmatpush.msra.mxu0 0.0
        %385 = vmatpush.msra.mxu0 0.0
        %386 = vmatpush.msra.mxu0 0.0
        %387 = vmatpush.msra.mxu0 0.0
        %v388 = vand.u32 %v221, 4294901760
        %v389 = vsub.f32 %v221, %v388
        %v390 = vand.u32 %v389, 4294901760
        %391 = vmatpush.msra.mxu0 %v390
        %v392 = vand.u32 %v219, 4294901760
        %v393 = vsub.f32 %v219, %v392
        %v394 = vand.u32 %v393, 4294901760
        %395 = vmatpush.msra.mxu0 %v394
        %v396 = vand.u32 %v237, 4294901760
        %397 = vmatmul.f32.gmra.mxu0 %v396
        %v398 = vpop.f32.mrf.mxu0
        %v399 = vadd.f32 %v366, %v398
        %v400 = vand.u32 %v240, 4294901760
        %401 = vmatmul.f32.gmra.mxu0 %v400
        %v402 = vpop.f32.mrf.mxu0
        %v403 = vadd.f32 %v372, %v402
        %404 = vdwg.mxu0
        %405 = vmatpush.msra.mxu0 0.0
        %406 = vmatpush.msra.mxu0 0.0
        %407 = vmatpush.msra.mxu0 0.0
        %408 = vmatpush.msra.mxu0 0.0
        %409 = vmatpush.msra.mxu0 0.0
        %410 = vmatpush.msra.mxu0 0.0
        %411 = vmatpush.msra.mxu0 0.0
        %412 = vmatpush.msra.mxu0 0.0
        %413 = vmatpush.msra.mxu0 0.0
        %414 = vmatpush.msra.mxu0 0.0
        %415 = vmatpush.msra.mxu0 0.0
        %416 = vmatpush.msra.mxu0 0.0
        %417 = vmatpush.msra.mxu0 0.0
        %418 = vmatpush.msra.mxu0 0.0
        %v419 = vand.u32 %v221, 4294901760
        %420 = vmatpush.msra.mxu0 %v419
        %v421 = vand.u32 %v219, 4294901760
        %422 = vmatpush.msra.mxu0 %v421
        %v423 = vand.u32 %v237, 4294901760
        %424 = vmatmul.f32.gmra.mxu0 %v423
        %v425 = vpop.f32.mrf.mxu0
        %v426 = vadd.f32 %v399, %v425
        %v427 = vand.u32 %v240, 4294901760
        %428 = vmatmul.f32.gmra.mxu0 %v427
        %v429 = vpop.f32.mrf.mxu0
        %v430 = vadd.f32 %v403, %v429
        %431 = vdwg.mxu0
        %432 = vmatpush.msra.mxu0 0.0
        %433 = vmatpush.msra.mxu0 0.0
        %434 = vmatpush.msra.mxu0 0.0
        %435 = vmatpush.msra.mxu0 0.0
        %436 = vmatpush.msra.mxu0 0.0
        %437 = vmatpush.msra.mxu0 0.0
        %438 = vmatpush.msra.mxu0 0.0
        %439 = vmatpush.msra.mxu0 0.0
        %440 = vmatpush.msra.mxu0 0.0
        %441 = vmatpush.msra.mxu0 0.0
        %442 = vmatpush.msra.mxu0 0.0
        %443 = vmatpush.msra.mxu0 0.0
        %444 = vmatpush.msra.mxu0 0.0
        %445 = vmatpush.msra.mxu0 0.0
        %v446 = vand.u32 %v222, 4294901760
        %447 = vmatpush.msra.mxu0 %v446
        %v448 = vand.u32 %v220, 4294901760
        %449 = vmatpush.msra.mxu0 %v448
        %v450 = vand.u32 %v237, 4294901760
        %v451 = vsub.f32 %v237, %v450
        %v452 = vand.u32 %v451, 4294901760
        %v453 = vsub.f32 %v451, %v452
        %v454 = vand.u32 %v453, 4294901760
        %455 = vmatmul.f32.gmra.mxu0 %v454
        %v456 = vpop.f32.mrf.mxu0
        %v457 = vadd.f32 0.0, %v456
        %v458 = vand.u32 %v240, 4294901760
        %v459 = vsub.f32 %v240, %v458
        %v460 = vand.u32 %v459, 4294901760
        %v461 = vsub.f32 %v459, %v460
        %v462 = vand.u32 %v461, 4294901760
        %463 = vmatmul.f32.gmra.mxu0 %v462
        %v464 = vpop.f32.mrf.mxu0
        %v465 = vadd.f32 0.0, %v464
        %466 = vdwg.mxu0
        %467 = vmatpush.msra.mxu0 0.0
        %468 = vmatpush.msra.mxu0 0.0
        %469 = vmatpush.msra.mxu0 0.0
        %470 = vmatpush.msra.mxu0 0.0
        %471 = vmatpush.msra.mxu0 0.0
        %472 = vmatpush.msra.mxu0 0.0
        %473 = vmatpush.msra.mxu0 0.0
        %474 = vmatpush.msra.mxu0 0.0
        %475 = vmatpush.msra.mxu0 0.0
        %476 = vmatpush.msra.mxu0 0.0
        %477 = vmatpush.msra.mxu0 0.0
        %478 = vmatpush.msra.mxu0 0.0
        %479 = vmatpush.msra.mxu0 0.0
        %480 = vmatpush.msra.mxu0 0.0
        %v481 = vand.u32 %v222, 4294901760
        %v482 = vsub.f32 %v222, %v481
        %v483 = vand.u32 %v482, 4294901760
        %v484 = vsub.f32 %v482, %v483
        %v485 = vand.u32 %v484, 4294901760
        %486 = vmatpush.msra.mxu0 %v485
        %v487 = vand.u32 %v220, 4294901760
        %v488 = vsub.f32 %v220, %v487
        %v489 = vand.u32 %v488, 4294901760
        %v490 = vsub.f32 %v488, %v489
        %v491 = vand.u32 %v490, 4294901760
        %492 = vmatpush.msra.mxu0 %v491
        %v493 = vand.u32 %v237, 4294901760
        %494 = vmatmul.f32.gmra.mxu0 %v493
        %v495 = vpop.f32.mrf.mxu0
        %v496 = vadd.f32 %v457, %v495
        %v497 = vand.u32 %v240, 4294901760
        %498 = vmatmul.f32.gmra.mxu0 %v497
        %v499 = vpop.f32.mrf.mxu0
        %v500 = vadd.f32 %v465, %v499
        %501 = vdwg.mxu0
        %502 = vmatpush.msra.mxu0 0.0
        %503 = vmatpush.msra.mxu0 0.0
        %504 = vmatpush.msra.mxu0 0.0
        %505 = vmatpush.msra.mxu0 0.0
        %506 = vmatpush.msra.mxu0 0.0
        %507 = vmatpush.msra.mxu0 0.0
        %508 = vmatpush.msra.mxu0 0.0
        %509 = vmatpush.msra.mxu0 0.0
        %510 = vmatpush.msra.mxu0 0.0
        %511 = vmatpush.msra.mxu0 0.0
        %512 = vmatpush.msra.mxu0 0.0
        %513 = vmatpush.msra.mxu0 0.0
        %514 = vmatpush.msra.mxu0 0.0
        %515 = vmatpush.msra.mxu0 0.0
        %v516 = vand.u32 %v222, 4294901760
        %v517 = vsub.f32 %v222, %v516
        %518 = vmatpush.msra.mxu0 %v517
        %v519 = vand.u32 %v220, 4294901760
        %v520 = vsub.f32 %v220, %v519
        %521 = vmatpush.msra.mxu0 %v520
        %v522 = vand.u32 %v237, 4294901760
        %v523 = vsub.f32 %v237, %v522
        %524 = vmatmul.f32.gmra.mxu0 %v523
        %v525 = vpop.f32.mrf.mxu0
        %v526 = vadd.f32 %v496, %v525
        %v527 = vand.u32 %v240, 4294901760
        %v528 = vsub.f32 %v240, %v527
        %529 = vmatmul.f32.gmra.mxu0 %v528
        %v530 = vpop.f32.mrf.mxu0
        %v531 = vadd.f32 %v500, %v530
        %532 = vdwg.mxu0
        %533 = vmatpush.msra.mxu0 0.0
        %534 = vmatpush.msra.mxu0 0.0
        %535 = vmatpush.msra.mxu0 0.0
        %536 = vmatpush.msra.mxu0 0.0
        %537 = vmatpush.msra.mxu0 0.0
        %538 = vmatpush.msra.mxu0 0.0
        %539 = vmatpush.msra.mxu0 0.0
        %540 = vmatpush.msra.mxu0 0.0
        %541 = vmatpush.msra.mxu0 0.0
        %542 = vmatpush.msra.mxu0 0.0
        %543 = vmatpush.msra.mxu0 0.0
        %544 = vmatpush.msra.mxu0 0.0
        %545 = vmatpush.msra.mxu0 0.0
        %546 = vmatpush.msra.mxu0 0.0
        %v547 = vand.u32 %v222, 4294901760
        %548 = vmatpush.msra.mxu0 %v547
        %v549 = vand.u32 %v220, 4294901760
        %550 = vmatpush.msra.mxu0 %v549
        %v551 = vand.u32 %v237, 4294901760
        %v552 = vsub.f32 %v237, %v551
        %v553 = vand.u32 %v552, 4294901760
        %554 = vmatmul.f32.gmra.mxu0 %v553
        %v555 = vpop.f32.mrf.mxu0
        %v556 = vadd.f32 %v526, %v555
        %v557 = vand.u32 %v240, 4294901760
        %v558 = vsub.f32 %v240, %v557
        %v559 = vand.u32 %v558, 4294901760
        %560 = vmatmul.f32.gmra.mxu0 %v559
        %v561 = vpop.f32.mrf.mxu0
        %v562 = vadd.f32 %v531, %v561
        %563 = vdwg.mxu0
        %564 = vmatpush.msra.mxu0 0.0
        %565 = vmatpush.msra.mxu0 0.0
        %566 = vmatpush.msra.mxu0 0.0
        %567 = vmatpush.msra.mxu0 0.0
        %568 = vmatpush.msra.mxu0 0.0
        %569 = vmatpush.msra.mxu0 0.0
        %570 = vmatpush.msra.mxu0 0.0
        %571 = vmatpush.msra.mxu0 0.0
        %572 = vmatpush.msra.mxu0 0.0
        %573 = vmatpush.msra.mxu0 0.0
        %574 = vmatpush.msra.mxu0 0.0
        %575 = vmatpush.msra.mxu0 0.0
        %576 = vmatpush.msra.mxu0 0.0
        %577 = vmatpush.msra.mxu0 0.0
        %v578 = vand.u32 %v222, 4294901760
        %v579 = vsub.f32 %v222, %v578
        %v580 = vand.u32 %v579, 4294901760
        %581 = vmatpush.msra.mxu0 %v580
        %v582 = vand.u32 %v220, 4294901760
        %v583 = vsub.f32 %v220, %v582
        %v584 = vand.u32 %v583, 4294901760
        %585 = vmatpush.msra.mxu0 %v584
        %v586 = vand.u32 %v237, 4294901760
        %587 = vmatmul.f32.gmra.mxu0 %v586
        %v588 = vpop.f32.mrf.mxu0
        %v589 = vadd.f32 %v556, %v588
        %v590 = vand.u32 %v240, 4294901760
        %591 = vmatmul.f32.gmra.mxu0 %v590
        %v592 = vpop.f32.mrf.mxu0
        %v593 = vadd.f32 %v562, %v592
        %594 = vdwg.mxu0
        %595 = vmatpush.msra.mxu0 0.0
        %596 = vmatpush.msra.mxu0 0.0
        %597 = vmatpush.msra.mxu0 0.0
        %598 = vmatpush.msra.mxu0 0.0
        %599 = vmatpush.msra.mxu0 0.0
        %600 = vmatpush.msra.mxu0 0.0
        %601 = vmatpush.msra.mxu0 0.0
        %602 = vmatpush.msra.mxu0 0.0
        %603 = vmatpush.msra.mxu0 0.0
        %604 = vmatpush.msra.mxu0 0.0
        %605 = vmatpush.msra.mxu0 0.0
        %606 = vmatpush.msra.mxu0 0.0
        %607 = vmatpush.msra.mxu0 0.0
        %608 = vmatpush.msra.mxu0 0.0
        %v609 = vand.u32 %v222, 4294901760
        %610 = vmatpush.msra.mxu0 %v609
        %v611 = vand.u32 %v220, 4294901760
        %612 = vmatpush.msra.mxu0 %v611
        %v613 = vand.u32 %v237, 4294901760
        %614 = vmatmul.f32.gmra.mxu0 %v613
        %v615 = vpop.f32.mrf.mxu0
        %v616 = vadd.f32 %v589, %v615
        %v617 = vand.u32 %v240, 4294901760
        %618 = vmatmul.f32.gmra.mxu0 %v617
        %v619 = vpop.f32.mrf.mxu0
        %v620 = vadd.f32 %v593, %v619
        %621 = vdwg.mxu0
        %622 = vmatpush.msra.mxu0 0.0
        %623 = vmatpush.msra.mxu0 0.0
        %624 = vmatpush.msra.mxu0 0.0
        %625 = vmatpush.msra.mxu0 0.0
        %626 = vmatpush.msra.mxu0 0.0
        %627 = vmatpush.msra.mxu0 0.0
        %628 = vmatpush.msra.mxu0 0.0
        %629 = vmatpush.msra.mxu0 0.0
        %630 = vmatpush.msra.mxu0 0.0
        %631 = vmatpush.msra.mxu0 0.0
        %632 = vmatpush.msra.mxu0 0.0
        %633 = vmatpush.msra.mxu0 0.0
        %634 = vmatpush.msra.mxu0 0.0
        %635 = vmatpush.msra.mxu0 0.0
        %v636 = vand.u32 %v226, 4294901760
        %637 = vmatpush.msra.mxu0 %v636
        %v638 = vand.u32 %v224, 4294901760
        %639 = vmatpush.msra.mxu0 %v638
        %v640 = vand.u32 %v237, 4294901760
        %v641 = vsub.f32 %v237, %v640
        %v642 = vand.u32 %v641, 4294901760
        %v643 = vsub.f32 %v641, %v642
        %v644 = vand.u32 %v643, 4294901760
        %645 = vmatmul.f32.gmra.mxu0 %v644
        %v646 = vpop.f32.mrf.mxu0
        %v647 = vadd.f32 0.0, %v646
        %v648 = vand.u32 %v240, 4294901760
        %v649 = vsub.f32 %v240, %v648
        %v650 = vand.u32 %v649, 4294901760
        %v651 = vsub.f32 %v649, %v650
        %v652 = vand.u32 %v651, 4294901760
        %653 = vmatmul.f32.gmra.mxu0 %v652
        %v654 = vpop.f32.mrf.mxu0
        %v655 = vadd.f32 0.0, %v654
        %656 = vdwg.mxu0
        %657 = vmatpush.msra.mxu0 0.0
        %658 = vmatpush.msra.mxu0 0.0
        %659 = vmatpush.msra.mxu0 0.0
        %660 = vmatpush.msra.mxu0 0.0
        %661 = vmatpush.msra.mxu0 0.0
        %662 = vmatpush.msra.mxu0 0.0
        %663 = vmatpush.msra.mxu0 0.0
        %664 = vmatpush.msra.mxu0 0.0
        %665 = vmatpush.msra.mxu0 0.0
        %666 = vmatpush.msra.mxu0 0.0
        %667 = vmatpush.msra.mxu0 0.0
        %668 = vmatpush.msra.mxu0 0.0
        %669 = vmatpush.msra.mxu0 0.0
        %670 = vmatpush.msra.mxu0 0.0
        %v671 = vand.u32 %v226, 4294901760
        %v672 = vsub.f32 %v226, %v671
        %v673 = vand.u32 %v672, 4294901760
        %v674 = vsub.f32 %v672, %v673
        %v675 = vand.u32 %v674, 4294901760
        %676 = vmatpush.msra.mxu0 %v675
        %v677 = vand.u32 %v224, 4294901760
        %v678 = vsub.f32 %v224, %v677
        %v679 = vand.u32 %v678, 4294901760
        %v680 = vsub.f32 %v678, %v679
        %v681 = vand.u32 %v680, 4294901760
        %682 = vmatpush.msra.mxu0 %v681
        %v683 = vand.u32 %v237, 4294901760
        %684 = vmatmul.f32.gmra.mxu0 %v683
        %v685 = vpop.f32.mrf.mxu0
        %v686 = vadd.f32 %v647, %v685
        %v687 = vand.u32 %v240, 4294901760
        %688 = vmatmul.f32.gmra.mxu0 %v687
        %v689 = vpop.f32.mrf.mxu0
        %v690 = vadd.f32 %v655, %v689
        %691 = vdwg.mxu0
        %692 = vmatpush.msra.mxu0 0.0
        %693 = vmatpush.msra.mxu0 0.0
        %694 = vmatpush.msra.mxu0 0.0
        %695 = vmatpush.msra.mxu0 0.0
        %696 = vmatpush.msra.mxu0 0.0
        %697 = vmatpush.msra.mxu0 0.0
        %698 = vmatpush.msra.mxu0 0.0
        %699 = vmatpush.msra.mxu0 0.0
        %700 = vmatpush.msra.mxu0 0.0
        %701 = vmatpush.msra.mxu0 0.0
        %702 = vmatpush.msra.mxu0 0.0
        %703 = vmatpush.msra.mxu0 0.0
        %704 = vmatpush.msra.mxu0 0.0
        %705 = vmatpush.msra.mxu0 0.0
        %v706 = vand.u32 %v226, 4294901760
        %v707 = vsub.f32 %v226, %v706
        %708 = vmatpush.msra.mxu0 %v707
        %v709 = vand.u32 %v224, 4294901760
        %v710 = vsub.f32 %v224, %v709
        %711 = vmatpush.msra.mxu0 %v710
        %v712 = vand.u32 %v237, 4294901760
        %v713 = vsub.f32 %v237, %v712
        %714 = vmatmul.f32.gmra.mxu0 %v713
        %v715 = vpop.f32.mrf.mxu0
        %v716 = vadd.f32 %v686, %v715
        %v717 = vand.u32 %v240, 4294901760
        %v718 = vsub.f32 %v240, %v717
        %719 = vmatmul.f32.gmra.mxu0 %v718
        %v720 = vpop.f32.mrf.mxu0
        %v721 = vadd.f32 %v690, %v720
        %722 = vdwg.mxu0
        %723 = vmatpush.msra.mxu0 0.0
        %724 = vmatpush.msra.mxu0 0.0
        %725 = vmatpush.msra.mxu0 0.0
        %726 = vmatpush.msra.mxu0 0.0
        %727 = vmatpush.msra.mxu0 0.0
        %728 = vmatpush.msra.mxu0 0.0
        %729 = vmatpush.msra.mxu0 0.0
        %730 = vmatpush.msra.mxu0 0.0
        %731 = vmatpush.msra.mxu0 0.0
        %732 = vmatpush.msra.mxu0 0.0
        %733 = vmatpush.msra.mxu0 0.0
        %734 = vmatpush.msra.mxu0 0.0
        %735 = vmatpush.msra.mxu0 0.0
        %736 = vmatpush.msra.mxu0 0.0
        %v737 = vand.u32 %v226, 4294901760
        %738 = vmatpush.msra.mxu0 %v737
        %v739 = vand.u32 %v224, 4294901760
        %740 = vmatpush.msra.mxu0 %v739
        %v741 = vand.u32 %v237, 4294901760
        %v742 = vsub.f32 %v237, %v741
        %v743 = vand.u32 %v742, 4294901760
        %744 = vmatmul.f32.gmra.mxu0 %v743
        %v745 = vpop.f32.mrf.mxu0
        %v746 = vadd.f32 %v716, %v745
        %v747 = vand.u32 %v240, 4294901760
        %v748 = vsub.f32 %v240, %v747
        %v749 = vand.u32 %v748, 4294901760
        %750 = vmatmul.f32.gmra.mxu0 %v749
        %v751 = vpop.f32.mrf.mxu0
        %v752 = vadd.f32 %v721, %v751
        %753 = vdwg.mxu0
        %754 = vmatpush.msra.mxu0 0.0
        %755 = vmatpush.msra.mxu0 0.0
        %756 = vmatpush.msra.mxu0 0.0
        %757 = vmatpush.msra.mxu0 0.0
        %758 = vmatpush.msra.mxu0 0.0
        %759 = vmatpush.msra.mxu0 0.0
        %760 = vmatpush.msra.mxu0 0.0
        %761 = vmatpush.msra.mxu0 0.0
        %762 = vmatpush.msra.mxu0 0.0
        %763 = vmatpush.msra.mxu0 0.0
        %764 = vmatpush.msra.mxu0 0.0
        %765 = vmatpush.msra.mxu0 0.0
        %766 = vmatpush.msra.mxu0 0.0
        %767 = vmatpush.msra.mxu0 0.0
        %v768 = vand.u32 %v226, 4294901760
        %v769 = vsub.f32 %v226, %v768
        %v770 = vand.u32 %v769, 4294901760
        %771 = vmatpush.msra.mxu0 %v770
        %v772 = vand.u32 %v224, 4294901760
        %v773 = vsub.f32 %v224, %v772
        %v774 = vand.u32 %v773, 4294901760
        %775 = vmatpush.msra.mxu0 %v774
        %v776 = vand.u32 %v237, 4294901760
        %777 = vmatmul.f32.gmra.mxu0 %v776
        %v778 = vpop.f32.mrf.mxu0
        %v779 = vadd.f32 %v746, %v778
        %v780 = vand.u32 %v240, 4294901760
        %781 = vmatmul.f32.gmra.mxu0 %v780
        %v782 = vpop.f32.mrf.mxu0
        %v783 = vadd.f32 %v752, %v782
        %784 = vdwg.mxu0
        %785 = vmatpush.msra.mxu0 0.0
        %786 = vmatpush.msra.mxu0 0.0
        %787 = vmatpush.msra.mxu0 0.0
        %788 = vmatpush.msra.mxu0 0.0
        %789 = vmatpush.msra.mxu0 0.0
        %790 = vmatpush.msra.mxu0 0.0
        %791 = vmatpush.msra.mxu0 0.0
        %792 = vmatpush.msra.mxu0 0.0
        %793 = vmatpush.msra.mxu0 0.0
        %794 = vmatpush.msra.mxu0 0.0
        %795 = vmatpush.msra.mxu0 0.0
        %796 = vmatpush.msra.mxu0 0.0
        %797 = vmatpush.msra.mxu0 0.0
        %798 = vmatpush.msra.mxu0 0.0
        %v799 = vand.u32 %v226, 4294901760
        %800 = vmatpush.msra.mxu0 %v799
        %v801 = vand.u32 %v224, 4294901760
        %802 = vmatpush.msra.mxu0 %v801
        %v803 = vand.u32 %v237, 4294901760
        %804 = vmatmul.f32.gmra.mxu0 %v803
        %v805 = vpop.f32.mrf.mxu0
        %v806 = vadd.f32 %v779, %v805
        %v807 = vand.u32 %v240, 4294901760
        %808 = vmatmul.f32.gmra.mxu0 %v807
        %v809 = vpop.f32.mrf.mxu0
        %v810 = vadd.f32 %v783, %v809
        %811 = vdwg.mxu0
        %812 = vmatpush.msra.mxu0 0.0
        %813 = vmatpush.msra.mxu0 0.0
        %814 = vmatpush.msra.mxu0 0.0
        %815 = vmatpush.msra.mxu0 0.0
        %816 = vmatpush.msra.mxu0 0.0
        %817 = vmatpush.msra.mxu0 0.0
        %818 = vmatpush.msra.mxu0 0.0
        %819 = vmatpush.msra.mxu0 0.0
        %820 = vmatpush.msra.mxu0 0.0
        %821 = vmatpush.msra.mxu0 0.0
        %822 = vmatpush.msra.mxu0 0.0
        %823 = vmatpush.msra.mxu0 0.0
        %824 = vmatpush.msra.mxu0 0.0
        %825 = vmatpush.msra.mxu0 0.0
        %v826 = vand.u32 %v227, 4294901760
        %827 = vmatpush.msra.mxu0 %v826
        %v828 = vand.u32 %v225, 4294901760
        %829 = vmatpush.msra.mxu0 %v828
        %v830 = vand.u32 %v237, 4294901760
        %v831 = vsub.f32 %v237, %v830
        %v832 = vand.u32 %v831, 4294901760
        %v833 = vsub.f32 %v831, %v832
        %v834 = vand.u32 %v833, 4294901760
        %835 = vmatmul.f32.gmra.mxu0 %v834
        %v836 = vpop.f32.mrf.mxu0
        %v837 = vadd.f32 0.0, %v836
        %v838 = vand.u32 %v240, 4294901760
        %v839 = vsub.f32 %v240, %v838
        %v840 = vand.u32 %v839, 4294901760
        %v841 = vsub.f32 %v839, %v840
        %v842 = vand.u32 %v841, 4294901760
        %843 = vmatmul.f32.gmra.mxu0 %v842
        %v844 = vpop.f32.mrf.mxu0
        %v845 = vadd.f32 0.0, %v844
        %846 = vdwg.mxu0
        %847 = vmatpush.msra.mxu0 0.0
        %848 = vmatpush.msra.mxu0 0.0
        %849 = vmatpush.msra.mxu0 0.0
        %850 = vmatpush.msra.mxu0 0.0
        %851 = vmatpush.msra.mxu0 0.0
        %852 = vmatpush.msra.mxu0 0.0
        %853 = vmatpush.msra.mxu0 0.0
        %854 = vmatpush.msra.mxu0 0.0
        %855 = vmatpush.msra.mxu0 0.0
        %856 = vmatpush.msra.mxu0 0.0
        %857 = vmatpush.msra.mxu0 0.0
        %858 = vmatpush.msra.mxu0 0.0
        %859 = vmatpush.msra.mxu0 0.0
        %860 = vmatpush.msra.mxu0 0.0
        %v861 = vand.u32 %v227, 4294901760
        %v862 = vsub.f32 %v227, %v861
        %v863 = vand.u32 %v862, 4294901760
        %v864 = vsub.f32 %v862, %v863
        %v865 = vand.u32 %v864, 4294901760
        %866 = vmatpush.msra.mxu0 %v865
        %v867 = vand.u32 %v225, 4294901760
        %v868 = vsub.f32 %v225, %v867
        %v869 = vand.u32 %v868, 4294901760
        %v870 = vsub.f32 %v868, %v869
        %v871 = vand.u32 %v870, 4294901760
        %872 = vmatpush.msra.mxu0 %v871
        %v873 = vand.u32 %v237, 4294901760
        %874 = vmatmul.f32.gmra.mxu0 %v873
        %v875 = vpop.f32.mrf.mxu0
        %v876 = vadd.f32 %v837, %v875
        %v877 = vand.u32 %v240, 4294901760
        %878 = vmatmul.f32.gmra.mxu0 %v877
        %v879 = vpop.f32.mrf.mxu0
        %v880 = vadd.f32 %v845, %v879
        %881 = vdwg.mxu0
        %882 = vmatpush.msra.mxu0 0.0
        %883 = vmatpush.msra.mxu0 0.0
        %884 = vmatpush.msra.mxu0 0.0
        %885 = vmatpush.msra.mxu0 0.0
        %886 = vmatpush.msra.mxu0 0.0
        %887 = vmatpush.msra.mxu0 0.0
        %888 = vmatpush.msra.mxu0 0.0
        %889 = vmatpush.msra.mxu0 0.0
        %890 = vmatpush.msra.mxu0 0.0
        %891 = vmatpush.msra.mxu0 0.0
        %892 = vmatpush.msra.mxu0 0.0
        %893 = vmatpush.msra.mxu0 0.0
        %894 = vmatpush.msra.mxu0 0.0
        %895 = vmatpush.msra.mxu0 0.0
        %v896 = vand.u32 %v227, 4294901760
        %v897 = vsub.f32 %v227, %v896
        %898 = vmatpush.msra.mxu0 %v897
        %v899 = vand.u32 %v225, 4294901760
        %v900 = vsub.f32 %v225, %v899
        %901 = vmatpush.msra.mxu0 %v900
        %v902 = vand.u32 %v237, 4294901760
        %v903 = vsub.f32 %v237, %v902
        %904 = vmatmul.f32.gmra.mxu0 %v903
        %v905 = vpop.f32.mrf.mxu0
        %v906 = vadd.f32 %v876, %v905
        %v907 = vand.u32 %v240, 4294901760
        %v908 = vsub.f32 %v240, %v907
        %909 = vmatmul.f32.gmra.mxu0 %v908
        %v910 = vpop.f32.mrf.mxu0
        %v911 = vadd.f32 %v880, %v910
        %912 = vdwg.mxu0
        %913 = vmatpush.msra.mxu0 0.0
        %914 = vmatpush.msra.mxu0 0.0
        %915 = vmatpush.msra.mxu0 0.0
        %916 = vmatpush.msra.mxu0 0.0
        %917 = vmatpush.msra.mxu0 0.0
        %918 = vmatpush.msra.mxu0 0.0
        %919 = vmatpush.msra.mxu0 0.0
        %920 = vmatpush.msra.mxu0 0.0
        %921 = vmatpush.msra.mxu0 0.0
        %922 = vmatpush.msra.mxu0 0.0
        %923 = vmatpush.msra.mxu0 0.0
        %924 = vmatpush.msra.mxu0 0.0
        %925 = vmatpush.msra.mxu0 0.0
        %926 = vmatpush.msra.mxu0 0.0
        %v927 = vand.u32 %v227, 4294901760
        %928 = vmatpush.msra.mxu0 %v927
        %v929 = vand.u32 %v225, 4294901760
        %930 = vmatpush.msra.mxu0 %v929
        %v931 = vand.u32 %v237, 4294901760
        %v932 = vsub.f32 %v237, %v931
        %v933 = vand.u32 %v932, 4294901760
        %934 = vmatmul.f32.gmra.mxu0 %v933
        %v935 = vpop.f32.mrf.mxu0
        %v936 = vadd.f32 %v906, %v935
        %v937 = vand.u32 %v240, 4294901760
        %v938 = vsub.f32 %v240, %v937
        %v939 = vand.u32 %v938, 4294901760
        %940 = vmatmul.f32.gmra.mxu0 %v939
        %v941 = vpop.f32.mrf.mxu0
        %v942 = vadd.f32 %v911, %v941
        %943 = vdwg.mxu0
        %944 = vmatpush.msra.mxu0 0.0
        %945 = vmatpush.msra.mxu0 0.0
        %946 = vmatpush.msra.mxu0 0.0
        %947 = vmatpush.msra.mxu0 0.0
        %948 = vmatpush.msra.mxu0 0.0
        %949 = vmatpush.msra.mxu0 0.0
        %950 = vmatpush.msra.mxu0 0.0
        %951 = vmatpush.msra.mxu0 0.0
        %952 = vmatpush.msra.mxu0 0.0
        %953 = vmatpush.msra.mxu0 0.0
        %954 = vmatpush.msra.mxu0 0.0
        %955 = vmatpush.msra.mxu0 0.0
        %956 = vmatpush.msra.mxu0 0.0
        %957 = vmatpush.msra.mxu0 0.0
        %v958 = vand.u32 %v227, 4294901760
        %v959 = vsub.f32 %v227, %v958
        %v960 = vand.u32 %v959, 4294901760
        %961 = vmatpush.msra.mxu0 %v960
        %v962 = vand.u32 %v225, 4294901760
        %v963 = vsub.f32 %v225, %v962
        %v964 = vand.u32 %v963, 4294901760
        %965 = vmatpush.msra.mxu0 %v964
        %v966 = vand.u32 %v237, 4294901760
        %967 = vmatmul.f32.gmra.mxu0 %v966
        %v968 = vpop.f32.mrf.mxu0
        %v969 = vadd.f32 %v936, %v968
        %v970 = vand.u32 %v240, 4294901760
        %971 = vmatmul.f32.gmra.mxu0 %v970
        %v972 = vpop.f32.mrf.mxu0
        %v973 = vadd.f32 %v942, %v972
        %974 = vdwg.mxu0
        %975 = vmatpush.msra.mxu0 0.0
        %976 = vmatpush.msra.mxu0 0.0
        %977 = vmatpush.msra.mxu0 0.0
        %978 = vmatpush.msra.mxu0 0.0
        %979 = vmatpush.msra.mxu0 0.0
        %980 = vmatpush.msra.mxu0 0.0
        %981 = vmatpush.msra.mxu0 0.0
        %982 = vmatpush.msra.mxu0 0.0
        %983 = vmatpush.msra.mxu0 0.0
        %984 = vmatpush.msra.mxu0 0.0
        %985 = vmatpush.msra.mxu0 0.0
        %986 = vmatpush.msra.mxu0 0.0
        %987 = vmatpush.msra.mxu0 0.0
        %988 = vmatpush.msra.mxu0 0.0
        %v989 = vand.u32 %v227, 4294901760
        %990 = vmatpush.msra.mxu0 %v989
        %v991 = vand.u32 %v225, 4294901760
        %992 = vmatpush.msra.mxu0 %v991
        %v993 = vand.u32 %v237, 4294901760
        %994 = vmatmul.f32.gmra.mxu0 %v993
        %v995 = vpop.f32.mrf.mxu0
        %v996 = vadd.f32 %v969, %v995
        %v997 = vand.u32 %v240, 4294901760
        %998 = vmatmul.f32.gmra.mxu0 %v997
        %v999 = vpop.f32.mrf.mxu0
        %v1000 = vadd.f32 %v973, %v999
        %1001 = vdwg.mxu0
        %1002 = vmatpush.msra.mxu0 0.0
        %1003 = vmatpush.msra.mxu0 0.0
        %1004 = vmatpush.msra.mxu0 0.0
        %1005 = vmatpush.msra.mxu0 0.0
        %1006 = vmatpush.msra.mxu0 0.0
        %1007 = vmatpush.msra.mxu0 0.0
        %1008 = vmatpush.msra.mxu0 0.0
        %1009 = vmatpush.msra.mxu0 0.0
        %1010 = vmatpush.msra.mxu0 0.0
        %1011 = vmatpush.msra.mxu0 0.0
        %1012 = vmatpush.msra.mxu0 0.0
        %1013 = vmatpush.msra.mxu0 0.0
        %1014 = vmatpush.msra.mxu0 0.0
        %1015 = vmatpush.msra.mxu0 0.0
        %v1016 = vand.u32 %v231, 4294901760
        %1017 = vmatpush.msra.mxu0 %v1016
        %v1018 = vand.u32 %v229, 4294901760
        %1019 = vmatpush.msra.mxu0 %v1018
        %v1020 = vand.u32 %v237, 4294901760
        %v1021 = vsub.f32 %v237, %v1020
        %v1022 = vand.u32 %v1021, 4294901760
        %v1023 = vsub.f32 %v1021, %v1022
        %v1024 = vand.u32 %v1023, 4294901760
        %1025 = vmatmul.f32.gmra.mxu0 %v1024
        %v1026 = vpop.f32.mrf.mxu0
        %v1027 = vadd.f32 0.0, %v1026
        %v1028 = vand.u32 %v240, 4294901760
        %v1029 = vsub.f32 %v240, %v1028
        %v1030 = vand.u32 %v1029, 4294901760
        %v1031 = vsub.f32 %v1029, %v1030
        %v1032 = vand.u32 %v1031, 4294901760
        %1033 = vmatmul.f32.gmra.mxu0 %v1032
        %v1034 = vpop.f32.mrf.mxu0
        %v1035 = vadd.f32 0.0, %v1034
        %1036 = vdwg.mxu0
        %1037 = vmatpush.msra.mxu0 0.0
        %1038 = vmatpush.msra.mxu0 0.0
        %1039 = vmatpush.msra.mxu0 0.0
        %1040 = vmatpush.msra.mxu0 0.0
        %1041 = vmatpush.msra.mxu0 0.0
        %1042 = vmatpush.msra.mxu0 0.0
        %1043 = vmatpush.msra.mxu0 0.0
        %1044 = vmatpush.msra.mxu0 0.0
        %1045 = vmatpush.msra.mxu0 0.0
        %1046 = vmatpush.msra.mxu0 0.0
        %1047 = vmatpush.msra.mxu0 0.0
        %1048 = vmatpush.msra.mxu0 0.0
        %1049 = vmatpush.msra.mxu0 0.0
        %1050 = vmatpush.msra.mxu0 0.0
        %v1051 = vand.u32 %v231, 4294901760
        %v1052 = vsub.f32 %v231, %v1051
        %v1053 = vand.u32 %v1052, 4294901760
        %v1054 = vsub.f32 %v1052, %v1053
        %v1055 = vand.u32 %v1054, 4294901760
        %1056 = vmatpush.msra.mxu0 %v1055
        %v1057 = vand.u32 %v229, 4294901760
        %v1058 = vsub.f32 %v229, %v1057
        %v1059 = vand.u32 %v1058, 4294901760
        %v1060 = vsub.f32 %v1058, %v1059
        %v1061 = vand.u32 %v1060, 4294901760
        %1062 = vmatpush.msra.mxu0 %v1061
        %v1063 = vand.u32 %v237, 4294901760
        %1064 = vmatmul.f32.gmra.mxu0 %v1063
        %v1065 = vpop.f32.mrf.mxu0
        %v1066 = vadd.f32 %v1027, %v1065
        %v1067 = vand.u32 %v240, 4294901760
        %1068 = vmatmul.f32.gmra.mxu0 %v1067
        %v1069 = vpop.f32.mrf.mxu0
        %v1070 = vadd.f32 %v1035, %v1069
        %1071 = vdwg.mxu0
        %1072 = vmatpush.msra.mxu0 0.0
        %1073 = vmatpush.msra.mxu0 0.0
        %1074 = vmatpush.msra.mxu0 0.0
        %1075 = vmatpush.msra.mxu0 0.0
        %1076 = vmatpush.msra.mxu0 0.0
        %1077 = vmatpush.msra.mxu0 0.0
        %1078 = vmatpush.msra.mxu0 0.0
        %1079 = vmatpush.msra.mxu0 0.0
        %1080 = vmatpush.msra.mxu0 0.0
        %1081 = vmatpush.msra.mxu0 0.0
        %1082 = vmatpush.msra.mxu0 0.0
        %1083 = vmatpush.msra.mxu0 0.0
        %1084 = vmatpush.msra.mxu0 0.0
        %1085 = vmatpush.msra.mxu0 0.0
        %v1086 = vand.u32 %v231, 4294901760
        %v1087 = vsub.f32 %v231, %v1086
        %1088 = vmatpush.msra.mxu0 %v1087
        %v1089 = vand.u32 %v229, 4294901760
        %v1090 = vsub.f32 %v229, %v1089
        %1091 = vmatpush.msra.mxu0 %v1090
        %v1092 = vand.u32 %v237, 4294901760
        %v1093 = vsub.f32 %v237, %v1092
        %1094 = vmatmul.f32.gmra.mxu0 %v1093
        %v1095 = vpop.f32.mrf.mxu0
        %v1096 = vadd.f32 %v1066, %v1095
        %v1097 = vand.u32 %v240, 4294901760
        %v1098 = vsub.f32 %v240, %v1097
        %1099 = vmatmul.f32.gmra.mxu0 %v1098
        %v1100 = vpop.f32.mrf.mxu0
        %v1101 = vadd.f32 %v1070, %v1100
        %1102 = vdwg.mxu0
        %1103 = vmatpush.msra.mxu0 0.0
        %1104 = vmatpush.msra.mxu0 0.0
        %1105 = vmatpush.msra.mxu0 0.0
        %1106 = vmatpush.msra.mxu0 0.0
        %1107 = vmatpush.msra.mxu0 0.0
        %1108 = vmatpush.msra.mxu0 0.0
        %1109 = vmatpush.msra.mxu0 0.0
        %1110 = vmatpush.msra.mxu0 0.0
        %1111 = vmatpush.msra.mxu0 0.0
        %1112 = vmatpush.msra.mxu0 0.0
        %1113 = vmatpush.msra.mxu0 0.0
        %1114 = vmatpush.msra.mxu0 0.0
        %1115 = vmatpush.msra.mxu0 0.0
        %1116 = vmatpush.msra.mxu0 0.0
        %v1117 = vand.u32 %v231, 4294901760
        %1118 = vmatpush.msra.mxu0 %v1117
        %v1119 = vand.u32 %v229, 4294901760
        %1120 = vmatpush.msra.mxu0 %v1119
        %v1121 = vand.u32 %v237, 4294901760
        %v1122 = vsub.f32 %v237, %v1121
        %v1123 = vand.u32 %v1122, 4294901760
        %1124 = vmatmul.f32.gmra.mxu0 %v1123
        %v1125 = vpop.f32.mrf.mxu0
        %v1126 = vadd.f32 %v1096, %v1125
        %v1127 = vand.u32 %v240, 4294901760
        %v1128 = vsub.f32 %v240, %v1127
        %v1129 = vand.u32 %v1128, 4294901760
        %1130 = vmatmul.f32.gmra.mxu0 %v1129
        %v1131 = vpop.f32.mrf.mxu0
        %v1132 = vadd.f32 %v1101, %v1131
        %1133 = vdwg.mxu0
        %1134 = vmatpush.msra.mxu0 0.0
        %1135 = vmatpush.msra.mxu0 0.0
        %1136 = vmatpush.msra.mxu0 0.0
        %1137 = vmatpush.msra.mxu0 0.0
        %1138 = vmatpush.msra.mxu0 0.0
        %1139 = vmatpush.msra.mxu0 0.0
        %1140 = vmatpush.msra.mxu0 0.0
        %1141 = vmatpush.msra.mxu0 0.0
        %1142 = vmatpush.msra.mxu0 0.0
        %1143 = vmatpush.msra.mxu0 0.0
        %1144 = vmatpush.msra.mxu0 0.0
        %1145 = vmatpush.msra.mxu0 0.0
        %1146 = vmatpush.msra.mxu0 0.0
        %1147 = vmatpush.msra.mxu0 0.0
        %v1148 = vand.u32 %v231, 4294901760
        %v1149 = vsub.f32 %v231, %v1148
        %v1150 = vand.u32 %v1149, 4294901760
        %1151 = vmatpush.msra.mxu0 %v1150
        %v1152 = vand.u32 %v229, 4294901760
        %v1153 = vsub.f32 %v229, %v1152
        %v1154 = vand.u32 %v1153, 4294901760
        %1155 = vmatpush.msra.mxu0 %v1154
        %v1156 = vand.u32 %v237, 4294901760
        %1157 = vmatmul.f32.gmra.mxu0 %v1156
        %v1158 = vpop.f32.mrf.mxu0
        %v1159 = vadd.f32 %v1126, %v1158
        %v1160 = vand.u32 %v240, 4294901760
        %1161 = vmatmul.f32.gmra.mxu0 %v1160
        %v1162 = vpop.f32.mrf.mxu0
        %v1163 = vadd.f32 %v1132, %v1162
        %1164 = vdwg.mxu0
        %1165 = vmatpush.msra.mxu0 0.0
        %1166 = vmatpush.msra.mxu0 0.0
        %1167 = vmatpush.msra.mxu0 0.0
        %1168 = vmatpush.msra.mxu0 0.0
        %1169 = vmatpush.msra.mxu0 0.0
        %1170 = vmatpush.msra.mxu0 0.0
        %1171 = vmatpush.msra.mxu0 0.0
        %1172 = vmatpush.msra.mxu0 0.0
        %1173 = vmatpush.msra.mxu0 0.0
        %1174 = vmatpush.msra.mxu0 0.0
        %1175 = vmatpush.msra.mxu0 0.0
        %1176 = vmatpush.msra.mxu0 0.0
        %1177 = vmatpush.msra.mxu0 0.0
        %1178 = vmatpush.msra.mxu0 0.0
        %v1179 = vand.u32 %v231, 4294901760
        %1180 = vmatpush.msra.mxu0 %v1179
        %v1181 = vand.u32 %v229, 4294901760
        %1182 = vmatpush.msra.mxu0 %v1181
        %v1183 = vand.u32 %v237, 4294901760
        %1184 = vmatmul.f32.gmra.mxu0 %v1183
        %v1185 = vpop.f32.mrf.mxu0
        %v1186 = vadd.f32 %v1159, %v1185
        %v1187 = vand.u32 %v240, 4294901760
        %1188 = vmatmul.f32.gmra.mxu0 %v1187
        %v1189 = vpop.f32.mrf.mxu0
        %v1190 = vadd.f32 %v1163, %v1189
        %1191 = vdwg.mxu0
        %1192 = vmatpush.msra.mxu0 0.0
        %1193 = vmatpush.msra.mxu0 0.0
        %1194 = vmatpush.msra.mxu0 0.0
        %1195 = vmatpush.msra.mxu0 0.0
        %1196 = vmatpush.msra.mxu0 0.0
        %1197 = vmatpush.msra.mxu0 0.0
        %1198 = vmatpush.msra.mxu0 0.0
        %1199 = vmatpush.msra.mxu0 0.0
        %1200 = vmatpush.msra.mxu0 0.0
        %1201 = vmatpush.msra.mxu0 0.0
        %1202 = vmatpush.msra.mxu0 0.0
        %1203 = vmatpush.msra.mxu0 0.0
        %1204 = vmatpush.msra.mxu0 0.0
        %1205 = vmatpush.msra.mxu0 0.0
        %v1206 = vand.u32 %v232, 4294901760
        %1207 = vmatpush.msra.mxu0 %v1206
        %v1208 = vand.u32 %v230, 4294901760
        %1209 = vmatpush.msra.mxu0 %v1208
        %v1210 = vand.u32 %v237, 4294901760
        %v1211 = vsub.f32 %v237, %v1210
        %v1212 = vand.u32 %v1211, 4294901760
        %v1213 = vsub.f32 %v1211, %v1212
        %v1214 = vand.u32 %v1213, 4294901760
        %1215 = vmatmul.f32.gmra.mxu0 %v1214
        %v1216 = vpop.f32.mrf.mxu0
        %v1217 = vadd.f32 0.0, %v1216
        %v1218 = vand.u32 %v240, 4294901760
        %v1219 = vsub.f32 %v240, %v1218
        %v1220 = vand.u32 %v1219, 4294901760
        %v1221 = vsub.f32 %v1219, %v1220
        %v1222 = vand.u32 %v1221, 4294901760
        %1223 = vmatmul.f32.gmra.mxu0 %v1222
        %v1224 = vpop.f32.mrf.mxu0
        %v1225 = vadd.f32 0.0, %v1224
        %1226 = vdwg.mxu0
        %1227 = vmatpush.msra.mxu0 0.0
        %1228 = vmatpush.msra.mxu0 0.0
        %1229 = vmatpush.msra.mxu0 0.0
        %1230 = vmatpush.msra.mxu0 0.0
        %1231 = vmatpush.msra.mxu0 0.0
        %1232 = vmatpush.msra.mxu0 0.0
        %1233 = vmatpush.msra.mxu0 0.0
        %1234 = vmatpush.msra.mxu0 0.0
        %1235 = vmatpush.msra.mxu0 0.0
        %1236 = vmatpush.msra.mxu0 0.0
        %1237 = vmatpush.msra.mxu0 0.0
        %1238 = vmatpush.msra.mxu0 0.0
        %1239 = vmatpush.msra.mxu0 0.0
        %1240 = vmatpush.msra.mxu0 0.0
        %v1241 = vand.u32 %v232, 4294901760
        %v1242 = vsub.f32 %v232, %v1241
        %v1243 = vand.u32 %v1242, 4294901760
        %v1244 = vsub.f32 %v1242, %v1243
        %v1245 = vand.u32 %v1244, 4294901760
        %1246 = vmatpush.msra.mxu0 %v1245
        %v1247 = vand.u32 %v230, 4294901760
        %v1248 = vsub.f32 %v230, %v1247
        %v1249 = vand.u32 %v1248, 4294901760
        %v1250 = vsub.f32 %v1248, %v1249
        %v1251 = vand.u32 %v1250, 4294901760
        %1252 = vmatpush.msra.mxu0 %v1251
        %v1253 = vand.u32 %v237, 4294901760
        %1254 = vmatmul.f32.gmra.mxu0 %v1253
        %v1255 = vpop.f32.mrf.mxu0
        %v1256 = vadd.f32 %v1217, %v1255
        %v1257 = vand.u32 %v240, 4294901760
        %1258 = vmatmul.f32.gmra.mxu0 %v1257
        %v1259 = vpop.f32.mrf.mxu0
        %v1260 = vadd.f32 %v1225, %v1259
        %1261 = vdwg.mxu0
        %1262 = vmatpush.msra.mxu0 0.0
        %1263 = vmatpush.msra.mxu0 0.0
        %1264 = vmatpush.msra.mxu0 0.0
        %1265 = vmatpush.msra.mxu0 0.0
        %1266 = vmatpush.msra.mxu0 0.0
        %1267 = vmatpush.msra.mxu0 0.0
        %1268 = vmatpush.msra.mxu0 0.0
        %1269 = vmatpush.msra.mxu0 0.0
        %1270 = vmatpush.msra.mxu0 0.0
        %1271 = vmatpush.msra.mxu0 0.0
        %1272 = vmatpush.msra.mxu0 0.0
        %1273 = vmatpush.msra.mxu0 0.0
        %1274 = vmatpush.msra.mxu0 0.0
        %1275 = vmatpush.msra.mxu0 0.0
        %v1276 = vand.u32 %v232, 4294901760
        %v1277 = vsub.f32 %v232, %v1276
        %1278 = vmatpush.msra.mxu0 %v1277
        %v1279 = vand.u32 %v230, 4294901760
        %v1280 = vsub.f32 %v230, %v1279
        %1281 = vmatpush.msra.mxu0 %v1280
        %v1282 = vand.u32 %v237, 4294901760
        %v1283 = vsub.f32 %v237, %v1282
        %1284 = vmatmul.f32.gmra.mxu0 %v1283
        %v1285 = vpop.f32.mrf.mxu0
        %v1286 = vadd.f32 %v1256, %v1285
        %v1287 = vand.u32 %v240, 4294901760
        %v1288 = vsub.f32 %v240, %v1287
        %1289 = vmatmul.f32.gmra.mxu0 %v1288
        %v1290 = vpop.f32.mrf.mxu0
        %v1291 = vadd.f32 %v1260, %v1290
        %1292 = vdwg.mxu0
        %1293 = vmatpush.msra.mxu0 0.0
        %1294 = vmatpush.msra.mxu0 0.0
        %1295 = vmatpush.msra.mxu0 0.0
        %1296 = vmatpush.msra.mxu0 0.0
        %1297 = vmatpush.msra.mxu0 0.0
        %1298 = vmatpush.msra.mxu0 0.0
        %1299 = vmatpush.msra.mxu0 0.0
        %1300 = vmatpush.msra.mxu0 0.0
        %1301 = vmatpush.msra.mxu0 0.0
        %1302 = vmatpush.msra.mxu0 0.0
        %1303 = vmatpush.msra.mxu0 0.0
        %1304 = vmatpush.msra.mxu0 0.0
        %1305 = vmatpush.msra.mxu0 0.0
        %1306 = vmatpush.msra.mxu0 0.0
        %v1307 = vand.u32 %v232, 4294901760
        %1308 = vmatpush.msra.mxu0 %v1307
        %v1309 = vand.u32 %v230, 4294901760
        %1310 = vmatpush.msra.mxu0 %v1309
        %v1311 = vand.u32 %v237, 4294901760
        %v1312 = vsub.f32 %v237, %v1311
        %v1313 = vand.u32 %v1312, 4294901760
        %1314 = vmatmul.f32.gmra.mxu0 %v1313
        %v1315 = vpop.f32.mrf.mxu0
        %v1316 = vadd.f32 %v1286, %v1315
        %v1317 = vand.u32 %v240, 4294901760
        %v1318 = vsub.f32 %v240, %v1317
        %v1319 = vand.u32 %v1318, 4294901760
        %1320 = vmatmul.f32.gmra.mxu0 %v1319
        %v1321 = vpop.f32.mrf.mxu0
        %v1322 = vadd.f32 %v1291, %v1321
        %1323 = vdwg.mxu0
        %1324 = vmatpush.msra.mxu0 0.0
        %1325 = vmatpush.msra.mxu0 0.0
        %1326 = vmatpush.msra.mxu0 0.0
        %1327 = vmatpush.msra.mxu0 0.0
        %1328 = vmatpush.msra.mxu0 0.0
        %1329 = vmatpush.msra.mxu0 0.0
        %1330 = vmatpush.msra.mxu0 0.0
        %1331 = vmatpush.msra.mxu0 0.0
        %1332 = vmatpush.msra.mxu0 0.0
        %1333 = vmatpush.msra.mxu0 0.0
        %1334 = vmatpush.msra.mxu0 0.0
        %1335 = vmatpush.msra.mxu0 0.0
        %1336 = vmatpush.msra.mxu0 0.0
        %1337 = vmatpush.msra.mxu0 0.0
        %v1338 = vand.u32 %v232, 4294901760
        %v1339 = vsub.f32 %v232, %v1338
        %v1340 = vand.u32 %v1339, 4294901760
        %1341 = vmatpush.msra.mxu0 %v1340
        %v1342 = vand.u32 %v230, 4294901760
        %v1343 = vsub.f32 %v230, %v1342
        %v1344 = vand.u32 %v1343, 4294901760
        %1345 = vmatpush.msra.mxu0 %v1344
        %v1346 = vand.u32 %v237, 4294901760
        %1347 = vmatmul.f32.gmra.mxu0 %v1346
        %v1348 = vpop.f32.mrf.mxu0
        %v1349 = vadd.f32 %v1316, %v1348
        %v1350 = vand.u32 %v240, 4294901760
        %1351 = vmatmul.f32.gmra.mxu0 %v1350
        %v1352 = vpop.f32.mrf.mxu0
        %v1353 = vadd.f32 %v1322, %v1352
        %1354 = vdwg.mxu0
        %1355 = vmatpush.msra.mxu0 0.0
        %1356 = vmatpush.msra.mxu0 0.0
        %1357 = vmatpush.msra.mxu0 0.0
        %1358 = vmatpush.msra.mxu0 0.0
        %1359 = vmatpush.msra.mxu0 0.0
        %1360 = vmatpush.msra.mxu0 0.0
        %1361 = vmatpush.msra.mxu0 0.0
        %1362 = vmatpush.msra.mxu0 0.0
        %1363 = vmatpush.msra.mxu0 0.0
        %1364 = vmatpush.msra.mxu0 0.0
        %1365 = vmatpush.msra.mxu0 0.0
        %1366 = vmatpush.msra.mxu0 0.0
        %1367 = vmatpush.msra.mxu0 0.0
        %1368 = vmatpush.msra.mxu0 0.0
        %v1369 = vand.u32 %v232, 4294901760
        %1370 = vmatpush.msra.mxu0 %v1369
        %v1371 = vand.u32 %v230, 4294901760
        %1372 = vmatpush.msra.mxu0 %v1371
        %v1373 = vand.u32 %v237, 4294901760
        %1374 = vmatmul.f32.gmra.mxu0 %v1373
        %v1375 = vpop.f32.mrf.mxu0
        %v1376 = vadd.f32 %v1349, %v1375
        %v1377 = vand.u32 %v240, 4294901760
        %1378 = vmatmul.f32.gmra.mxu0 %v1377
        %v1379 = vpop.f32.mrf.mxu0
        %v1380 = vadd.f32 %v1353, %v1379
        %1381 = vdwg.mxu0
        %s1382 = scalar_lea.vmem %s214, 16
        %v1383 = vld [vmem:[%s1382] sm:$0xff]
        %v1384 = vld [vmem:[%s1382 + $0x8] sm:$0xff]
        %v1386 = vsel %vm235, %v1383, 0
        %v1389 = vsel %vm235, %v1384, 0
        %1391 = vmatpush.msra.mxu0 0.0
        %1392 = vmatpush.msra.mxu0 0.0
        %1393 = vmatpush.msra.mxu0 0.0
        %1394 = vmatpush.msra.mxu0 0.0
        %1395 = vmatpush.msra.mxu0 0.0
        %1396 = vmatpush.msra.mxu0 0.0
        %1397 = vmatpush.msra.mxu0 0.0
        %1398 = vmatpush.msra.mxu0 0.0
        %1399 = vmatpush.msra.mxu0 0.0
        %1400 = vmatpush.msra.mxu0 0.0
        %1401 = vmatpush.msra.mxu0 0.0
        %1402 = vmatpush.msra.mxu0 0.0
        %1403 = vmatpush.msra.mxu0 0.0
        %1404 = vmatpush.msra.mxu0 0.0
        %v1405 = vand.u32 %v221, 4294901760
        %1406 = vmatpush.msra.mxu0 %v1405
        %v1407 = vand.u32 %v219, 4294901760
        %1408 = vmatpush.msra.mxu0 %v1407
        %v1409 = vand.u32 %v1386, 4294901760
        %v1410 = vsub.f32 %v1386, %v1409
        %v1411 = vand.u32 %v1410, 4294901760
        %v1412 = vsub.f32 %v1410, %v1411
        %v1413 = vand.u32 %v1412, 4294901760
        %1414 = vmatmul.f32.gmra.mxu0 %v1413
        %v1415 = vpop.f32.mrf.mxu0
        %v1416 = vadd.f32 0.0, %v1415
        %v1417 = vand.u32 %v1389, 4294901760
        %v1418 = vsub.f32 %v1389, %v1417
        %v1419 = vand.u32 %v1418, 4294901760
        %v1420 = vsub.f32 %v1418, %v1419
        %v1421 = vand.u32 %v1420, 4294901760
        %1422 = vmatmul.f32.gmra.mxu0 %v1421
        %v1423 = vpop.f32.mrf.mxu0
        %v1424 = vadd.f32 0.0, %v1423
        %1425 = vdwg.mxu0
        %1426 = vmatpush.msra.mxu0 0.0
        %1427 = vmatpush.msra.mxu0 0.0
        %1428 = vmatpush.msra.mxu0 0.0
        %1429 = vmatpush.msra.mxu0 0.0
        %1430 = vmatpush.msra.mxu0 0.0
        %1431 = vmatpush.msra.mxu0 0.0
        %1432 = vmatpush.msra.mxu0 0.0
        %1433 = vmatpush.msra.mxu0 0.0
        %1434 = vmatpush.msra.mxu0 0.0
        %1435 = vmatpush.msra.mxu0 0.0
        %1436 = vmatpush.msra.mxu0 0.0
        %1437 = vmatpush.msra.mxu0 0.0
        %1438 = vmatpush.msra.mxu0 0.0
        %1439 = vmatpush.msra.mxu0 0.0
        %v1440 = vand.u32 %v221, 4294901760
        %v1441 = vsub.f32 %v221, %v1440
        %v1442 = vand.u32 %v1441, 4294901760
        %v1443 = vsub.f32 %v1441, %v1442
        %v1444 = vand.u32 %v1443, 4294901760
        %1445 = vmatpush.msra.mxu0 %v1444
        %v1446 = vand.u32 %v219, 4294901760
        %v1447 = vsub.f32 %v219, %v1446
        %v1448 = vand.u32 %v1447, 4294901760
        %v1449 = vsub.f32 %v1447, %v1448
        %v1450 = vand.u32 %v1449, 4294901760
        %1451 = vmatpush.msra.mxu0 %v1450
        %v1452 = vand.u32 %v1386, 4294901760
        %1453 = vmatmul.f32.gmra.mxu0 %v1452
        %v1454 = vpop.f32.mrf.mxu0
        %v1455 = vadd.f32 %v1416, %v1454
        %v1456 = vand.u32 %v1389, 4294901760
        %1457 = vmatmul.f32.gmra.mxu0 %v1456
        %v1458 = vpop.f32.mrf.mxu0
        %v1459 = vadd.f32 %v1424, %v1458
        %1460 = vdwg.mxu0
        %1461 = vmatpush.msra.mxu0 0.0
        %1462 = vmatpush.msra.mxu0 0.0
        %1463 = vmatpush.msra.mxu0 0.0
        %1464 = vmatpush.msra.mxu0 0.0
        %1465 = vmatpush.msra.mxu0 0.0
        %1466 = vmatpush.msra.mxu0 0.0
        %1467 = vmatpush.msra.mxu0 0.0
        %1468 = vmatpush.msra.mxu0 0.0
        %1469 = vmatpush.msra.mxu0 0.0
        %1470 = vmatpush.msra.mxu0 0.0
        %1471 = vmatpush.msra.mxu0 0.0
        %1472 = vmatpush.msra.mxu0 0.0
        %1473 = vmatpush.msra.mxu0 0.0
        %1474 = vmatpush.msra.mxu0 0.0
        %v1475 = vand.u32 %v221, 4294901760
        %v1476 = vsub.f32 %v221, %v1475
        %1477 = vmatpush.msra.mxu0 %v1476
        %v1478 = vand.u32 %v219, 4294901760
        %v1479 = vsub.f32 %v219, %v1478
        %1480 = vmatpush.msra.mxu0 %v1479
        %v1481 = vand.u32 %v1386, 4294901760
        %v1482 = vsub.f32 %v1386, %v1481
        %1483 = vmatmul.f32.gmra.mxu0 %v1482
        %v1484 = vpop.f32.mrf.mxu0
        %v1485 = vadd.f32 %v1455, %v1484
        %v1486 = vand.u32 %v1389, 4294901760
        %v1487 = vsub.f32 %v1389, %v1486
        %1488 = vmatmul.f32.gmra.mxu0 %v1487
        %v1489 = vpop.f32.mrf.mxu0
        %v1490 = vadd.f32 %v1459, %v1489
        %1491 = vdwg.mxu0
        %1492 = vmatpush.msra.mxu0 0.0
        %1493 = vmatpush.msra.mxu0 0.0
        %1494 = vmatpush.msra.mxu0 0.0
        %1495 = vmatpush.msra.mxu0 0.0
        %1496 = vmatpush.msra.mxu0 0.0
        %1497 = vmatpush.msra.mxu0 0.0
        %1498 = vmatpush.msra.mxu0 0.0
        %1499 = vmatpush.msra.mxu0 0.0
        %1500 = vmatpush.msra.mxu0 0.0
        %1501 = vmatpush.msra.mxu0 0.0
        %1502 = vmatpush.msra.mxu0 0.0
        %1503 = vmatpush.msra.mxu0 0.0
        %1504 = vmatpush.msra.mxu0 0.0
        %1505 = vmatpush.msra.mxu0 0.0
        %v1506 = vand.u32 %v221, 4294901760
        %1507 = vmatpush.msra.mxu0 %v1506
        %v1508 = vand.u32 %v219, 4294901760
        %1509 = vmatpush.msra.mxu0 %v1508
        %v1510 = vand.u32 %v1386, 4294901760
        %v1511 = vsub.f32 %v1386, %v1510
        %v1512 = vand.u32 %v1511, 4294901760
        %1513 = vmatmul.f32.gmra.mxu0 %v1512
        %v1514 = vpop.f32.mrf.mxu0
        %v1515 = vadd.f32 %v1485, %v1514
        %v1516 = vand.u32 %v1389, 4294901760
        %v1517 = vsub.f32 %v1389, %v1516
        %v1518 = vand.u32 %v1517, 4294901760
        %1519 = vmatmul.f32.gmra.mxu0 %v1518
        %v1520 = vpop.f32.mrf.mxu0
        %v1521 = vadd.f32 %v1490, %v1520
        %1522 = vdwg.mxu0
        %1523 = vmatpush.msra.mxu0 0.0
        %1524 = vmatpush.msra.mxu0 0.0
        %1525 = vmatpush.msra.mxu0 0.0
        %1526 = vmatpush.msra.mxu0 0.0
        %1527 = vmatpush.msra.mxu0 0.0
        %1528 = vmatpush.msra.mxu0 0.0
        %1529 = vmatpush.msra.mxu0 0.0
        %1530 = vmatpush.msra.mxu0 0.0
        %1531 = vmatpush.msra.mxu0 0.0
        %1532 = vmatpush.msra.mxu0 0.0
        %1533 = vmatpush.msra.mxu0 0.0
        %1534 = vmatpush.msra.mxu0 0.0
        %1535 = vmatpush.msra.mxu0 0.0
        %1536 = vmatpush.msra.mxu0 0.0
        %v1537 = vand.u32 %v221, 4294901760
        %v1538 = vsub.f32 %v221, %v1537
        %v1539 = vand.u32 %v1538, 4294901760
        %1540 = vmatpush.msra.mxu0 %v1539
        %v1541 = vand.u32 %v219, 4294901760
        %v1542 = vsub.f32 %v219, %v1541
        %v1543 = vand.u32 %v1542, 4294901760
        %1544 = vmatpush.msra.mxu0 %v1543
        %v1545 = vand.u32 %v1386, 4294901760
        %1546 = vmatmul.f32.gmra.mxu0 %v1545
        %v1547 = vpop.f32.mrf.mxu0
        %v1548 = vadd.f32 %v1515, %v1547
        %v1549 = vand.u32 %v1389, 4294901760
        %1550 = vmatmul.f32.gmra.mxu0 %v1549
        %v1551 = vpop.f32.mrf.mxu0
        %v1552 = vadd.f32 %v1521, %v1551
        %1553 = vdwg.mxu0
        %1554 = vmatpush.msra.mxu0 0.0
        %1555 = vmatpush.msra.mxu0 0.0
        %1556 = vmatpush.msra.mxu0 0.0
        %1557 = vmatpush.msra.mxu0 0.0
        %1558 = vmatpush.msra.mxu0 0.0
        %1559 = vmatpush.msra.mxu0 0.0
        %1560 = vmatpush.msra.mxu0 0.0
        %1561 = vmatpush.msra.mxu0 0.0
        %1562 = vmatpush.msra.mxu0 0.0
        %1563 = vmatpush.msra.mxu0 0.0
        %1564 = vmatpush.msra.mxu0 0.0
        %1565 = vmatpush.msra.mxu0 0.0
        %1566 = vmatpush.msra.mxu0 0.0
        %1567 = vmatpush.msra.mxu0 0.0
        %v1568 = vand.u32 %v221, 4294901760
        %1569 = vmatpush.msra.mxu0 %v1568
        %v1570 = vand.u32 %v219, 4294901760
        %1571 = vmatpush.msra.mxu0 %v1570
        %v1572 = vand.u32 %v1386, 4294901760
        %1573 = vmatmul.f32.gmra.mxu0 %v1572
        %v1574 = vpop.f32.mrf.mxu0
        %v1575 = vadd.f32 %v1548, %v1574
        %v1576 = vand.u32 %v1389, 4294901760
        %1577 = vmatmul.f32.gmra.mxu0 %v1576
        %v1578 = vpop.f32.mrf.mxu0
        %v1579 = vadd.f32 %v1552, %v1578
        %1580 = vdwg.mxu0
        %1581 = vmatpush.msra.mxu0 0.0
        %1582 = vmatpush.msra.mxu0 0.0
        %1583 = vmatpush.msra.mxu0 0.0
        %1584 = vmatpush.msra.mxu0 0.0
        %1585 = vmatpush.msra.mxu0 0.0
        %1586 = vmatpush.msra.mxu0 0.0
        %1587 = vmatpush.msra.mxu0 0.0
        %1588 = vmatpush.msra.mxu0 0.0
        %1589 = vmatpush.msra.mxu0 0.0
        %1590 = vmatpush.msra.mxu0 0.0
        %1591 = vmatpush.msra.mxu0 0.0
        %1592 = vmatpush.msra.mxu0 0.0
        %1593 = vmatpush.msra.mxu0 0.0
        %1594 = vmatpush.msra.mxu0 0.0
        %v1595 = vand.u32 %v222, 4294901760
        %1596 = vmatpush.msra.mxu0 %v1595
        %v1597 = vand.u32 %v220, 4294901760
        %1598 = vmatpush.msra.mxu0 %v1597
        %v1599 = vand.u32 %v1386, 4294901760
        %v1600 = vsub.f32 %v1386, %v1599
        %v1601 = vand.u32 %v1600, 4294901760
        %v1602 = vsub.f32 %v1600, %v1601
        %v1603 = vand.u32 %v1602, 4294901760
        %1604 = vmatmul.f32.gmra.mxu0 %v1603
        %v1605 = vpop.f32.mrf.mxu0
        %v1606 = vadd.f32 0.0, %v1605
        %v1607 = vand.u32 %v1389, 4294901760
        %v1608 = vsub.f32 %v1389, %v1607
        %v1609 = vand.u32 %v1608, 4294901760
        %v1610 = vsub.f32 %v1608, %v1609
        %v1611 = vand.u32 %v1610, 4294901760
        %1612 = vmatmul.f32.gmra.mxu0 %v1611
        %v1613 = vpop.f32.mrf.mxu0
        %v1614 = vadd.f32 0.0, %v1613
        %1615 = vdwg.mxu0
        %1616 = vmatpush.msra.mxu0 0.0
        %1617 = vmatpush.msra.mxu0 0.0
        %1618 = vmatpush.msra.mxu0 0.0
        %1619 = vmatpush.msra.mxu0 0.0
        %1620 = vmatpush.msra.mxu0 0.0
        %1621 = vmatpush.msra.mxu0 0.0
        %1622 = vmatpush.msra.mxu0 0.0
        %1623 = vmatpush.msra.mxu0 0.0
        %1624 = vmatpush.msra.mxu0 0.0
        %1625 = vmatpush.msra.mxu0 0.0
        %1626 = vmatpush.msra.mxu0 0.0
        %1627 = vmatpush.msra.mxu0 0.0
        %1628 = vmatpush.msra.mxu0 0.0
        %1629 = vmatpush.msra.mxu0 0.0
        %v1630 = vand.u32 %v222, 4294901760
        %v1631 = vsub.f32 %v222, %v1630
        %v1632 = vand.u32 %v1631, 4294901760
        %v1633 = vsub.f32 %v1631, %v1632
        %v1634 = vand.u32 %v1633, 4294901760
        %1635 = vmatpush.msra.mxu0 %v1634
        %v1636 = vand.u32 %v220, 4294901760
        %v1637 = vsub.f32 %v220, %v1636
        %v1638 = vand.u32 %v1637, 4294901760
        %v1639 = vsub.f32 %v1637, %v1638
        %v1640 = vand.u32 %v1639, 4294901760
        %1641 = vmatpush.msra.mxu0 %v1640
        %v1642 = vand.u32 %v1386, 4294901760
        %1643 = vmatmul.f32.gmra.mxu0 %v1642
        %v1644 = vpop.f32.mrf.mxu0
        %v1645 = vadd.f32 %v1606, %v1644
        %v1646 = vand.u32 %v1389, 4294901760
        %1647 = vmatmul.f32.gmra.mxu0 %v1646
        %v1648 = vpop.f32.mrf.mxu0
        %v1649 = vadd.f32 %v1614, %v1648
        %1650 = vdwg.mxu0
        %1651 = vmatpush.msra.mxu0 0.0
        %1652 = vmatpush.msra.mxu0 0.0
        %1653 = vmatpush.msra.mxu0 0.0
        %1654 = vmatpush.msra.mxu0 0.0
        %1655 = vmatpush.msra.mxu0 0.0
        %1656 = vmatpush.msra.mxu0 0.0
        %1657 = vmatpush.msra.mxu0 0.0
        %1658 = vmatpush.msra.mxu0 0.0
        %1659 = vmatpush.msra.mxu0 0.0
        %1660 = vmatpush.msra.mxu0 0.0
        %1661 = vmatpush.msra.mxu0 0.0
        %1662 = vmatpush.msra.mxu0 0.0
        %1663 = vmatpush.msra.mxu0 0.0
        %1664 = vmatpush.msra.mxu0 0.0
        %v1665 = vand.u32 %v222, 4294901760
        %v1666 = vsub.f32 %v222, %v1665
        %1667 = vmatpush.msra.mxu0 %v1666
        %v1668 = vand.u32 %v220, 4294901760
        %v1669 = vsub.f32 %v220, %v1668
        %1670 = vmatpush.msra.mxu0 %v1669
        %v1671 = vand.u32 %v1386, 4294901760
        %v1672 = vsub.f32 %v1386, %v1671
        %1673 = vmatmul.f32.gmra.mxu0 %v1672
        %v1674 = vpop.f32.mrf.mxu0
        %v1675 = vadd.f32 %v1645, %v1674
        %v1676 = vand.u32 %v1389, 4294901760
        %v1677 = vsub.f32 %v1389, %v1676
        %1678 = vmatmul.f32.gmra.mxu0 %v1677
        %v1679 = vpop.f32.mrf.mxu0
        %v1680 = vadd.f32 %v1649, %v1679
        %1681 = vdwg.mxu0
        %1682 = vmatpush.msra.mxu0 0.0
        %1683 = vmatpush.msra.mxu0 0.0
        %1684 = vmatpush.msra.mxu0 0.0
        %1685 = vmatpush.msra.mxu0 0.0
        %1686 = vmatpush.msra.mxu0 0.0
        %1687 = vmatpush.msra.mxu0 0.0
        %1688 = vmatpush.msra.mxu0 0.0
        %1689 = vmatpush.msra.mxu0 0.0
        %1690 = vmatpush.msra.mxu0 0.0
        %1691 = vmatpush.msra.mxu0 0.0
        %1692 = vmatpush.msra.mxu0 0.0
        %1693 = vmatpush.msra.mxu0 0.0
        %1694 = vmatpush.msra.mxu0 0.0
        %1695 = vmatpush.msra.mxu0 0.0
        %v1696 = vand.u32 %v222, 4294901760
        %1697 = vmatpush.msra.mxu0 %v1696
        %v1698 = vand.u32 %v220, 4294901760
        %1699 = vmatpush.msra.mxu0 %v1698
        %v1700 = vand.u32 %v1386, 4294901760
        %v1701 = vsub.f32 %v1386, %v1700
        %v1702 = vand.u32 %v1701, 4294901760
        %1703 = vmatmul.f32.gmra.mxu0 %v1702
        %v1704 = vpop.f32.mrf.mxu0
        %v1705 = vadd.f32 %v1675, %v1704
        %v1706 = vand.u32 %v1389, 4294901760
        %v1707 = vsub.f32 %v1389, %v1706
        %v1708 = vand.u32 %v1707, 4294901760
        %1709 = vmatmul.f32.gmra.mxu0 %v1708
        %v1710 = vpop.f32.mrf.mxu0
        %v1711 = vadd.f32 %v1680, %v1710
        %1712 = vdwg.mxu0
        %1713 = vmatpush.msra.mxu0 0.0
        %1714 = vmatpush.msra.mxu0 0.0
        %1715 = vmatpush.msra.mxu0 0.0
        %1716 = vmatpush.msra.mxu0 0.0
        %1717 = vmatpush.msra.mxu0 0.0
        %1718 = vmatpush.msra.mxu0 0.0
        %1719 = vmatpush.msra.mxu0 0.0
        %1720 = vmatpush.msra.mxu0 0.0
        %1721 = vmatpush.msra.mxu0 0.0
        %1722 = vmatpush.msra.mxu0 0.0
        %1723 = vmatpush.msra.mxu0 0.0
        %1724 = vmatpush.msra.mxu0 0.0
        %1725 = vmatpush.msra.mxu0 0.0
        %1726 = vmatpush.msra.mxu0 0.0
        %v1727 = vand.u32 %v222, 4294901760
        %v1728 = vsub.f32 %v222, %v1727
        %v1729 = vand.u32 %v1728, 4294901760
        %1730 = vmatpush.msra.mxu0 %v1729
        %v1731 = vand.u32 %v220, 4294901760
        %v1732 = vsub.f32 %v220, %v1731
        %v1733 = vand.u32 %v1732, 4294901760
        %1734 = vmatpush.msra.mxu0 %v1733
        %v1735 = vand.u32 %v1386, 4294901760
        %1736 = vmatmul.f32.gmra.mxu0 %v1735
        %v1737 = vpop.f32.mrf.mxu0
        %v1738 = vadd.f32 %v1705, %v1737
        %v1739 = vand.u32 %v1389, 4294901760
        %1740 = vmatmul.f32.gmra.mxu0 %v1739
        %v1741 = vpop.f32.mrf.mxu0
        %v1742 = vadd.f32 %v1711, %v1741
        %1743 = vdwg.mxu0
        %1744 = vmatpush.msra.mxu0 0.0
        %1745 = vmatpush.msra.mxu0 0.0
        %1746 = vmatpush.msra.mxu0 0.0
        %1747 = vmatpush.msra.mxu0 0.0
        %1748 = vmatpush.msra.mxu0 0.0
        %1749 = vmatpush.msra.mxu0 0.0
        %1750 = vmatpush.msra.mxu0 0.0
        %1751 = vmatpush.msra.mxu0 0.0
        %1752 = vmatpush.msra.mxu0 0.0
        %1753 = vmatpush.msra.mxu0 0.0
        %1754 = vmatpush.msra.mxu0 0.0
        %1755 = vmatpush.msra.mxu0 0.0
        %1756 = vmatpush.msra.mxu0 0.0
        %1757 = vmatpush.msra.mxu0 0.0
        %v1758 = vand.u32 %v222, 4294901760
        %1759 = vmatpush.msra.mxu0 %v1758
        %v1760 = vand.u32 %v220, 4294901760
        %1761 = vmatpush.msra.mxu0 %v1760
        %v1762 = vand.u32 %v1386, 4294901760
        %1763 = vmatmul.f32.gmra.mxu0 %v1762
        %v1764 = vpop.f32.mrf.mxu0
        %v1765 = vadd.f32 %v1738, %v1764
        %v1766 = vand.u32 %v1389, 4294901760
        %1767 = vmatmul.f32.gmra.mxu0 %v1766
        %v1768 = vpop.f32.mrf.mxu0
        %v1769 = vadd.f32 %v1742, %v1768
        %1770 = vdwg.mxu0
        %1771 = vmatpush.msra.mxu0 0.0
        %1772 = vmatpush.msra.mxu0 0.0
        %1773 = vmatpush.msra.mxu0 0.0
        %1774 = vmatpush.msra.mxu0 0.0
        %1775 = vmatpush.msra.mxu0 0.0
        %1776 = vmatpush.msra.mxu0 0.0
        %1777 = vmatpush.msra.mxu0 0.0
        %1778 = vmatpush.msra.mxu0 0.0
        %1779 = vmatpush.msra.mxu0 0.0
        %1780 = vmatpush.msra.mxu0 0.0
        %1781 = vmatpush.msra.mxu0 0.0
        %1782 = vmatpush.msra.mxu0 0.0
        %1783 = vmatpush.msra.mxu0 0.0
        %1784 = vmatpush.msra.mxu0 0.0
        %v1785 = vand.u32 %v226, 4294901760
        %1786 = vmatpush.msra.mxu0 %v1785
        %v1787 = vand.u32 %v224, 4294901760
        %1788 = vmatpush.msra.mxu0 %v1787
        %v1789 = vand.u32 %v1386, 4294901760
        %v1790 = vsub.f32 %v1386, %v1789
        %v1791 = vand.u32 %v1790, 4294901760
        %v1792 = vsub.f32 %v1790, %v1791
        %v1793 = vand.u32 %v1792, 4294901760
        %1794 = vmatmul.f32.gmra.mxu0 %v1793
        %v1795 = vpop.f32.mrf.mxu0
        %v1796 = vadd.f32 0.0, %v1795
        %v1797 = vand.u32 %v1389, 4294901760
        %v1798 = vsub.f32 %v1389, %v1797
        %v1799 = vand.u32 %v1798, 4294901760
        %v1800 = vsub.f32 %v1798, %v1799
        %v1801 = vand.u32 %v1800, 4294901760
        %1802 = vmatmul.f32.gmra.mxu0 %v1801
        %v1803 = vpop.f32.mrf.mxu0
        %v1804 = vadd.f32 0.0, %v1803
        %1805 = vdwg.mxu0
        %1806 = vmatpush.msra.mxu0 0.0
        %1807 = vmatpush.msra.mxu0 0.0
        %1808 = vmatpush.msra.mxu0 0.0
        %1809 = vmatpush.msra.mxu0 0.0
        %1810 = vmatpush.msra.mxu0 0.0
        %1811 = vmatpush.msra.mxu0 0.0
        %1812 = vmatpush.msra.mxu0 0.0
        %1813 = vmatpush.msra.mxu0 0.0
        %1814 = vmatpush.msra.mxu0 0.0
        %1815 = vmatpush.msra.mxu0 0.0
        %1816 = vmatpush.msra.mxu0 0.0
        %1817 = vmatpush.msra.mxu0 0.0
        %1818 = vmatpush.msra.mxu0 0.0
        %1819 = vmatpush.msra.mxu0 0.0
        %v1820 = vand.u32 %v226, 4294901760
        %v1821 = vsub.f32 %v226, %v1820
        %v1822 = vand.u32 %v1821, 4294901760
        %v1823 = vsub.f32 %v1821, %v1822
        %v1824 = vand.u32 %v1823, 4294901760
        %1825 = vmatpush.msra.mxu0 %v1824
        %v1826 = vand.u32 %v224, 4294901760
        %v1827 = vsub.f32 %v224, %v1826
        %v1828 = vand.u32 %v1827, 4294901760
        %v1829 = vsub.f32 %v1827, %v1828
        %v1830 = vand.u32 %v1829, 4294901760
        %1831 = vmatpush.msra.mxu0 %v1830
        %v1832 = vand.u32 %v1386, 4294901760
        %1833 = vmatmul.f32.gmra.mxu0 %v1832
        %v1834 = vpop.f32.mrf.mxu0
        %v1835 = vadd.f32 %v1796, %v1834
        %v1836 = vand.u32 %v1389, 4294901760
        %1837 = vmatmul.f32.gmra.mxu0 %v1836
        %v1838 = vpop.f32.mrf.mxu0
        %v1839 = vadd.f32 %v1804, %v1838
        %1840 = vdwg.mxu0
        %1841 = vmatpush.msra.mxu0 0.0
        %1842 = vmatpush.msra.mxu0 0.0
        %1843 = vmatpush.msra.mxu0 0.0
        %1844 = vmatpush.msra.mxu0 0.0
        %1845 = vmatpush.msra.mxu0 0.0
        %1846 = vmatpush.msra.mxu0 0.0
        %1847 = vmatpush.msra.mxu0 0.0
        %1848 = vmatpush.msra.mxu0 0.0
        %1849 = vmatpush.msra.mxu0 0.0
        %1850 = vmatpush.msra.mxu0 0.0
        %1851 = vmatpush.msra.mxu0 0.0
        %1852 = vmatpush.msra.mxu0 0.0
        %1853 = vmatpush.msra.mxu0 0.0
        %1854 = vmatpush.msra.mxu0 0.0
        %v1855 = vand.u32 %v226, 4294901760
        %v1856 = vsub.f32 %v226, %v1855
        %1857 = vmatpush.msra.mxu0 %v1856
        %v1858 = vand.u32 %v224, 4294901760
        %v1859 = vsub.f32 %v224, %v1858
        %1860 = vmatpush.msra.mxu0 %v1859
        %v1861 = vand.u32 %v1386, 4294901760
        %v1862 = vsub.f32 %v1386, %v1861
        %1863 = vmatmul.f32.gmra.mxu0 %v1862
        %v1864 = vpop.f32.mrf.mxu0
        %v1865 = vadd.f32 %v1835, %v1864
        %v1866 = vand.u32 %v1389, 4294901760
        %v1867 = vsub.f32 %v1389, %v1866
        %1868 = vmatmul.f32.gmra.mxu0 %v1867
        %v1869 = vpop.f32.mrf.mxu0
        %v1870 = vadd.f32 %v1839, %v1869
        %1871 = vdwg.mxu0
        %1872 = vmatpush.msra.mxu0 0.0
        %1873 = vmatpush.msra.mxu0 0.0
        %1874 = vmatpush.msra.mxu0 0.0
        %1875 = vmatpush.msra.mxu0 0.0
        %1876 = vmatpush.msra.mxu0 0.0
        %1877 = vmatpush.msra.mxu0 0.0
        %1878 = vmatpush.msra.mxu0 0.0
        %1879 = vmatpush.msra.mxu0 0.0
        %1880 = vmatpush.msra.mxu0 0.0
        %1881 = vmatpush.msra.mxu0 0.0
        %1882 = vmatpush.msra.mxu0 0.0
        %1883 = vmatpush.msra.mxu0 0.0
        %1884 = vmatpush.msra.mxu0 0.0
        %1885 = vmatpush.msra.mxu0 0.0
        %v1886 = vand.u32 %v226, 4294901760
        %1887 = vmatpush.msra.mxu0 %v1886
        %v1888 = vand.u32 %v224, 4294901760
        %1889 = vmatpush.msra.mxu0 %v1888
        %v1890 = vand.u32 %v1386, 4294901760
        %v1891 = vsub.f32 %v1386, %v1890
        %v1892 = vand.u32 %v1891, 4294901760
        %1893 = vmatmul.f32.gmra.mxu0 %v1892
        %v1894 = vpop.f32.mrf.mxu0
        %v1895 = vadd.f32 %v1865, %v1894
        %v1896 = vand.u32 %v1389, 4294901760
        %v1897 = vsub.f32 %v1389, %v1896
        %v1898 = vand.u32 %v1897, 4294901760
        %1899 = vmatmul.f32.gmra.mxu0 %v1898
        %v1900 = vpop.f32.mrf.mxu0
        %v1901 = vadd.f32 %v1870, %v1900
        %1902 = vdwg.mxu0
        %1903 = vmatpush.msra.mxu0 0.0
        %1904 = vmatpush.msra.mxu0 0.0
        %1905 = vmatpush.msra.mxu0 0.0
        %1906 = vmatpush.msra.mxu0 0.0
        %1907 = vmatpush.msra.mxu0 0.0
        %1908 = vmatpush.msra.mxu0 0.0
        %1909 = vmatpush.msra.mxu0 0.0
        %1910 = vmatpush.msra.mxu0 0.0
        %1911 = vmatpush.msra.mxu0 0.0
        %1912 = vmatpush.msra.mxu0 0.0
        %1913 = vmatpush.msra.mxu0 0.0
        %1914 = vmatpush.msra.mxu0 0.0
        %1915 = vmatpush.msra.mxu0 0.0
        %1916 = vmatpush.msra.mxu0 0.0
        %v1917 = vand.u32 %v226, 4294901760
        %v1918 = vsub.f32 %v226, %v1917
        %v1919 = vand.u32 %v1918, 4294901760
        %1920 = vmatpush.msra.mxu0 %v1919
        %v1921 = vand.u32 %v224, 4294901760
        %v1922 = vsub.f32 %v224, %v1921
        %v1923 = vand.u32 %v1922, 4294901760
        %1924 = vmatpush.msra.mxu0 %v1923
        %v1925 = vand.u32 %v1386, 4294901760
        %1926 = vmatmul.f32.gmra.mxu0 %v1925
        %v1927 = vpop.f32.mrf.mxu0
        %v1928 = vadd.f32 %v1895, %v1927
        %v1929 = vand.u32 %v1389, 4294901760
        %1930 = vmatmul.f32.gmra.mxu0 %v1929
        %v1931 = vpop.f32.mrf.mxu0
        %v1932 = vadd.f32 %v1901, %v1931
        %1933 = vdwg.mxu0
        %1934 = vmatpush.msra.mxu0 0.0
        %1935 = vmatpush.msra.mxu0 0.0
        %1936 = vmatpush.msra.mxu0 0.0
        %1937 = vmatpush.msra.mxu0 0.0
        %1938 = vmatpush.msra.mxu0 0.0
        %1939 = vmatpush.msra.mxu0 0.0
        %1940 = vmatpush.msra.mxu0 0.0
        %1941 = vmatpush.msra.mxu0 0.0
        %1942 = vmatpush.msra.mxu0 0.0
        %1943 = vmatpush.msra.mxu0 0.0
        %1944 = vmatpush.msra.mxu0 0.0
        %1945 = vmatpush.msra.mxu0 0.0
        %1946 = vmatpush.msra.mxu0 0.0
        %1947 = vmatpush.msra.mxu0 0.0
        %v1948 = vand.u32 %v226, 4294901760
        %1949 = vmatpush.msra.mxu0 %v1948
        %v1950 = vand.u32 %v224, 4294901760
        %1951 = vmatpush.msra.mxu0 %v1950
        %v1952 = vand.u32 %v1386, 4294901760
        %1953 = vmatmul.f32.gmra.mxu0 %v1952
        %v1954 = vpop.f32.mrf.mxu0
        %v1955 = vadd.f32 %v1928, %v1954
        %v1956 = vand.u32 %v1389, 4294901760
        %1957 = vmatmul.f32.gmra.mxu0 %v1956
        %v1958 = vpop.f32.mrf.mxu0
        %v1959 = vadd.f32 %v1932, %v1958
        %1960 = vdwg.mxu0
        %1961 = vmatpush.msra.mxu0 0.0
        %1962 = vmatpush.msra.mxu0 0.0
        %1963 = vmatpush.msra.mxu0 0.0
        %1964 = vmatpush.msra.mxu0 0.0
        %1965 = vmatpush.msra.mxu0 0.0
        %1966 = vmatpush.msra.mxu0 0.0
        %1967 = vmatpush.msra.mxu0 0.0
        %1968 = vmatpush.msra.mxu0 0.0
        %1969 = vmatpush.msra.mxu0 0.0
        %1970 = vmatpush.msra.mxu0 0.0
        %1971 = vmatpush.msra.mxu0 0.0
        %1972 = vmatpush.msra.mxu0 0.0
        %1973 = vmatpush.msra.mxu0 0.0
        %1974 = vmatpush.msra.mxu0 0.0
        %v1975 = vand.u32 %v227, 4294901760
        %1976 = vmatpush.msra.mxu0 %v1975
        %v1977 = vand.u32 %v225, 4294901760
        %1978 = vmatpush.msra.mxu0 %v1977
        %v1979 = vand.u32 %v1386, 4294901760
        %v1980 = vsub.f32 %v1386, %v1979
        %v1981 = vand.u32 %v1980, 4294901760
        %v1982 = vsub.f32 %v1980, %v1981
        %v1983 = vand.u32 %v1982, 4294901760
        %1984 = vmatmul.f32.gmra.mxu0 %v1983
        %v1985 = vpop.f32.mrf.mxu0
        %v1986 = vadd.f32 0.0, %v1985
        %v1987 = vand.u32 %v1389, 4294901760
        %v1988 = vsub.f32 %v1389, %v1987
        %v1989 = vand.u32 %v1988, 4294901760
        %v1990 = vsub.f32 %v1988, %v1989
        %v1991 = vand.u32 %v1990, 4294901760
        %1992 = vmatmul.f32.gmra.mxu0 %v1991
        %v1993 = vpop.f32.mrf.mxu0
        %v1994 = vadd.f32 0.0, %v1993
        %1995 = vdwg.mxu0
        %1996 = vmatpush.msra.mxu0 0.0
        %1997 = vmatpush.msra.mxu0 0.0
        %1998 = vmatpush.msra.mxu0 0.0
        %1999 = vmatpush.msra.mxu0 0.0
        %2000 = vmatpush.msra.mxu0 0.0
        %2001 = vmatpush.msra.mxu0 0.0
        %2002 = vmatpush.msra.mxu0 0.0
        %2003 = vmatpush.msra.mxu0 0.0
        %2004 = vmatpush.msra.mxu0 0.0
        %2005 = vmatpush.msra.mxu0 0.0
        %2006 = vmatpush.msra.mxu0 0.0
        %2007 = vmatpush.msra.mxu0 0.0
        %2008 = vmatpush.msra.mxu0 0.0
        %2009 = vmatpush.msra.mxu0 0.0
        %v2010 = vand.u32 %v227, 4294901760
        %v2011 = vsub.f32 %v227, %v2010
        %v2012 = vand.u32 %v2011, 4294901760
        %v2013 = vsub.f32 %v2011, %v2012
        %v2014 = vand.u32 %v2013, 4294901760
        %2015 = vmatpush.msra.mxu0 %v2014
        %v2016 = vand.u32 %v225, 4294901760
        %v2017 = vsub.f32 %v225, %v2016
        %v2018 = vand.u32 %v2017, 4294901760
        %v2019 = vsub.f32 %v2017, %v2018
        %v2020 = vand.u32 %v2019, 4294901760
        %2021 = vmatpush.msra.mxu0 %v2020
        %v2022 = vand.u32 %v1386, 4294901760
        %2023 = vmatmul.f32.gmra.mxu0 %v2022
        %v2024 = vpop.f32.mrf.mxu0
        %v2025 = vadd.f32 %v1986, %v2024
        %v2026 = vand.u32 %v1389, 4294901760
        %2027 = vmatmul.f32.gmra.mxu0 %v2026
        %v2028 = vpop.f32.mrf.mxu0
        %v2029 = vadd.f32 %v1994, %v2028
        %2030 = vdwg.mxu0
        %2031 = vmatpush.msra.mxu0 0.0
        %2032 = vmatpush.msra.mxu0 0.0
        %2033 = vmatpush.msra.mxu0 0.0
        %2034 = vmatpush.msra.mxu0 0.0
        %2035 = vmatpush.msra.mxu0 0.0
        %2036 = vmatpush.msra.mxu0 0.0
        %2037 = vmatpush.msra.mxu0 0.0
        %2038 = vmatpush.msra.mxu0 0.0
        %2039 = vmatpush.msra.mxu0 0.0
        %2040 = vmatpush.msra.mxu0 0.0
        %2041 = vmatpush.msra.mxu0 0.0
        %2042 = vmatpush.msra.mxu0 0.0
        %2043 = vmatpush.msra.mxu0 0.0
        %2044 = vmatpush.msra.mxu0 0.0
        %v2045 = vand.u32 %v227, 4294901760
        %v2046 = vsub.f32 %v227, %v2045
        %2047 = vmatpush.msra.mxu0 %v2046
        %v2048 = vand.u32 %v225, 4294901760
        %v2049 = vsub.f32 %v225, %v2048
        %2050 = vmatpush.msra.mxu0 %v2049
        %v2051 = vand.u32 %v1386, 4294901760
        %v2052 = vsub.f32 %v1386, %v2051
        %2053 = vmatmul.f32.gmra.mxu0 %v2052
        %v2054 = vpop.f32.mrf.mxu0
        %v2055 = vadd.f32 %v2025, %v2054
        %v2056 = vand.u32 %v1389, 4294901760
        %v2057 = vsub.f32 %v1389, %v2056
        %2058 = vmatmul.f32.gmra.mxu0 %v2057
        %v2059 = vpop.f32.mrf.mxu0
        %v2060 = vadd.f32 %v2029, %v2059
        %2061 = vdwg.mxu0
        %2062 = vmatpush.msra.mxu0 0.0
        %2063 = vmatpush.msra.mxu0 0.0
        %2064 = vmatpush.msra.mxu0 0.0
        %2065 = vmatpush.msra.mxu0 0.0
        %2066 = vmatpush.msra.mxu0 0.0
        %2067 = vmatpush.msra.mxu0 0.0
        %2068 = vmatpush.msra.mxu0 0.0
        %2069 = vmatpush.msra.mxu0 0.0
        %2070 = vmatpush.msra.mxu0 0.0
        %2071 = vmatpush.msra.mxu0 0.0
        %2072 = vmatpush.msra.mxu0 0.0
        %2073 = vmatpush.msra.mxu0 0.0
        %2074 = vmatpush.msra.mxu0 0.0
        %2075 = vmatpush.msra.mxu0 0.0
        %v2076 = vand.u32 %v227, 4294901760
        %2077 = vmatpush.msra.mxu0 %v2076
        %v2078 = vand.u32 %v225, 4294901760
        %2079 = vmatpush.msra.mxu0 %v2078
        %v2080 = vand.u32 %v1386, 4294901760
        %v2081 = vsub.f32 %v1386, %v2080
        %v2082 = vand.u32 %v2081, 4294901760
        %2083 = vmatmul.f32.gmra.mxu0 %v2082
        %v2084 = vpop.f32.mrf.mxu0
        %v2085 = vadd.f32 %v2055, %v2084
        %v2086 = vand.u32 %v1389, 4294901760
        %v2087 = vsub.f32 %v1389, %v2086
        %v2088 = vand.u32 %v2087, 4294901760
        %2089 = vmatmul.f32.gmra.mxu0 %v2088
        %v2090 = vpop.f32.mrf.mxu0
        %v2091 = vadd.f32 %v2060, %v2090
        %2092 = vdwg.mxu0
        %2093 = vmatpush.msra.mxu0 0.0
        %2094 = vmatpush.msra.mxu0 0.0
        %2095 = vmatpush.msra.mxu0 0.0
        %2096 = vmatpush.msra.mxu0 0.0
        %2097 = vmatpush.msra.mxu0 0.0
        %2098 = vmatpush.msra.mxu0 0.0
        %2099 = vmatpush.msra.mxu0 0.0
        %2100 = vmatpush.msra.mxu0 0.0
        %2101 = vmatpush.msra.mxu0 0.0
        %2102 = vmatpush.msra.mxu0 0.0
        %2103 = vmatpush.msra.mxu0 0.0
        %2104 = vmatpush.msra.mxu0 0.0
        %2105 = vmatpush.msra.mxu0 0.0
        %2106 = vmatpush.msra.mxu0 0.0
        %v2107 = vand.u32 %v227, 4294901760
        %v2108 = vsub.f32 %v227, %v2107
        %v2109 = vand.u32 %v2108, 4294901760
        %2110 = vmatpush.msra.mxu0 %v2109
        %v2111 = vand.u32 %v225, 4294901760
        %v2112 = vsub.f32 %v225, %v2111
        %v2113 = vand.u32 %v2112, 4294901760
        %2114 = vmatpush.msra.mxu0 %v2113
        %v2115 = vand.u32 %v1386, 4294901760
        %2116 = vmatmul.f32.gmra.mxu0 %v2115
        %v2117 = vpop.f32.mrf.mxu0
        %v2118 = vadd.f32 %v2085, %v2117
        %v2119 = vand.u32 %v1389, 4294901760
        %2120 = vmatmul.f32.gmra.mxu0 %v2119
        %v2121 = vpop.f32.mrf.mxu0
        %v2122 = vadd.f32 %v2091, %v2121
        %2123 = vdwg.mxu0
        %2124 = vmatpush.msra.mxu0 0.0
        %2125 = vmatpush.msra.mxu0 0.0
        %2126 = vmatpush.msra.mxu0 0.0
        %2127 = vmatpush.msra.mxu0 0.0
        %2128 = vmatpush.msra.mxu0 0.0
        %2129 = vmatpush.msra.mxu0 0.0
        %2130 = vmatpush.msra.mxu0 0.0
        %2131 = vmatpush.msra.mxu0 0.0
        %2132 = vmatpush.msra.mxu0 0.0
        %2133 = vmatpush.msra.mxu0 0.0
        %2134 = vmatpush.msra.mxu0 0.0
        %2135 = vmatpush.msra.mxu0 0.0
        %2136 = vmatpush.msra.mxu0 0.0
        %2137 = vmatpush.msra.mxu0 0.0
        %v2138 = vand.u32 %v227, 4294901760
        %2139 = vmatpush.msra.mxu0 %v2138
        %v2140 = vand.u32 %v225, 4294901760
        %2141 = vmatpush.msra.mxu0 %v2140
        %v2142 = vand.u32 %v1386, 4294901760
        %2143 = vmatmul.f32.gmra.mxu0 %v2142
        %v2144 = vpop.f32.mrf.mxu0
        %v2145 = vadd.f32 %v2118, %v2144
        %v2146 = vand.u32 %v1389, 4294901760
        %2147 = vmatmul.f32.gmra.mxu0 %v2146
        %v2148 = vpop.f32.mrf.mxu0
        %v2149 = vadd.f32 %v2122, %v2148
        %2150 = vdwg.mxu0
        %2151 = vmatpush.msra.mxu0 0.0
        %2152 = vmatpush.msra.mxu0 0.0
        %2153 = vmatpush.msra.mxu0 0.0
        %2154 = vmatpush.msra.mxu0 0.0
        %2155 = vmatpush.msra.mxu0 0.0
        %2156 = vmatpush.msra.mxu0 0.0
        %2157 = vmatpush.msra.mxu0 0.0
        %2158 = vmatpush.msra.mxu0 0.0
        %2159 = vmatpush.msra.mxu0 0.0
        %2160 = vmatpush.msra.mxu0 0.0
        %2161 = vmatpush.msra.mxu0 0.0
        %2162 = vmatpush.msra.mxu0 0.0
        %2163 = vmatpush.msra.mxu0 0.0
        %2164 = vmatpush.msra.mxu0 0.0
        %v2165 = vand.u32 %v231, 4294901760
        %2166 = vmatpush.msra.mxu0 %v2165
        %v2167 = vand.u32 %v229, 4294901760
        %2168 = vmatpush.msra.mxu0 %v2167
        %v2169 = vand.u32 %v1386, 4294901760
        %v2170 = vsub.f32 %v1386, %v2169
        %v2171 = vand.u32 %v2170, 4294901760
        %v2172 = vsub.f32 %v2170, %v2171
        %v2173 = vand.u32 %v2172, 4294901760
        %2174 = vmatmul.f32.gmra.mxu0 %v2173
        %v2175 = vpop.f32.mrf.mxu0
        %v2176 = vadd.f32 0.0, %v2175
        %v2177 = vand.u32 %v1389, 4294901760
        %v2178 = vsub.f32 %v1389, %v2177
        %v2179 = vand.u32 %v2178, 4294901760
        %v2180 = vsub.f32 %v2178, %v2179
        %v2181 = vand.u32 %v2180, 4294901760
        %2182 = vmatmul.f32.gmra.mxu0 %v2181
        %v2183 = vpop.f32.mrf.mxu0
        %v2184 = vadd.f32 0.0, %v2183
        %2185 = vdwg.mxu0
        %2186 = vmatpush.msra.mxu0 0.0
        %2187 = vmatpush.msra.mxu0 0.0
        %2188 = vmatpush.msra.mxu0 0.0
        %2189 = vmatpush.msra.mxu0 0.0
        %2190 = vmatpush.msra.mxu0 0.0
        %2191 = vmatpush.msra.mxu0 0.0
        %2192 = vmatpush.msra.mxu0 0.0
        %2193 = vmatpush.msra.mxu0 0.0
        %2194 = vmatpush.msra.mxu0 0.0
        %2195 = vmatpush.msra.mxu0 0.0
        %2196 = vmatpush.msra.mxu0 0.0
        %2197 = vmatpush.msra.mxu0 0.0
        %2198 = vmatpush.msra.mxu0 0.0
        %2199 = vmatpush.msra.mxu0 0.0
        %v2200 = vand.u32 %v231, 4294901760
        %v2201 = vsub.f32 %v231, %v2200
        %v2202 = vand.u32 %v2201, 4294901760
        %v2203 = vsub.f32 %v2201, %v2202
        %v2204 = vand.u32 %v2203, 4294901760
        %2205 = vmatpush.msra.mxu0 %v2204
        %v2206 = vand.u32 %v229, 4294901760
        %v2207 = vsub.f32 %v229, %v2206
        %v2208 = vand.u32 %v2207, 4294901760
        %v2209 = vsub.f32 %v2207, %v2208
        %v2210 = vand.u32 %v2209, 4294901760
        %2211 = vmatpush.msra.mxu0 %v2210
        %v2212 = vand.u32 %v1386, 4294901760
        %2213 = vmatmul.f32.gmra.mxu0 %v2212
        %v2214 = vpop.f32.mrf.mxu0
        %v2215 = vadd.f32 %v2176, %v2214
        %v2216 = vand.u32 %v1389, 4294901760
        %2217 = vmatmul.f32.gmra.mxu0 %v2216
        %v2218 = vpop.f32.mrf.mxu0
        %v2219 = vadd.f32 %v2184, %v2218
        %2220 = vdwg.mxu0
        %2221 = vmatpush.msra.mxu0 0.0
        %2222 = vmatpush.msra.mxu0 0.0
        %2223 = vmatpush.msra.mxu0 0.0
        %2224 = vmatpush.msra.mxu0 0.0
        %2225 = vmatpush.msra.mxu0 0.0
        %2226 = vmatpush.msra.mxu0 0.0
        %2227 = vmatpush.msra.mxu0 0.0
        %2228 = vmatpush.msra.mxu0 0.0
        %2229 = vmatpush.msra.mxu0 0.0
        %2230 = vmatpush.msra.mxu0 0.0
        %2231 = vmatpush.msra.mxu0 0.0
        %2232 = vmatpush.msra.mxu0 0.0
        %2233 = vmatpush.msra.mxu0 0.0
        %2234 = vmatpush.msra.mxu0 0.0
        %v2235 = vand.u32 %v231, 4294901760
        %v2236 = vsub.f32 %v231, %v2235
        %2237 = vmatpush.msra.mxu0 %v2236
        %v2238 = vand.u32 %v229, 4294901760
        %v2239 = vsub.f32 %v229, %v2238
        %2240 = vmatpush.msra.mxu0 %v2239
        %v2241 = vand.u32 %v1386, 4294901760
        %v2242 = vsub.f32 %v1386, %v2241
        %2243 = vmatmul.f32.gmra.mxu0 %v2242
        %v2244 = vpop.f32.mrf.mxu0
        %v2245 = vadd.f32 %v2215, %v2244
        %v2246 = vand.u32 %v1389, 4294901760
        %v2247 = vsub.f32 %v1389, %v2246
        %2248 = vmatmul.f32.gmra.mxu0 %v2247
        %v2249 = vpop.f32.mrf.mxu0
        %v2250 = vadd.f32 %v2219, %v2249
        %2251 = vdwg.mxu0
        %2252 = vmatpush.msra.mxu0 0.0
        %2253 = vmatpush.msra.mxu0 0.0
        %2254 = vmatpush.msra.mxu0 0.0
        %2255 = vmatpush.msra.mxu0 0.0
        %2256 = vmatpush.msra.mxu0 0.0
        %2257 = vmatpush.msra.mxu0 0.0
        %2258 = vmatpush.msra.mxu0 0.0
        %2259 = vmatpush.msra.mxu0 0.0
        %2260 = vmatpush.msra.mxu0 0.0
        %2261 = vmatpush.msra.mxu0 0.0
        %2262 = vmatpush.msra.mxu0 0.0
        %2263 = vmatpush.msra.mxu0 0.0
        %2264 = vmatpush.msra.mxu0 0.0
        %2265 = vmatpush.msra.mxu0 0.0
        %v2266 = vand.u32 %v231, 4294901760
        %2267 = vmatpush.msra.mxu0 %v2266
        %v2268 = vand.u32 %v229, 4294901760
        %2269 = vmatpush.msra.mxu0 %v2268
        %v2270 = vand.u32 %v1386, 4294901760
        %v2271 = vsub.f32 %v1386, %v2270
        %v2272 = vand.u32 %v2271, 4294901760
        %2273 = vmatmul.f32.gmra.mxu0 %v2272
        %v2274 = vpop.f32.mrf.mxu0
        %v2275 = vadd.f32 %v2245, %v2274
        %v2276 = vand.u32 %v1389, 4294901760
        %v2277 = vsub.f32 %v1389, %v2276
        %v2278 = vand.u32 %v2277, 4294901760
        %2279 = vmatmul.f32.gmra.mxu0 %v2278
        %v2280 = vpop.f32.mrf.mxu0
        %v2281 = vadd.f32 %v2250, %v2280
        %2282 = vdwg.mxu0
        %2283 = vmatpush.msra.mxu0 0.0
        %2284 = vmatpush.msra.mxu0 0.0
        %2285 = vmatpush.msra.mxu0 0.0
        %2286 = vmatpush.msra.mxu0 0.0
        %2287 = vmatpush.msra.mxu0 0.0
        %2288 = vmatpush.msra.mxu0 0.0
        %2289 = vmatpush.msra.mxu0 0.0
        %2290 = vmatpush.msra.mxu0 0.0
        %2291 = vmatpush.msra.mxu0 0.0
        %2292 = vmatpush.msra.mxu0 0.0
        %2293 = vmatpush.msra.mxu0 0.0
        %2294 = vmatpush.msra.mxu0 0.0
        %2295 = vmatpush.msra.mxu0 0.0
        %2296 = vmatpush.msra.mxu0 0.0
        %v2297 = vand.u32 %v231, 4294901760
        %v2298 = vsub.f32 %v231, %v2297
        %v2299 = vand.u32 %v2298, 4294901760
        %2300 = vmatpush.msra.mxu0 %v2299
        %v2301 = vand.u32 %v229, 4294901760
        %v2302 = vsub.f32 %v229, %v2301
        %v2303 = vand.u32 %v2302, 4294901760
        %2304 = vmatpush.msra.mxu0 %v2303
        %v2305 = vand.u32 %v1386, 4294901760
        %2306 = vmatmul.f32.gmra.mxu0 %v2305
        %v2307 = vpop.f32.mrf.mxu0
        %v2308 = vadd.f32 %v2275, %v2307
        %v2309 = vand.u32 %v1389, 4294901760
        %2310 = vmatmul.f32.gmra.mxu0 %v2309
        %v2311 = vpop.f32.mrf.mxu0
        %v2312 = vadd.f32 %v2281, %v2311
        %2313 = vdwg.mxu0
        %2314 = vmatpush.msra.mxu0 0.0
        %2315 = vmatpush.msra.mxu0 0.0
        %2316 = vmatpush.msra.mxu0 0.0
        %2317 = vmatpush.msra.mxu0 0.0
        %2318 = vmatpush.msra.mxu0 0.0
        %2319 = vmatpush.msra.mxu0 0.0
        %2320 = vmatpush.msra.mxu0 0.0
        %2321 = vmatpush.msra.mxu0 0.0
        %2322 = vmatpush.msra.mxu0 0.0
        %2323 = vmatpush.msra.mxu0 0.0
        %2324 = vmatpush.msra.mxu0 0.0
        %2325 = vmatpush.msra.mxu0 0.0
        %2326 = vmatpush.msra.mxu0 0.0
        %2327 = vmatpush.msra.mxu0 0.0
        %v2328 = vand.u32 %v231, 4294901760
        %2329 = vmatpush.msra.mxu0 %v2328
        %v2330 = vand.u32 %v229, 4294901760
        %2331 = vmatpush.msra.mxu0 %v2330
        %v2332 = vand.u32 %v1386, 4294901760
        %2333 = vmatmul.f32.gmra.mxu0 %v2332
        %v2334 = vpop.f32.mrf.mxu0
        %v2335 = vadd.f32 %v2308, %v2334
        %v2336 = vand.u32 %v1389, 4294901760
        %2337 = vmatmul.f32.gmra.mxu0 %v2336
        %v2338 = vpop.f32.mrf.mxu0
        %v2339 = vadd.f32 %v2312, %v2338
        %2340 = vdwg.mxu0
        %2341 = vmatpush.msra.mxu0 0.0
        %2342 = vmatpush.msra.mxu0 0.0
        %2343 = vmatpush.msra.mxu0 0.0
        %2344 = vmatpush.msra.mxu0 0.0
        %2345 = vmatpush.msra.mxu0 0.0
        %2346 = vmatpush.msra.mxu0 0.0
        %2347 = vmatpush.msra.mxu0 0.0
        %2348 = vmatpush.msra.mxu0 0.0
        %2349 = vmatpush.msra.mxu0 0.0
        %2350 = vmatpush.msra.mxu0 0.0
        %2351 = vmatpush.msra.mxu0 0.0
        %2352 = vmatpush.msra.mxu0 0.0
        %2353 = vmatpush.msra.mxu0 0.0
        %2354 = vmatpush.msra.mxu0 0.0
        %v2355 = vand.u32 %v232, 4294901760
        %2356 = vmatpush.msra.mxu0 %v2355
        %v2357 = vand.u32 %v230, 4294901760
        %2358 = vmatpush.msra.mxu0 %v2357
        %v2359 = vand.u32 %v1386, 4294901760
        %v2360 = vsub.f32 %v1386, %v2359
        %v2361 = vand.u32 %v2360, 4294901760
        %v2362 = vsub.f32 %v2360, %v2361
        %v2363 = vand.u32 %v2362, 4294901760
        %2364 = vmatmul.f32.gmra.mxu0 %v2363
        %v2365 = vpop.f32.mrf.mxu0
        %v2366 = vadd.f32 0.0, %v2365
        %v2367 = vand.u32 %v1389, 4294901760
        %v2368 = vsub.f32 %v1389, %v2367
        %v2369 = vand.u32 %v2368, 4294901760
        %v2370 = vsub.f32 %v2368, %v2369
        %v2371 = vand.u32 %v2370, 4294901760
        %2372 = vmatmul.f32.gmra.mxu0 %v2371
        %v2373 = vpop.f32.mrf.mxu0
        %v2374 = vadd.f32 0.0, %v2373
        %2375 = vdwg.mxu0
        %2376 = vmatpush.msra.mxu0 0.0
        %2377 = vmatpush.msra.mxu0 0.0
        %2378 = vmatpush.msra.mxu0 0.0
        %2379 = vmatpush.msra.mxu0 0.0
        %2380 = vmatpush.msra.mxu0 0.0
        %2381 = vmatpush.msra.mxu0 0.0
        %2382 = vmatpush.msra.mxu0 0.0
        %2383 = vmatpush.msra.mxu0 0.0
        %2384 = vmatpush.msra.mxu0 0.0
        %2385 = vmatpush.msra.mxu0 0.0
        %2386 = vmatpush.msra.mxu0 0.0
        %2387 = vmatpush.msra.mxu0 0.0
        %2388 = vmatpush.msra.mxu0 0.0
        %2389 = vmatpush.msra.mxu0 0.0
        %v2390 = vand.u32 %v232, 4294901760
        %v2391 = vsub.f32 %v232, %v2390
        %v2392 = vand.u32 %v2391, 4294901760
        %v2393 = vsub.f32 %v2391, %v2392
        %v2394 = vand.u32 %v2393, 4294901760
        %2395 = vmatpush.msra.mxu0 %v2394
        %v2396 = vand.u32 %v230, 4294901760
        %v2397 = vsub.f32 %v230, %v2396
        %v2398 = vand.u32 %v2397, 4294901760
        %v2399 = vsub.f32 %v2397, %v2398
        %v2400 = vand.u32 %v2399, 4294901760
        %2401 = vmatpush.msra.mxu0 %v2400
        %v2402 = vand.u32 %v1386, 4294901760
        %2403 = vmatmul.f32.gmra.mxu0 %v2402
        %v2404 = vpop.f32.mrf.mxu0
        %v2405 = vadd.f32 %v2366, %v2404
        %v2406 = vand.u32 %v1389, 4294901760
        %2407 = vmatmul.f32.gmra.mxu0 %v2406
        %v2408 = vpop.f32.mrf.mxu0
        %v2409 = vadd.f32 %v2374, %v2408
        %2410 = vdwg.mxu0
        %2411 = vmatpush.msra.mxu0 0.0
        %2412 = vmatpush.msra.mxu0 0.0
        %2413 = vmatpush.msra.mxu0 0.0
        %2414 = vmatpush.msra.mxu0 0.0
        %2415 = vmatpush.msra.mxu0 0.0
        %2416 = vmatpush.msra.mxu0 0.0
        %2417 = vmatpush.msra.mxu0 0.0
        %2418 = vmatpush.msra.mxu0 0.0
        %2419 = vmatpush.msra.mxu0 0.0
        %2420 = vmatpush.msra.mxu0 0.0
        %2421 = vmatpush.msra.mxu0 0.0
        %2422 = vmatpush.msra.mxu0 0.0
        %2423 = vmatpush.msra.mxu0 0.0
        %2424 = vmatpush.msra.mxu0 0.0
        %v2425 = vand.u32 %v232, 4294901760
        %v2426 = vsub.f32 %v232, %v2425
        %2427 = vmatpush.msra.mxu0 %v2426
        %v2428 = vand.u32 %v230, 4294901760
        %v2429 = vsub.f32 %v230, %v2428
        %2430 = vmatpush.msra.mxu0 %v2429
        %v2431 = vand.u32 %v1386, 4294901760
        %v2432 = vsub.f32 %v1386, %v2431
        %2433 = vmatmul.f32.gmra.mxu0 %v2432
        %v2434 = vpop.f32.mrf.mxu0
        %v2435 = vadd.f32 %v2405, %v2434
        %v2436 = vand.u32 %v1389, 4294901760
        %v2437 = vsub.f32 %v1389, %v2436
        %2438 = vmatmul.f32.gmra.mxu0 %v2437
        %v2439 = vpop.f32.mrf.mxu0
        %v2440 = vadd.f32 %v2409, %v2439
        %2441 = vdwg.mxu0
        %2442 = vmatpush.msra.mxu0 0.0
        %2443 = vmatpush.msra.mxu0 0.0
        %2444 = vmatpush.msra.mxu0 0.0
        %2445 = vmatpush.msra.mxu0 0.0
        %2446 = vmatpush.msra.mxu0 0.0
        %2447 = vmatpush.msra.mxu0 0.0
        %2448 = vmatpush.msra.mxu0 0.0
        %2449 = vmatpush.msra.mxu0 0.0
        %2450 = vmatpush.msra.mxu0 0.0
        %2451 = vmatpush.msra.mxu0 0.0
        %2452 = vmatpush.msra.mxu0 0.0
        %2453 = vmatpush.msra.mxu0 0.0
        %2454 = vmatpush.msra.mxu0 0.0
        %2455 = vmatpush.msra.mxu0 0.0
        %v2456 = vand.u32 %v232, 4294901760
        %2457 = vmatpush.msra.mxu0 %v2456
        %v2458 = vand.u32 %v230, 4294901760
        %2459 = vmatpush.msra.mxu0 %v2458
        %v2460 = vand.u32 %v1386, 4294901760
        %v2461 = vsub.f32 %v1386, %v2460
        %v2462 = vand.u32 %v2461, 4294901760
        %2463 = vmatmul.f32.gmra.mxu0 %v2462
        %v2464 = vpop.f32.mrf.mxu0
        %v2465 = vadd.f32 %v2435, %v2464
        %v2466 = vand.u32 %v1389, 4294901760
        %v2467 = vsub.f32 %v1389, %v2466
        %v2468 = vand.u32 %v2467, 4294901760
        %2469 = vmatmul.f32.gmra.mxu0 %v2468
        %v2470 = vpop.f32.mrf.mxu0
        %v2471 = vadd.f32 %v2440, %v2470
        %2472 = vdwg.mxu0
        %2473 = vmatpush.msra.mxu0 0.0
        %2474 = vmatpush.msra.mxu0 0.0
        %2475 = vmatpush.msra.mxu0 0.0
        %2476 = vmatpush.msra.mxu0 0.0
        %2477 = vmatpush.msra.mxu0 0.0
        %2478 = vmatpush.msra.mxu0 0.0
        %2479 = vmatpush.msra.mxu0 0.0
        %2480 = vmatpush.msra.mxu0 0.0
        %2481 = vmatpush.msra.mxu0 0.0
        %2482 = vmatpush.msra.mxu0 0.0
        %2483 = vmatpush.msra.mxu0 0.0
        %2484 = vmatpush.msra.mxu0 0.0
        %2485 = vmatpush.msra.mxu0 0.0
        %2486 = vmatpush.msra.mxu0 0.0
        %v2487 = vand.u32 %v232, 4294901760
        %v2488 = vsub.f32 %v232, %v2487
        %v2489 = vand.u32 %v2488, 4294901760
        %2490 = vmatpush.msra.mxu0 %v2489
        %v2491 = vand.u32 %v230, 4294901760
        %v2492 = vsub.f32 %v230, %v2491
        %v2493 = vand.u32 %v2492, 4294901760
        %2494 = vmatpush.msra.mxu0 %v2493
        %v2495 = vand.u32 %v1386, 4294901760
        %2496 = vmatmul.f32.gmra.mxu0 %v2495
        %v2497 = vpop.f32.mrf.mxu0
        %v2498 = vadd.f32 %v2465, %v2497
        %v2499 = vand.u32 %v1389, 4294901760
        %2500 = vmatmul.f32.gmra.mxu0 %v2499
        %v2501 = vpop.f32.mrf.mxu0
        %v2502 = vadd.f32 %v2471, %v2501
        %2503 = vdwg.mxu0
        %2504 = vmatpush.msra.mxu0 0.0
        %2505 = vmatpush.msra.mxu0 0.0
        %2506 = vmatpush.msra.mxu0 0.0
        %2507 = vmatpush.msra.mxu0 0.0
        %2508 = vmatpush.msra.mxu0 0.0
        %2509 = vmatpush.msra.mxu0 0.0
        %2510 = vmatpush.msra.mxu0 0.0
        %2511 = vmatpush.msra.mxu0 0.0
        %2512 = vmatpush.msra.mxu0 0.0
        %2513 = vmatpush.msra.mxu0 0.0
        %2514 = vmatpush.msra.mxu0 0.0
        %2515 = vmatpush.msra.mxu0 0.0
        %2516 = vmatpush.msra.mxu0 0.0
        %2517 = vmatpush.msra.mxu0 0.0
        %v2518 = vand.u32 %v232, 4294901760
        %2519 = vmatpush.msra.mxu0 %v2518
        %v2520 = vand.u32 %v230, 4294901760
        %2521 = vmatpush.msra.mxu0 %v2520
        %v2522 = vand.u32 %v1386, 4294901760
        %2523 = vmatmul.f32.gmra.mxu0 %v2522
        %v2524 = vpop.f32.mrf.mxu0
        %v2525 = vadd.f32 %v2498, %v2524
        %v2526 = vand.u32 %v1389, 4294901760
        %2527 = vmatmul.f32.gmra.mxu0 %v2526
        %v2528 = vpop.f32.mrf.mxu0
        %v2529 = vadd.f32 %v2502, %v2528
        %2530 = vdwg.mxu0
        %s2531 = scalar_lea.vmem %s214, 32
        %v2532 = vld [vmem:[%s2531] sm:$0xff]
        %v2533 = vld [vmem:[%s2531 + $0x8] sm:$0xff]
        %v2535 = vsel %vm235, %v2532, 0
        %v2538 = vsel %vm235, %v2533, 0
        %2540 = vmatpush.msra.mxu0 0.0
        %2541 = vmatpush.msra.mxu0 0.0
        %2542 = vmatpush.msra.mxu0 0.0
        %2543 = vmatpush.msra.mxu0 0.0
        %2544 = vmatpush.msra.mxu0 0.0
        %2545 = vmatpush.msra.mxu0 0.0
        %2546 = vmatpush.msra.mxu0 0.0
        %2547 = vmatpush.msra.mxu0 0.0
        %2548 = vmatpush.msra.mxu0 0.0
        %2549 = vmatpush.msra.mxu0 0.0
        %2550 = vmatpush.msra.mxu0 0.0
        %2551 = vmatpush.msra.mxu0 0.0
        %2552 = vmatpush.msra.mxu0 0.0
        %2553 = vmatpush.msra.mxu0 0.0
        %v2554 = vand.u32 %v221, 4294901760
        %2555 = vmatpush.msra.mxu0 %v2554
        %v2556 = vand.u32 %v219, 4294901760
        %2557 = vmatpush.msra.mxu0 %v2556
        %v2558 = vand.u32 %v2535, 4294901760
        %v2559 = vsub.f32 %v2535, %v2558
        %v2560 = vand.u32 %v2559, 4294901760
        %v2561 = vsub.f32 %v2559, %v2560
        %v2562 = vand.u32 %v2561, 4294901760
        %2563 = vmatmul.f32.gmra.mxu0 %v2562
        %v2564 = vpop.f32.mrf.mxu0
        %v2565 = vadd.f32 0.0, %v2564
        %v2566 = vand.u32 %v2538, 4294901760
        %v2567 = vsub.f32 %v2538, %v2566
        %v2568 = vand.u32 %v2567, 4294901760
        %v2569 = vsub.f32 %v2567, %v2568
        %v2570 = vand.u32 %v2569, 4294901760
        %2571 = vmatmul.f32.gmra.mxu0 %v2570
        %v2572 = vpop.f32.mrf.mxu0
        %v2573 = vadd.f32 0.0, %v2572
        %2574 = vdwg.mxu0
        %2575 = vmatpush.msra.mxu0 0.0
        %2576 = vmatpush.msra.mxu0 0.0
        %2577 = vmatpush.msra.mxu0 0.0
        %2578 = vmatpush.msra.mxu0 0.0
        %2579 = vmatpush.msra.mxu0 0.0
        %2580 = vmatpush.msra.mxu0 0.0
        %2581 = vmatpush.msra.mxu0 0.0
        %2582 = vmatpush.msra.mxu0 0.0
        %2583 = vmatpush.msra.mxu0 0.0
        %2584 = vmatpush.msra.mxu0 0.0
        %2585 = vmatpush.msra.mxu0 0.0
        %2586 = vmatpush.msra.mxu0 0.0
        %2587 = vmatpush.msra.mxu0 0.0
        %2588 = vmatpush.msra.mxu0 0.0
        %v2589 = vand.u32 %v221, 4294901760
        %v2590 = vsub.f32 %v221, %v2589
        %v2591 = vand.u32 %v2590, 4294901760
        %v2592 = vsub.f32 %v2590, %v2591
        %v2593 = vand.u32 %v2592, 4294901760
        %2594 = vmatpush.msra.mxu0 %v2593
        %v2595 = vand.u32 %v219, 4294901760
        %v2596 = vsub.f32 %v219, %v2595
        %v2597 = vand.u32 %v2596, 4294901760
        %v2598 = vsub.f32 %v2596, %v2597
        %v2599 = vand.u32 %v2598, 4294901760
        %2600 = vmatpush.msra.mxu0 %v2599
        %v2601 = vand.u32 %v2535, 4294901760
        %2602 = vmatmul.f32.gmra.mxu0 %v2601
        %v2603 = vpop.f32.mrf.mxu0
        %v2604 = vadd.f32 %v2565, %v2603
        %v2605 = vand.u32 %v2538, 4294901760
        %2606 = vmatmul.f32.gmra.mxu0 %v2605
        %v2607 = vpop.f32.mrf.mxu0
        %v2608 = vadd.f32 %v2573, %v2607
        %2609 = vdwg.mxu0
        %2610 = vmatpush.msra.mxu0 0.0
        %2611 = vmatpush.msra.mxu0 0.0
        %2612 = vmatpush.msra.mxu0 0.0
        %2613 = vmatpush.msra.mxu0 0.0
        %2614 = vmatpush.msra.mxu0 0.0
        %2615 = vmatpush.msra.mxu0 0.0
        %2616 = vmatpush.msra.mxu0 0.0
        %2617 = vmatpush.msra.mxu0 0.0
        %2618 = vmatpush.msra.mxu0 0.0
        %2619 = vmatpush.msra.mxu0 0.0
        %2620 = vmatpush.msra.mxu0 0.0
        %2621 = vmatpush.msra.mxu0 0.0
        %2622 = vmatpush.msra.mxu0 0.0
        %2623 = vmatpush.msra.mxu0 0.0
        %v2624 = vand.u32 %v221, 4294901760
        %v2625 = vsub.f32 %v221, %v2624
        %2626 = vmatpush.msra.mxu0 %v2625
        %v2627 = vand.u32 %v219, 4294901760
        %v2628 = vsub.f32 %v219, %v2627
        %2629 = vmatpush.msra.mxu0 %v2628
        %v2630 = vand.u32 %v2535, 4294901760
        %v2631 = vsub.f32 %v2535, %v2630
        %2632 = vmatmul.f32.gmra.mxu0 %v2631
        %v2633 = vpop.f32.mrf.mxu0
        %v2634 = vadd.f32 %v2604, %v2633
        %v2635 = vand.u32 %v2538, 4294901760
        %v2636 = vsub.f32 %v2538, %v2635
        %2637 = vmatmul.f32.gmra.mxu0 %v2636
        %v2638 = vpop.f32.mrf.mxu0
        %v2639 = vadd.f32 %v2608, %v2638
        %2640 = vdwg.mxu0
        %2641 = vmatpush.msra.mxu0 0.0
        %2642 = vmatpush.msra.mxu0 0.0
        %2643 = vmatpush.msra.mxu0 0.0
        %2644 = vmatpush.msra.mxu0 0.0
        %2645 = vmatpush.msra.mxu0 0.0
        %2646 = vmatpush.msra.mxu0 0.0
        %2647 = vmatpush.msra.mxu0 0.0
        %2648 = vmatpush.msra.mxu0 0.0
        %2649 = vmatpush.msra.mxu0 0.0
        %2650 = vmatpush.msra.mxu0 0.0
        %2651 = vmatpush.msra.mxu0 0.0
        %2652 = vmatpush.msra.mxu0 0.0
        %2653 = vmatpush.msra.mxu0 0.0
        %2654 = vmatpush.msra.mxu0 0.0
        %v2655 = vand.u32 %v221, 4294901760
        %2656 = vmatpush.msra.mxu0 %v2655
        %v2657 = vand.u32 %v219, 4294901760
        %2658 = vmatpush.msra.mxu0 %v2657
        %v2659 = vand.u32 %v2535, 4294901760
        %v2660 = vsub.f32 %v2535, %v2659
        %v2661 = vand.u32 %v2660, 4294901760
        %2662 = vmatmul.f32.gmra.mxu0 %v2661
        %v2663 = vpop.f32.mrf.mxu0
        %v2664 = vadd.f32 %v2634, %v2663
        %v2665 = vand.u32 %v2538, 4294901760
        %v2666 = vsub.f32 %v2538, %v2665
        %v2667 = vand.u32 %v2666, 4294901760
        %2668 = vmatmul.f32.gmra.mxu0 %v2667
        %v2669 = vpop.f32.mrf.mxu0
        %v2670 = vadd.f32 %v2639, %v2669
        %2671 = vdwg.mxu0
        %2672 = vmatpush.msra.mxu0 0.0
        %2673 = vmatpush.msra.mxu0 0.0
        %2674 = vmatpush.msra.mxu0 0.0
        %2675 = vmatpush.msra.mxu0 0.0
        %2676 = vmatpush.msra.mxu0 0.0
        %2677 = vmatpush.msra.mxu0 0.0
        %2678 = vmatpush.msra.mxu0 0.0
        %2679 = vmatpush.msra.mxu0 0.0
        %2680 = vmatpush.msra.mxu0 0.0
        %2681 = vmatpush.msra.mxu0 0.0
        %2682 = vmatpush.msra.mxu0 0.0
        %2683 = vmatpush.msra.mxu0 0.0
        %2684 = vmatpush.msra.mxu0 0.0
        %2685 = vmatpush.msra.mxu0 0.0
        %v2686 = vand.u32 %v221, 4294901760
        %v2687 = vsub.f32 %v221, %v2686
        %v2688 = vand.u32 %v2687, 4294901760
        %2689 = vmatpush.msra.mxu0 %v2688
        %v2690 = vand.u32 %v219, 4294901760
        %v2691 = vsub.f32 %v219, %v2690
        %v2692 = vand.u32 %v2691, 4294901760
        %2693 = vmatpush.msra.mxu0 %v2692
        %v2694 = vand.u32 %v2535, 4294901760
        %2695 = vmatmul.f32.gmra.mxu0 %v2694
        %v2696 = vpop.f32.mrf.mxu0
        %v2697 = vadd.f32 %v2664, %v2696
        %v2698 = vand.u32 %v2538, 4294901760
        %2699 = vmatmul.f32.gmra.mxu0 %v2698
        %v2700 = vpop.f32.mrf.mxu0
        %v2701 = vadd.f32 %v2670, %v2700
        %2702 = vdwg.mxu0
        %2703 = vmatpush.msra.mxu0 0.0
        %2704 = vmatpush.msra.mxu0 0.0
        %2705 = vmatpush.msra.mxu0 0.0
        %2706 = vmatpush.msra.mxu0 0.0
        %2707 = vmatpush.msra.mxu0 0.0
        %2708 = vmatpush.msra.mxu0 0.0
        %2709 = vmatpush.msra.mxu0 0.0
        %2710 = vmatpush.msra.mxu0 0.0
        %2711 = vmatpush.msra.mxu0 0.0
        %2712 = vmatpush.msra.mxu0 0.0
        %2713 = vmatpush.msra.mxu0 0.0
        %2714 = vmatpush.msra.mxu0 0.0
        %2715 = vmatpush.msra.mxu0 0.0
        %2716 = vmatpush.msra.mxu0 0.0
        %v2717 = vand.u32 %v221, 4294901760
        %2718 = vmatpush.msra.mxu0 %v2717
        %v2719 = vand.u32 %v219, 4294901760
        %2720 = vmatpush.msra.mxu0 %v2719
        %v2721 = vand.u32 %v2535, 4294901760
        %2722 = vmatmul.f32.gmra.mxu0 %v2721
        %v2723 = vpop.f32.mrf.mxu0
        %v2724 = vadd.f32 %v2697, %v2723
        %v2725 = vand.u32 %v2538, 4294901760
        %2726 = vmatmul.f32.gmra.mxu0 %v2725
        %v2727 = vpop.f32.mrf.mxu0
        %v2728 = vadd.f32 %v2701, %v2727
        %2729 = vdwg.mxu0
        %2730 = vmatpush.msra.mxu0 0.0
        %2731 = vmatpush.msra.mxu0 0.0
        %2732 = vmatpush.msra.mxu0 0.0
        %2733 = vmatpush.msra.mxu0 0.0
        %2734 = vmatpush.msra.mxu0 0.0
        %2735 = vmatpush.msra.mxu0 0.0
        %2736 = vmatpush.msra.mxu0 0.0
        %2737 = vmatpush.msra.mxu0 0.0
        %2738 = vmatpush.msra.mxu0 0.0
        %2739 = vmatpush.msra.mxu0 0.0
        %2740 = vmatpush.msra.mxu0 0.0
        %2741 = vmatpush.msra.mxu0 0.0
        %2742 = vmatpush.msra.mxu0 0.0
        %2743 = vmatpush.msra.mxu0 0.0
        %v2744 = vand.u32 %v222, 4294901760
        %2745 = vmatpush.msra.mxu0 %v2744
        %v2746 = vand.u32 %v220, 4294901760
        %2747 = vmatpush.msra.mxu0 %v2746
        %v2748 = vand.u32 %v2535, 4294901760
        %v2749 = vsub.f32 %v2535, %v2748
        %v2750 = vand.u32 %v2749, 4294901760
        %v2751 = vsub.f32 %v2749, %v2750
        %v2752 = vand.u32 %v2751, 4294901760
        %2753 = vmatmul.f32.gmra.mxu0 %v2752
        %v2754 = vpop.f32.mrf.mxu0
        %v2755 = vadd.f32 0.0, %v2754
        %v2756 = vand.u32 %v2538, 4294901760
        %v2757 = vsub.f32 %v2538, %v2756
        %v2758 = vand.u32 %v2757, 4294901760
        %v2759 = vsub.f32 %v2757, %v2758
        %v2760 = vand.u32 %v2759, 4294901760
        %2761 = vmatmul.f32.gmra.mxu0 %v2760
        %v2762 = vpop.f32.mrf.mxu0
        %v2763 = vadd.f32 0.0, %v2762
        %2764 = vdwg.mxu0
        %2765 = vmatpush.msra.mxu0 0.0
        %2766 = vmatpush.msra.mxu0 0.0
        %2767 = vmatpush.msra.mxu0 0.0
        %2768 = vmatpush.msra.mxu0 0.0
        %2769 = vmatpush.msra.mxu0 0.0
        %2770 = vmatpush.msra.mxu0 0.0
        %2771 = vmatpush.msra.mxu0 0.0
        %2772 = vmatpush.msra.mxu0 0.0
        %2773 = vmatpush.msra.mxu0 0.0
        %2774 = vmatpush.msra.mxu0 0.0
        %2775 = vmatpush.msra.mxu0 0.0
        %2776 = vmatpush.msra.mxu0 0.0
        %2777 = vmatpush.msra.mxu0 0.0
        %2778 = vmatpush.msra.mxu0 0.0
        %v2779 = vand.u32 %v222, 4294901760
        %v2780 = vsub.f32 %v222, %v2779
        %v2781 = vand.u32 %v2780, 4294901760
        %v2782 = vsub.f32 %v2780, %v2781
        %v2783 = vand.u32 %v2782, 4294901760
        %2784 = vmatpush.msra.mxu0 %v2783
        %v2785 = vand.u32 %v220, 4294901760
        %v2786 = vsub.f32 %v220, %v2785
        %v2787 = vand.u32 %v2786, 4294901760
        %v2788 = vsub.f32 %v2786, %v2787
        %v2789 = vand.u32 %v2788, 4294901760
        %2790 = vmatpush.msra.mxu0 %v2789
        %v2791 = vand.u32 %v2535, 4294901760
        %2792 = vmatmul.f32.gmra.mxu0 %v2791
        %v2793 = vpop.f32.mrf.mxu0
        %v2794 = vadd.f32 %v2755, %v2793
        %v2795 = vand.u32 %v2538, 4294901760
        %2796 = vmatmul.f32.gmra.mxu0 %v2795
        %v2797 = vpop.f32.mrf.mxu0
        %v2798 = vadd.f32 %v2763, %v2797
        %2799 = vdwg.mxu0
        %2800 = vmatpush.msra.mxu0 0.0
        %2801 = vmatpush.msra.mxu0 0.0
        %2802 = vmatpush.msra.mxu0 0.0
        %2803 = vmatpush.msra.mxu0 0.0
        %2804 = vmatpush.msra.mxu0 0.0
        %2805 = vmatpush.msra.mxu0 0.0
        %2806 = vmatpush.msra.mxu0 0.0
        %2807 = vmatpush.msra.mxu0 0.0
        %2808 = vmatpush.msra.mxu0 0.0
        %2809 = vmatpush.msra.mxu0 0.0
        %2810 = vmatpush.msra.mxu0 0.0
        %2811 = vmatpush.msra.mxu0 0.0
        %2812 = vmatpush.msra.mxu0 0.0
        %2813 = vmatpush.msra.mxu0 0.0
        %v2814 = vand.u32 %v222, 4294901760
        %v2815 = vsub.f32 %v222, %v2814
        %2816 = vmatpush.msra.mxu0 %v2815
        %v2817 = vand.u32 %v220, 4294901760
        %v2818 = vsub.f32 %v220, %v2817
        %2819 = vmatpush.msra.mxu0 %v2818
        %v2820 = vand.u32 %v2535, 4294901760
        %v2821 = vsub.f32 %v2535, %v2820
        %2822 = vmatmul.f32.gmra.mxu0 %v2821
        %v2823 = vpop.f32.mrf.mxu0
        %v2824 = vadd.f32 %v2794, %v2823
        %v2825 = vand.u32 %v2538, 4294901760
        %v2826 = vsub.f32 %v2538, %v2825
        %2827 = vmatmul.f32.gmra.mxu0 %v2826
        %v2828 = vpop.f32.mrf.mxu0
        %v2829 = vadd.f32 %v2798, %v2828
        %2830 = vdwg.mxu0
        %2831 = vmatpush.msra.mxu0 0.0
        %2832 = vmatpush.msra.mxu0 0.0
        %2833 = vmatpush.msra.mxu0 0.0
        %2834 = vmatpush.msra.mxu0 0.0
        %2835 = vmatpush.msra.mxu0 0.0
        %2836 = vmatpush.msra.mxu0 0.0
        %2837 = vmatpush.msra.mxu0 0.0
        %2838 = vmatpush.msra.mxu0 0.0
        %2839 = vmatpush.msra.mxu0 0.0
        %2840 = vmatpush.msra.mxu0 0.0
        %2841 = vmatpush.msra.mxu0 0.0
        %2842 = vmatpush.msra.mxu0 0.0
        %2843 = vmatpush.msra.mxu0 0.0
        %2844 = vmatpush.msra.mxu0 0.0
        %v2845 = vand.u32 %v222, 4294901760
        %2846 = vmatpush.msra.mxu0 %v2845
        %v2847 = vand.u32 %v220, 4294901760
        %2848 = vmatpush.msra.mxu0 %v2847
        %v2849 = vand.u32 %v2535, 4294901760
        %v2850 = vsub.f32 %v2535, %v2849
        %v2851 = vand.u32 %v2850, 4294901760
        %2852 = vmatmul.f32.gmra.mxu0 %v2851
        %v2853 = vpop.f32.mrf.mxu0
        %v2854 = vadd.f32 %v2824, %v2853
        %v2855 = vand.u32 %v2538, 4294901760
        %v2856 = vsub.f32 %v2538, %v2855
        %v2857 = vand.u32 %v2856, 4294901760
        %2858 = vmatmul.f32.gmra.mxu0 %v2857
        %v2859 = vpop.f32.mrf.mxu0
        %v2860 = vadd.f32 %v2829, %v2859
        %2861 = vdwg.mxu0
        %2862 = vmatpush.msra.mxu0 0.0
        %2863 = vmatpush.msra.mxu0 0.0
        %2864 = vmatpush.msra.mxu0 0.0
        %2865 = vmatpush.msra.mxu0 0.0
        %2866 = vmatpush.msra.mxu0 0.0
        %2867 = vmatpush.msra.mxu0 0.0
        %2868 = vmatpush.msra.mxu0 0.0
        %2869 = vmatpush.msra.mxu0 0.0
        %2870 = vmatpush.msra.mxu0 0.0
        %2871 = vmatpush.msra.mxu0 0.0
        %2872 = vmatpush.msra.mxu0 0.0
        %2873 = vmatpush.msra.mxu0 0.0
        %2874 = vmatpush.msra.mxu0 0.0
        %2875 = vmatpush.msra.mxu0 0.0
        %v2876 = vand.u32 %v222, 4294901760
        %v2877 = vsub.f32 %v222, %v2876
        %v2878 = vand.u32 %v2877, 4294901760
        %2879 = vmatpush.msra.mxu0 %v2878
        %v2880 = vand.u32 %v220, 4294901760
        %v2881 = vsub.f32 %v220, %v2880
        %v2882 = vand.u32 %v2881, 4294901760
        %2883 = vmatpush.msra.mxu0 %v2882
        %v2884 = vand.u32 %v2535, 4294901760
        %2885 = vmatmul.f32.gmra.mxu0 %v2884
        %v2886 = vpop.f32.mrf.mxu0
        %v2887 = vadd.f32 %v2854, %v2886
        %v2888 = vand.u32 %v2538, 4294901760
        %2889 = vmatmul.f32.gmra.mxu0 %v2888
        %v2890 = vpop.f32.mrf.mxu0
        %v2891 = vadd.f32 %v2860, %v2890
        %2892 = vdwg.mxu0
        %2893 = vmatpush.msra.mxu0 0.0
        %2894 = vmatpush.msra.mxu0 0.0
        %2895 = vmatpush.msra.mxu0 0.0
        %2896 = vmatpush.msra.mxu0 0.0
        %2897 = vmatpush.msra.mxu0 0.0
        %2898 = vmatpush.msra.mxu0 0.0
        %2899 = vmatpush.msra.mxu0 0.0
        %2900 = vmatpush.msra.mxu0 0.0
        %2901 = vmatpush.msra.mxu0 0.0
        %2902 = vmatpush.msra.mxu0 0.0
        %2903 = vmatpush.msra.mxu0 0.0
        %2904 = vmatpush.msra.mxu0 0.0
        %2905 = vmatpush.msra.mxu0 0.0
        %2906 = vmatpush.msra.mxu0 0.0
        %v2907 = vand.u32 %v222, 4294901760
        %2908 = vmatpush.msra.mxu0 %v2907
        %v2909 = vand.u32 %v220, 4294901760
        %2910 = vmatpush.msra.mxu0 %v2909
        %v2911 = vand.u32 %v2535, 4294901760
        %2912 = vmatmul.f32.gmra.mxu0 %v2911
        %v2913 = vpop.f32.mrf.mxu0
        %v2914 = vadd.f32 %v2887, %v2913
        %v2915 = vand.u32 %v2538, 4294901760
        %2916 = vmatmul.f32.gmra.mxu0 %v2915
        %v2917 = vpop.f32.mrf.mxu0
        %v2918 = vadd.f32 %v2891, %v2917
        %2919 = vdwg.mxu0
        %2920 = vmatpush.msra.mxu0 0.0
        %2921 = vmatpush.msra.mxu0 0.0
        %2922 = vmatpush.msra.mxu0 0.0
        %2923 = vmatpush.msra.mxu0 0.0
        %2924 = vmatpush.msra.mxu0 0.0
        %2925 = vmatpush.msra.mxu0 0.0
        %2926 = vmatpush.msra.mxu0 0.0
        %2927 = vmatpush.msra.mxu0 0.0
        %2928 = vmatpush.msra.mxu0 0.0
        %2929 = vmatpush.msra.mxu0 0.0
        %2930 = vmatpush.msra.mxu0 0.0
        %2931 = vmatpush.msra.mxu0 0.0
        %2932 = vmatpush.msra.mxu0 0.0
        %2933 = vmatpush.msra.mxu0 0.0
        %v2934 = vand.u32 %v226, 4294901760
        %2935 = vmatpush.msra.mxu0 %v2934
        %v2936 = vand.u32 %v224, 4294901760
        %2937 = vmatpush.msra.mxu0 %v2936
        %v2938 = vand.u32 %v2535, 4294901760
        %v2939 = vsub.f32 %v2535, %v2938
        %v2940 = vand.u32 %v2939, 4294901760
        %v2941 = vsub.f32 %v2939, %v2940
        %v2942 = vand.u32 %v2941, 4294901760
        %2943 = vmatmul.f32.gmra.mxu0 %v2942
        %v2944 = vpop.f32.mrf.mxu0
        %v2945 = vadd.f32 0.0, %v2944
        %v2946 = vand.u32 %v2538, 4294901760
        %v2947 = vsub.f32 %v2538, %v2946
        %v2948 = vand.u32 %v2947, 4294901760
        %v2949 = vsub.f32 %v2947, %v2948
        %v2950 = vand.u32 %v2949, 4294901760
        %2951 = vmatmul.f32.gmra.mxu0 %v2950
        %v2952 = vpop.f32.mrf.mxu0
        %v2953 = vadd.f32 0.0, %v2952
        %2954 = vdwg.mxu0
        %2955 = vmatpush.msra.mxu0 0.0
        %2956 = vmatpush.msra.mxu0 0.0
        %2957 = vmatpush.msra.mxu0 0.0
        %2958 = vmatpush.msra.mxu0 0.0
        %2959 = vmatpush.msra.mxu0 0.0
        %2960 = vmatpush.msra.mxu0 0.0
        %2961 = vmatpush.msra.mxu0 0.0
        %2962 = vmatpush.msra.mxu0 0.0
        %2963 = vmatpush.msra.mxu0 0.0
        %2964 = vmatpush.msra.mxu0 0.0
        %2965 = vmatpush.msra.mxu0 0.0
        %2966 = vmatpush.msra.mxu0 0.0
        %2967 = vmatpush.msra.mxu0 0.0
        %2968 = vmatpush.msra.mxu0 0.0
        %v2969 = vand.u32 %v226, 4294901760
        %v2970 = vsub.f32 %v226, %v2969
        %v2971 = vand.u32 %v2970, 4294901760
        %v2972 = vsub.f32 %v2970, %v2971
        %v2973 = vand.u32 %v2972, 4294901760
        %2974 = vmatpush.msra.mxu0 %v2973
        %v2975 = vand.u32 %v224, 4294901760
        %v2976 = vsub.f32 %v224, %v2975
        %v2977 = vand.u32 %v2976, 4294901760
        %v2978 = vsub.f32 %v2976, %v2977
        %v2979 = vand.u32 %v2978, 4294901760
        %2980 = vmatpush.msra.mxu0 %v2979
        %v2981 = vand.u32 %v2535, 4294901760
        %2982 = vmatmul.f32.gmra.mxu0 %v2981
        %v2983 = vpop.f32.mrf.mxu0
        %v2984 = vadd.f32 %v2945, %v2983
        %v2985 = vand.u32 %v2538, 4294901760
        %2986 = vmatmul.f32.gmra.mxu0 %v2985
        %v2987 = vpop.f32.mrf.mxu0
        %v2988 = vadd.f32 %v2953, %v2987
        %2989 = vdwg.mxu0
        %2990 = vmatpush.msra.mxu0 0.0
        %2991 = vmatpush.msra.mxu0 0.0
        %2992 = vmatpush.msra.mxu0 0.0
        %2993 = vmatpush.msra.mxu0 0.0
        %2994 = vmatpush.msra.mxu0 0.0
        %2995 = vmatpush.msra.mxu0 0.0
        %2996 = vmatpush.msra.mxu0 0.0
        %2997 = vmatpush.msra.mxu0 0.0
        %2998 = vmatpush.msra.mxu0 0.0
        %2999 = vmatpush.msra.mxu0 0.0
        %3000 = vmatpush.msra.mxu0 0.0
        %3001 = vmatpush.msra.mxu0 0.0
        %3002 = vmatpush.msra.mxu0 0.0
        %3003 = vmatpush.msra.mxu0 0.0
        %v3004 = vand.u32 %v226, 4294901760
        %v3005 = vsub.f32 %v226, %v3004
        %3006 = vmatpush.msra.mxu0 %v3005
        %v3007 = vand.u32 %v224, 4294901760
        %v3008 = vsub.f32 %v224, %v3007
        %3009 = vmatpush.msra.mxu0 %v3008
        %v3010 = vand.u32 %v2535, 4294901760
        %v3011 = vsub.f32 %v2535, %v3010
        %3012 = vmatmul.f32.gmra.mxu0 %v3011
        %v3013 = vpop.f32.mrf.mxu0
        %v3014 = vadd.f32 %v2984, %v3013
        %v3015 = vand.u32 %v2538, 4294901760
        %v3016 = vsub.f32 %v2538, %v3015
        %3017 = vmatmul.f32.gmra.mxu0 %v3016
        %v3018 = vpop.f32.mrf.mxu0
        %v3019 = vadd.f32 %v2988, %v3018
        %3020 = vdwg.mxu0
        %3021 = vmatpush.msra.mxu0 0.0
        %3022 = vmatpush.msra.mxu0 0.0
        %3023 = vmatpush.msra.mxu0 0.0
        %3024 = vmatpush.msra.mxu0 0.0
        %3025 = vmatpush.msra.mxu0 0.0
        %3026 = vmatpush.msra.mxu0 0.0
        %3027 = vmatpush.msra.mxu0 0.0
        %3028 = vmatpush.msra.mxu0 0.0
        %3029 = vmatpush.msra.mxu0 0.0
        %3030 = vmatpush.msra.mxu0 0.0
        %3031 = vmatpush.msra.mxu0 0.0
        %3032 = vmatpush.msra.mxu0 0.0
        %3033 = vmatpush.msra.mxu0 0.0
        %3034 = vmatpush.msra.mxu0 0.0
        %v3035 = vand.u32 %v226, 4294901760
        %3036 = vmatpush.msra.mxu0 %v3035
        %v3037 = vand.u32 %v224, 4294901760
        %3038 = vmatpush.msra.mxu0 %v3037
        %v3039 = vand.u32 %v2535, 4294901760
        %v3040 = vsub.f32 %v2535, %v3039
        %v3041 = vand.u32 %v3040, 4294901760
        %3042 = vmatmul.f32.gmra.mxu0 %v3041
        %v3043 = vpop.f32.mrf.mxu0
        %v3044 = vadd.f32 %v3014, %v3043
        %v3045 = vand.u32 %v2538, 4294901760
        %v3046 = vsub.f32 %v2538, %v3045
        %v3047 = vand.u32 %v3046, 4294901760
        %3048 = vmatmul.f32.gmra.mxu0 %v3047
        %v3049 = vpop.f32.mrf.mxu0
        %v3050 = vadd.f32 %v3019, %v3049
        %3051 = vdwg.mxu0
        %3052 = vmatpush.msra.mxu0 0.0
        %3053 = vmatpush.msra.mxu0 0.0
        %3054 = vmatpush.msra.mxu0 0.0
        %3055 = vmatpush.msra.mxu0 0.0
        %3056 = vmatpush.msra.mxu0 0.0
        %3057 = vmatpush.msra.mxu0 0.0
        %3058 = vmatpush.msra.mxu0 0.0
        %3059 = vmatpush.msra.mxu0 0.0
        %3060 = vmatpush.msra.mxu0 0.0
        %3061 = vmatpush.msra.mxu0 0.0
        %3062 = vmatpush.msra.mxu0 0.0
        %3063 = vmatpush.msra.mxu0 0.0
        %3064 = vmatpush.msra.mxu0 0.0
        %3065 = vmatpush.msra.mxu0 0.0
        %v3066 = vand.u32 %v226, 4294901760
        %v3067 = vsub.f32 %v226, %v3066
        %v3068 = vand.u32 %v3067, 4294901760
        %3069 = vmatpush.msra.mxu0 %v3068
        %v3070 = vand.u32 %v224, 4294901760
        %v3071 = vsub.f32 %v224, %v3070
        %v3072 = vand.u32 %v3071, 4294901760
        %3073 = vmatpush.msra.mxu0 %v3072
        %v3074 = vand.u32 %v2535, 4294901760
        %3075 = vmatmul.f32.gmra.mxu0 %v3074
        %v3076 = vpop.f32.mrf.mxu0
        %v3077 = vadd.f32 %v3044, %v3076
        %v3078 = vand.u32 %v2538, 4294901760
        %3079 = vmatmul.f32.gmra.mxu0 %v3078
        %v3080 = vpop.f32.mrf.mxu0
        %v3081 = vadd.f32 %v3050, %v3080
        %3082 = vdwg.mxu0
        %3083 = vmatpush.msra.mxu0 0.0
        %3084 = vmatpush.msra.mxu0 0.0
        %3085 = vmatpush.msra.mxu0 0.0
        %3086 = vmatpush.msra.mxu0 0.0
        %3087 = vmatpush.msra.mxu0 0.0
        %3088 = vmatpush.msra.mxu0 0.0
        %3089 = vmatpush.msra.mxu0 0.0
        %3090 = vmatpush.msra.mxu0 0.0
        %3091 = vmatpush.msra.mxu0 0.0
        %3092 = vmatpush.msra.mxu0 0.0
        %3093 = vmatpush.msra.mxu0 0.0
        %3094 = vmatpush.msra.mxu0 0.0
        %3095 = vmatpush.msra.mxu0 0.0
        %3096 = vmatpush.msra.mxu0 0.0
        %v3097 = vand.u32 %v226, 4294901760
        %3098 = vmatpush.msra.mxu0 %v3097
        %v3099 = vand.u32 %v224, 4294901760
        %3100 = vmatpush.msra.mxu0 %v3099
        %v3101 = vand.u32 %v2535, 4294901760
        %3102 = vmatmul.f32.gmra.mxu0 %v3101
        %v3103 = vpop.f32.mrf.mxu0
        %v3104 = vadd.f32 %v3077, %v3103
        %v3105 = vand.u32 %v2538, 4294901760
        %3106 = vmatmul.f32.gmra.mxu0 %v3105
        %v3107 = vpop.f32.mrf.mxu0
        %v3108 = vadd.f32 %v3081, %v3107
        %3109 = vdwg.mxu0
        %3110 = vmatpush.msra.mxu0 0.0
        %3111 = vmatpush.msra.mxu0 0.0
        %3112 = vmatpush.msra.mxu0 0.0
        %3113 = vmatpush.msra.mxu0 0.0
        %3114 = vmatpush.msra.mxu0 0.0
        %3115 = vmatpush.msra.mxu0 0.0
        %3116 = vmatpush.msra.mxu0 0.0
        %3117 = vmatpush.msra.mxu0 0.0
        %3118 = vmatpush.msra.mxu0 0.0
        %3119 = vmatpush.msra.mxu0 0.0
        %3120 = vmatpush.msra.mxu0 0.0
        %3121 = vmatpush.msra.mxu0 0.0
        %3122 = vmatpush.msra.mxu0 0.0
        %3123 = vmatpush.msra.mxu0 0.0
        %v3124 = vand.u32 %v227, 4294901760
        %3125 = vmatpush.msra.mxu0 %v3124
        %v3126 = vand.u32 %v225, 4294901760
        %3127 = vmatpush.msra.mxu0 %v3126
        %v3128 = vand.u32 %v2535, 4294901760
        %v3129 = vsub.f32 %v2535, %v3128
        %v3130 = vand.u32 %v3129, 4294901760
        %v3131 = vsub.f32 %v3129, %v3130
        %v3132 = vand.u32 %v3131, 4294901760
        %3133 = vmatmul.f32.gmra.mxu0 %v3132
        %v3134 = vpop.f32.mrf.mxu0
        %v3135 = vadd.f32 0.0, %v3134
        %v3136 = vand.u32 %v2538, 4294901760
        %v3137 = vsub.f32 %v2538, %v3136
        %v3138 = vand.u32 %v3137, 4294901760
        %v3139 = vsub.f32 %v3137, %v3138
        %v3140 = vand.u32 %v3139, 4294901760
        %3141 = vmatmul.f32.gmra.mxu0 %v3140
        %v3142 = vpop.f32.mrf.mxu0
        %v3143 = vadd.f32 0.0, %v3142
        %3144 = vdwg.mxu0
        %3145 = vmatpush.msra.mxu0 0.0
        %3146 = vmatpush.msra.mxu0 0.0
        %3147 = vmatpush.msra.mxu0 0.0
        %3148 = vmatpush.msra.mxu0 0.0
        %3149 = vmatpush.msra.mxu0 0.0
        %3150 = vmatpush.msra.mxu0 0.0
        %3151 = vmatpush.msra.mxu0 0.0
        %3152 = vmatpush.msra.mxu0 0.0
        %3153 = vmatpush.msra.mxu0 0.0
        %3154 = vmatpush.msra.mxu0 0.0
        %3155 = vmatpush.msra.mxu0 0.0
        %3156 = vmatpush.msra.mxu0 0.0
        %3157 = vmatpush.msra.mxu0 0.0
        %3158 = vmatpush.msra.mxu0 0.0
        %v3159 = vand.u32 %v227, 4294901760
        %v3160 = vsub.f32 %v227, %v3159
        %v3161 = vand.u32 %v3160, 4294901760
        %v3162 = vsub.f32 %v3160, %v3161
        %v3163 = vand.u32 %v3162, 4294901760
        %3164 = vmatpush.msra.mxu0 %v3163
        %v3165 = vand.u32 %v225, 4294901760
        %v3166 = vsub.f32 %v225, %v3165
        %v3167 = vand.u32 %v3166, 4294901760
        %v3168 = vsub.f32 %v3166, %v3167
        %v3169 = vand.u32 %v3168, 4294901760
        %3170 = vmatpush.msra.mxu0 %v3169
        %v3171 = vand.u32 %v2535, 4294901760
        %3172 = vmatmul.f32.gmra.mxu0 %v3171
        %v3173 = vpop.f32.mrf.mxu0
        %v3174 = vadd.f32 %v3135, %v3173
        %v3175 = vand.u32 %v2538, 4294901760
        %3176 = vmatmul.f32.gmra.mxu0 %v3175
        %v3177 = vpop.f32.mrf.mxu0
        %v3178 = vadd.f32 %v3143, %v3177
        %3179 = vdwg.mxu0
        %3180 = vmatpush.msra.mxu0 0.0
        %3181 = vmatpush.msra.mxu0 0.0
        %3182 = vmatpush.msra.mxu0 0.0
        %3183 = vmatpush.msra.mxu0 0.0
        %3184 = vmatpush.msra.mxu0 0.0
        %3185 = vmatpush.msra.mxu0 0.0
        %3186 = vmatpush.msra.mxu0 0.0
        %3187 = vmatpush.msra.mxu0 0.0
        %3188 = vmatpush.msra.mxu0 0.0
        %3189 = vmatpush.msra.mxu0 0.0
        %3190 = vmatpush.msra.mxu0 0.0
        %3191 = vmatpush.msra.mxu0 0.0
        %3192 = vmatpush.msra.mxu0 0.0
        %3193 = vmatpush.msra.mxu0 0.0
        %v3194 = vand.u32 %v227, 4294901760
        %v3195 = vsub.f32 %v227, %v3194
        %3196 = vmatpush.msra.mxu0 %v3195
        %v3197 = vand.u32 %v225, 4294901760
        %v3198 = vsub.f32 %v225, %v3197
        %3199 = vmatpush.msra.mxu0 %v3198
        %v3200 = vand.u32 %v2535, 4294901760
        %v3201 = vsub.f32 %v2535, %v3200
        %3202 = vmatmul.f32.gmra.mxu0 %v3201
        %v3203 = vpop.f32.mrf.mxu0
        %v3204 = vadd.f32 %v3174, %v3203
        %v3205 = vand.u32 %v2538, 4294901760
        %v3206 = vsub.f32 %v2538, %v3205
        %3207 = vmatmul.f32.gmra.mxu0 %v3206
        %v3208 = vpop.f32.mrf.mxu0
        %v3209 = vadd.f32 %v3178, %v3208
        %3210 = vdwg.mxu0
        %3211 = vmatpush.msra.mxu0 0.0
        %3212 = vmatpush.msra.mxu0 0.0
        %3213 = vmatpush.msra.mxu0 0.0
        %3214 = vmatpush.msra.mxu0 0.0
        %3215 = vmatpush.msra.mxu0 0.0
        %3216 = vmatpush.msra.mxu0 0.0
        %3217 = vmatpush.msra.mxu0 0.0
        %3218 = vmatpush.msra.mxu0 0.0
        %3219 = vmatpush.msra.mxu0 0.0
        %3220 = vmatpush.msra.mxu0 0.0
        %3221 = vmatpush.msra.mxu0 0.0
        %3222 = vmatpush.msra.mxu0 0.0
        %3223 = vmatpush.msra.mxu0 0.0
        %3224 = vmatpush.msra.mxu0 0.0
        %v3225 = vand.u32 %v227, 4294901760
        %3226 = vmatpush.msra.mxu0 %v3225
        %v3227 = vand.u32 %v225, 4294901760
        %3228 = vmatpush.msra.mxu0 %v3227
        %v3229 = vand.u32 %v2535, 4294901760
        %v3230 = vsub.f32 %v2535, %v3229
        %v3231 = vand.u32 %v3230, 4294901760
        %3232 = vmatmul.f32.gmra.mxu0 %v3231
        %v3233 = vpop.f32.mrf.mxu0
        %v3234 = vadd.f32 %v3204, %v3233
        %v3235 = vand.u32 %v2538, 4294901760
        %v3236 = vsub.f32 %v2538, %v3235
        %v3237 = vand.u32 %v3236, 4294901760
        %3238 = vmatmul.f32.gmra.mxu0 %v3237
        %v3239 = vpop.f32.mrf.mxu0
        %v3240 = vadd.f32 %v3209, %v3239
        %3241 = vdwg.mxu0
        %3242 = vmatpush.msra.mxu0 0.0
        %3243 = vmatpush.msra.mxu0 0.0
        %3244 = vmatpush.msra.mxu0 0.0
        %3245 = vmatpush.msra.mxu0 0.0
        %3246 = vmatpush.msra.mxu0 0.0
        %3247 = vmatpush.msra.mxu0 0.0
        %3248 = vmatpush.msra.mxu0 0.0
        %3249 = vmatpush.msra.mxu0 0.0
        %3250 = vmatpush.msra.mxu0 0.0
        %3251 = vmatpush.msra.mxu0 0.0
        %3252 = vmatpush.msra.mxu0 0.0
        %3253 = vmatpush.msra.mxu0 0.0
        %3254 = vmatpush.msra.mxu0 0.0
        %3255 = vmatpush.msra.mxu0 0.0
        %v3256 = vand.u32 %v227, 4294901760
        %v3257 = vsub.f32 %v227, %v3256
        %v3258 = vand.u32 %v3257, 4294901760
        %3259 = vmatpush.msra.mxu0 %v3258
        %v3260 = vand.u32 %v225, 4294901760
        %v3261 = vsub.f32 %v225, %v3260
        %v3262 = vand.u32 %v3261, 4294901760
        %3263 = vmatpush.msra.mxu0 %v3262
        %v3264 = vand.u32 %v2535, 4294901760
        %3265 = vmatmul.f32.gmra.mxu0 %v3264
        %v3266 = vpop.f32.mrf.mxu0
        %v3267 = vadd.f32 %v3234, %v3266
        %v3268 = vand.u32 %v2538, 4294901760
        %3269 = vmatmul.f32.gmra.mxu0 %v3268
        %v3270 = vpop.f32.mrf.mxu0
        %v3271 = vadd.f32 %v3240, %v3270
        %3272 = vdwg.mxu0
        %3273 = vmatpush.msra.mxu0 0.0
        %3274 = vmatpush.msra.mxu0 0.0
        %3275 = vmatpush.msra.mxu0 0.0
        %3276 = vmatpush.msra.mxu0 0.0
        %3277 = vmatpush.msra.mxu0 0.0
        %3278 = vmatpush.msra.mxu0 0.0
        %3279 = vmatpush.msra.mxu0 0.0
        %3280 = vmatpush.msra.mxu0 0.0
        %3281 = vmatpush.msra.mxu0 0.0
        %3282 = vmatpush.msra.mxu0 0.0
        %3283 = vmatpush.msra.mxu0 0.0
        %3284 = vmatpush.msra.mxu0 0.0
        %3285 = vmatpush.msra.mxu0 0.0
        %3286 = vmatpush.msra.mxu0 0.0
        %v3287 = vand.u32 %v227, 4294901760
        %3288 = vmatpush.msra.mxu0 %v3287
        %v3289 = vand.u32 %v225, 4294901760
        %3290 = vmatpush.msra.mxu0 %v3289
        %v3291 = vand.u32 %v2535, 4294901760
        %3292 = vmatmul.f32.gmra.mxu0 %v3291
        %v3293 = vpop.f32.mrf.mxu0
        %v3294 = vadd.f32 %v3267, %v3293
        %v3295 = vand.u32 %v2538, 4294901760
        %3296 = vmatmul.f32.gmra.mxu0 %v3295
        %v3297 = vpop.f32.mrf.mxu0
        %v3298 = vadd.f32 %v3271, %v3297
        %3299 = vdwg.mxu0
        %3300 = vmatpush.msra.mxu0 0.0
        %3301 = vmatpush.msra.mxu0 0.0
        %3302 = vmatpush.msra.mxu0 0.0
        %3303 = vmatpush.msra.mxu0 0.0
        %3304 = vmatpush.msra.mxu0 0.0
        %3305 = vmatpush.msra.mxu0 0.0
        %3306 = vmatpush.msra.mxu0 0.0
        %3307 = vmatpush.msra.mxu0 0.0
        %3308 = vmatpush.msra.mxu0 0.0
        %3309 = vmatpush.msra.mxu0 0.0
        %3310 = vmatpush.msra.mxu0 0.0
        %3311 = vmatpush.msra.mxu0 0.0
        %3312 = vmatpush.msra.mxu0 0.0
        %3313 = vmatpush.msra.mxu0 0.0
        %v3314 = vand.u32 %v231, 4294901760
        %3315 = vmatpush.msra.mxu0 %v3314
        %v3316 = vand.u32 %v229, 4294901760
        %3317 = vmatpush.msra.mxu0 %v3316
        %v3318 = vand.u32 %v2535, 4294901760
        %v3319 = vsub.f32 %v2535, %v3318
        %v3320 = vand.u32 %v3319, 4294901760
        %v3321 = vsub.f32 %v3319, %v3320
        %v3322 = vand.u32 %v3321, 4294901760
        %3323 = vmatmul.f32.gmra.mxu0 %v3322
        %v3324 = vpop.f32.mrf.mxu0
        %v3325 = vadd.f32 0.0, %v3324
        %v3326 = vand.u32 %v2538, 4294901760
        %v3327 = vsub.f32 %v2538, %v3326
        %v3328 = vand.u32 %v3327, 4294901760
        %v3329 = vsub.f32 %v3327, %v3328
        %v3330 = vand.u32 %v3329, 4294901760
        %3331 = vmatmul.f32.gmra.mxu0 %v3330
        %v3332 = vpop.f32.mrf.mxu0
        %v3333 = vadd.f32 0.0, %v3332
        %3334 = vdwg.mxu0
        %3335 = vmatpush.msra.mxu0 0.0
        %3336 = vmatpush.msra.mxu0 0.0
        %3337 = vmatpush.msra.mxu0 0.0
        %3338 = vmatpush.msra.mxu0 0.0
        %3339 = vmatpush.msra.mxu0 0.0
        %3340 = vmatpush.msra.mxu0 0.0
        %3341 = vmatpush.msra.mxu0 0.0
        %3342 = vmatpush.msra.mxu0 0.0
        %3343 = vmatpush.msra.mxu0 0.0
        %3344 = vmatpush.msra.mxu0 0.0
        %3345 = vmatpush.msra.mxu0 0.0
        %3346 = vmatpush.msra.mxu0 0.0
        %3347 = vmatpush.msra.mxu0 0.0
        %3348 = vmatpush.msra.mxu0 0.0
        %v3349 = vand.u32 %v231, 4294901760
        %v3350 = vsub.f32 %v231, %v3349
        %v3351 = vand.u32 %v3350, 4294901760
        %v3352 = vsub.f32 %v3350, %v3351
        %v3353 = vand.u32 %v3352, 4294901760
        %3354 = vmatpush.msra.mxu0 %v3353
        %v3355 = vand.u32 %v229, 4294901760
        %v3356 = vsub.f32 %v229, %v3355
        %v3357 = vand.u32 %v3356, 4294901760
        %v3358 = vsub.f32 %v3356, %v3357
        %v3359 = vand.u32 %v3358, 4294901760
        %3360 = vmatpush.msra.mxu0 %v3359
        %v3361 = vand.u32 %v2535, 4294901760
        %3362 = vmatmul.f32.gmra.mxu0 %v3361
        %v3363 = vpop.f32.mrf.mxu0
        %v3364 = vadd.f32 %v3325, %v3363
        %v3365 = vand.u32 %v2538, 4294901760
        %3366 = vmatmul.f32.gmra.mxu0 %v3365
        %v3367 = vpop.f32.mrf.mxu0
        %v3368 = vadd.f32 %v3333, %v3367
        %3369 = vdwg.mxu0
        %3370 = vmatpush.msra.mxu0 0.0
        %3371 = vmatpush.msra.mxu0 0.0
        %3372 = vmatpush.msra.mxu0 0.0
        %3373 = vmatpush.msra.mxu0 0.0
        %3374 = vmatpush.msra.mxu0 0.0
        %3375 = vmatpush.msra.mxu0 0.0
        %3376 = vmatpush.msra.mxu0 0.0
        %3377 = vmatpush.msra.mxu0 0.0
        %3378 = vmatpush.msra.mxu0 0.0
        %3379 = vmatpush.msra.mxu0 0.0
        %3380 = vmatpush.msra.mxu0 0.0
        %3381 = vmatpush.msra.mxu0 0.0
        %3382 = vmatpush.msra.mxu0 0.0
        %3383 = vmatpush.msra.mxu0 0.0
        %v3384 = vand.u32 %v231, 4294901760
        %v3385 = vsub.f32 %v231, %v3384
        %3386 = vmatpush.msra.mxu0 %v3385
        %v3387 = vand.u32 %v229, 4294901760
        %v3388 = vsub.f32 %v229, %v3387
        %3389 = vmatpush.msra.mxu0 %v3388
        %v3390 = vand.u32 %v2535, 4294901760
        %v3391 = vsub.f32 %v2535, %v3390
        %3392 = vmatmul.f32.gmra.mxu0 %v3391
        %v3393 = vpop.f32.mrf.mxu0
        %v3394 = vadd.f32 %v3364, %v3393
        %v3395 = vand.u32 %v2538, 4294901760
        %v3396 = vsub.f32 %v2538, %v3395
        %3397 = vmatmul.f32.gmra.mxu0 %v3396
        %v3398 = vpop.f32.mrf.mxu0
        %v3399 = vadd.f32 %v3368, %v3398
        %3400 = vdwg.mxu0
        %3401 = vmatpush.msra.mxu0 0.0
        %3402 = vmatpush.msra.mxu0 0.0
        %3403 = vmatpush.msra.mxu0 0.0
        %3404 = vmatpush.msra.mxu0 0.0
        %3405 = vmatpush.msra.mxu0 0.0
        %3406 = vmatpush.msra.mxu0 0.0
        %3407 = vmatpush.msra.mxu0 0.0
        %3408 = vmatpush.msra.mxu0 0.0
        %3409 = vmatpush.msra.mxu0 0.0
        %3410 = vmatpush.msra.mxu0 0.0
        %3411 = vmatpush.msra.mxu0 0.0
        %3412 = vmatpush.msra.mxu0 0.0
        %3413 = vmatpush.msra.mxu0 0.0
        %3414 = vmatpush.msra.mxu0 0.0
        %v3415 = vand.u32 %v231, 4294901760
        %3416 = vmatpush.msra.mxu0 %v3415
        %v3417 = vand.u32 %v229, 4294901760
        %3418 = vmatpush.msra.mxu0 %v3417
        %v3419 = vand.u32 %v2535, 4294901760
        %v3420 = vsub.f32 %v2535, %v3419
        %v3421 = vand.u32 %v3420, 4294901760
        %3422 = vmatmul.f32.gmra.mxu0 %v3421
        %v3423 = vpop.f32.mrf.mxu0
        %v3424 = vadd.f32 %v3394, %v3423
        %v3425 = vand.u32 %v2538, 4294901760
        %v3426 = vsub.f32 %v2538, %v3425
        %v3427 = vand.u32 %v3426, 4294901760
        %3428 = vmatmul.f32.gmra.mxu0 %v3427
        %v3429 = vpop.f32.mrf.mxu0
        %v3430 = vadd.f32 %v3399, %v3429
        %3431 = vdwg.mxu0
        %3432 = vmatpush.msra.mxu0 0.0
        %3433 = vmatpush.msra.mxu0 0.0
        %3434 = vmatpush.msra.mxu0 0.0
        %3435 = vmatpush.msra.mxu0 0.0
        %3436 = vmatpush.msra.mxu0 0.0
        %3437 = vmatpush.msra.mxu0 0.0
        %3438 = vmatpush.msra.mxu0 0.0
        %3439 = vmatpush.msra.mxu0 0.0
        %3440 = vmatpush.msra.mxu0 0.0
        %3441 = vmatpush.msra.mxu0 0.0
        %3442 = vmatpush.msra.mxu0 0.0
        %3443 = vmatpush.msra.mxu0 0.0
        %3444 = vmatpush.msra.mxu0 0.0
        %3445 = vmatpush.msra.mxu0 0.0
        %v3446 = vand.u32 %v231, 4294901760
        %v3447 = vsub.f32 %v231, %v3446
        %v3448 = vand.u32 %v3447, 4294901760
        %3449 = vmatpush.msra.mxu0 %v3448
        %v3450 = vand.u32 %v229, 4294901760
        %v3451 = vsub.f32 %v229, %v3450
        %v3452 = vand.u32 %v3451, 4294901760
        %3453 = vmatpush.msra.mxu0 %v3452
        %v3454 = vand.u32 %v2535, 4294901760
        %3455 = vmatmul.f32.gmra.mxu0 %v3454
        %v3456 = vpop.f32.mrf.mxu0
        %v3457 = vadd.f32 %v3424, %v3456
        %v3458 = vand.u32 %v2538, 4294901760
        %3459 = vmatmul.f32.gmra.mxu0 %v3458
        %v3460 = vpop.f32.mrf.mxu0
        %v3461 = vadd.f32 %v3430, %v3460
        %3462 = vdwg.mxu0
        %3463 = vmatpush.msra.mxu0 0.0
        %3464 = vmatpush.msra.mxu0 0.0
        %3465 = vmatpush.msra.mxu0 0.0
        %3466 = vmatpush.msra.mxu0 0.0
        %3467 = vmatpush.msra.mxu0 0.0
        %3468 = vmatpush.msra.mxu0 0.0
        %3469 = vmatpush.msra.mxu0 0.0
        %3470 = vmatpush.msra.mxu0 0.0
        %3471 = vmatpush.msra.mxu0 0.0
        %3472 = vmatpush.msra.mxu0 0.0
        %3473 = vmatpush.msra.mxu0 0.0
        %3474 = vmatpush.msra.mxu0 0.0
        %3475 = vmatpush.msra.mxu0 0.0
        %3476 = vmatpush.msra.mxu0 0.0
        %v3477 = vand.u32 %v231, 4294901760
        %3478 = vmatpush.msra.mxu0 %v3477
        %v3479 = vand.u32 %v229, 4294901760
        %3480 = vmatpush.msra.mxu0 %v3479
        %v3481 = vand.u32 %v2535, 4294901760
        %3482 = vmatmul.f32.gmra.mxu0 %v3481
        %v3483 = vpop.f32.mrf.mxu0
        %v3484 = vadd.f32 %v3457, %v3483
        %v3485 = vand.u32 %v2538, 4294901760
        %3486 = vmatmul.f32.gmra.mxu0 %v3485
        %v3487 = vpop.f32.mrf.mxu0
        %v3488 = vadd.f32 %v3461, %v3487
        %3489 = vdwg.mxu0
        %3490 = vmatpush.msra.mxu0 0.0
        %3491 = vmatpush.msra.mxu0 0.0
        %3492 = vmatpush.msra.mxu0 0.0
        %3493 = vmatpush.msra.mxu0 0.0
        %3494 = vmatpush.msra.mxu0 0.0
        %3495 = vmatpush.msra.mxu0 0.0
        %3496 = vmatpush.msra.mxu0 0.0
        %3497 = vmatpush.msra.mxu0 0.0
        %3498 = vmatpush.msra.mxu0 0.0
        %3499 = vmatpush.msra.mxu0 0.0
        %3500 = vmatpush.msra.mxu0 0.0
        %3501 = vmatpush.msra.mxu0 0.0
        %3502 = vmatpush.msra.mxu0 0.0
        %3503 = vmatpush.msra.mxu0 0.0
        %v3504 = vand.u32 %v232, 4294901760
        %3505 = vmatpush.msra.mxu0 %v3504
        %v3506 = vand.u32 %v230, 4294901760
        %3507 = vmatpush.msra.mxu0 %v3506
        %v3508 = vand.u32 %v2535, 4294901760
        %v3509 = vsub.f32 %v2535, %v3508
        %v3510 = vand.u32 %v3509, 4294901760
        %v3511 = vsub.f32 %v3509, %v3510
        %v3512 = vand.u32 %v3511, 4294901760
        %3513 = vmatmul.f32.gmra.mxu0 %v3512
        %v3514 = vpop.f32.mrf.mxu0
        %v3515 = vadd.f32 0.0, %v3514
        %v3516 = vand.u32 %v2538, 4294901760
        %v3517 = vsub.f32 %v2538, %v3516
        %v3518 = vand.u32 %v3517, 4294901760
        %v3519 = vsub.f32 %v3517, %v3518
        %v3520 = vand.u32 %v3519, 4294901760
        %3521 = vmatmul.f32.gmra.mxu0 %v3520
        %v3522 = vpop.f32.mrf.mxu0
        %v3523 = vadd.f32 0.0, %v3522
        %3524 = vdwg.mxu0
        %3525 = vmatpush.msra.mxu0 0.0
        %3526 = vmatpush.msra.mxu0 0.0
        %3527 = vmatpush.msra.mxu0 0.0
        %3528 = vmatpush.msra.mxu0 0.0
        %3529 = vmatpush.msra.mxu0 0.0
        %3530 = vmatpush.msra.mxu0 0.0
        %3531 = vmatpush.msra.mxu0 0.0
        %3532 = vmatpush.msra.mxu0 0.0
        %3533 = vmatpush.msra.mxu0 0.0
        %3534 = vmatpush.msra.mxu0 0.0
        %3535 = vmatpush.msra.mxu0 0.0
        %3536 = vmatpush.msra.mxu0 0.0
        %3537 = vmatpush.msra.mxu0 0.0
        %3538 = vmatpush.msra.mxu0 0.0
        %v3539 = vand.u32 %v232, 4294901760
        %v3540 = vsub.f32 %v232, %v3539
        %v3541 = vand.u32 %v3540, 4294901760
        %v3542 = vsub.f32 %v3540, %v3541
        %v3543 = vand.u32 %v3542, 4294901760
        %3544 = vmatpush.msra.mxu0 %v3543
        %v3545 = vand.u32 %v230, 4294901760
        %v3546 = vsub.f32 %v230, %v3545
        %v3547 = vand.u32 %v3546, 4294901760
        %v3548 = vsub.f32 %v3546, %v3547
        %v3549 = vand.u32 %v3548, 4294901760
        %3550 = vmatpush.msra.mxu0 %v3549
        %v3551 = vand.u32 %v2535, 4294901760
        %3552 = vmatmul.f32.gmra.mxu0 %v3551
        %v3553 = vpop.f32.mrf.mxu0
        %v3554 = vadd.f32 %v3515, %v3553
        %v3555 = vand.u32 %v2538, 4294901760
        %3556 = vmatmul.f32.gmra.mxu0 %v3555
        %v3557 = vpop.f32.mrf.mxu0
        %v3558 = vadd.f32 %v3523, %v3557
        %3559 = vdwg.mxu0
        %3560 = vmatpush.msra.mxu0 0.0
        %3561 = vmatpush.msra.mxu0 0.0
        %3562 = vmatpush.msra.mxu0 0.0
        %3563 = vmatpush.msra.mxu0 0.0
        %3564 = vmatpush.msra.mxu0 0.0
        %3565 = vmatpush.msra.mxu0 0.0
        %3566 = vmatpush.msra.mxu0 0.0
        %3567 = vmatpush.msra.mxu0 0.0
        %3568 = vmatpush.msra.mxu0 0.0
        %3569 = vmatpush.msra.mxu0 0.0
        %3570 = vmatpush.msra.mxu0 0.0
        %3571 = vmatpush.msra.mxu0 0.0
        %3572 = vmatpush.msra.mxu0 0.0
        %3573 = vmatpush.msra.mxu0 0.0
        %v3574 = vand.u32 %v232, 4294901760
        %v3575 = vsub.f32 %v232, %v3574
        %3576 = vmatpush.msra.mxu0 %v3575
        %v3577 = vand.u32 %v230, 4294901760
        %v3578 = vsub.f32 %v230, %v3577
        %3579 = vmatpush.msra.mxu0 %v3578
        %v3580 = vand.u32 %v2535, 4294901760
        %v3581 = vsub.f32 %v2535, %v3580
        %3582 = vmatmul.f32.gmra.mxu0 %v3581
        %v3583 = vpop.f32.mrf.mxu0
        %v3584 = vadd.f32 %v3554, %v3583
        %v3585 = vand.u32 %v2538, 4294901760
        %v3586 = vsub.f32 %v2538, %v3585
        %3587 = vmatmul.f32.gmra.mxu0 %v3586
        %v3588 = vpop.f32.mrf.mxu0
        %v3589 = vadd.f32 %v3558, %v3588
        %3590 = vdwg.mxu0
        %3591 = vmatpush.msra.mxu0 0.0
        %3592 = vmatpush.msra.mxu0 0.0
        %3593 = vmatpush.msra.mxu0 0.0
        %3594 = vmatpush.msra.mxu0 0.0
        %3595 = vmatpush.msra.mxu0 0.0
        %3596 = vmatpush.msra.mxu0 0.0
        %3597 = vmatpush.msra.mxu0 0.0
        %3598 = vmatpush.msra.mxu0 0.0
        %3599 = vmatpush.msra.mxu0 0.0
        %3600 = vmatpush.msra.mxu0 0.0
        %3601 = vmatpush.msra.mxu0 0.0
        %3602 = vmatpush.msra.mxu0 0.0
        %3603 = vmatpush.msra.mxu0 0.0
        %3604 = vmatpush.msra.mxu0 0.0
        %v3605 = vand.u32 %v232, 4294901760
        %3606 = vmatpush.msra.mxu0 %v3605
        %v3607 = vand.u32 %v230, 4294901760
        %3608 = vmatpush.msra.mxu0 %v3607
        %v3609 = vand.u32 %v2535, 4294901760
        %v3610 = vsub.f32 %v2535, %v3609
        %v3611 = vand.u32 %v3610, 4294901760
        %3612 = vmatmul.f32.gmra.mxu0 %v3611
        %v3613 = vpop.f32.mrf.mxu0
        %v3614 = vadd.f32 %v3584, %v3613
        %v3615 = vand.u32 %v2538, 4294901760
        %v3616 = vsub.f32 %v2538, %v3615
        %v3617 = vand.u32 %v3616, 4294901760
        %3618 = vmatmul.f32.gmra.mxu0 %v3617
        %v3619 = vpop.f32.mrf.mxu0
        %v3620 = vadd.f32 %v3589, %v3619
        %3621 = vdwg.mxu0
        %3622 = vmatpush.msra.mxu0 0.0
        %3623 = vmatpush.msra.mxu0 0.0
        %3624 = vmatpush.msra.mxu0 0.0
        %3625 = vmatpush.msra.mxu0 0.0
        %3626 = vmatpush.msra.mxu0 0.0
        %3627 = vmatpush.msra.mxu0 0.0
        %3628 = vmatpush.msra.mxu0 0.0
        %3629 = vmatpush.msra.mxu0 0.0
        %3630 = vmatpush.msra.mxu0 0.0
        %3631 = vmatpush.msra.mxu0 0.0
        %3632 = vmatpush.msra.mxu0 0.0
        %3633 = vmatpush.msra.mxu0 0.0
        %3634 = vmatpush.msra.mxu0 0.0
        %3635 = vmatpush.msra.mxu0 0.0
        %v3636 = vand.u32 %v232, 4294901760
        %v3637 = vsub.f32 %v232, %v3636
        %v3638 = vand.u32 %v3637, 4294901760
        %3639 = vmatpush.msra.mxu0 %v3638
        %v3640 = vand.u32 %v230, 4294901760
        %v3641 = vsub.f32 %v230, %v3640
        %v3642 = vand.u32 %v3641, 4294901760
        %3643 = vmatpush.msra.mxu0 %v3642
        %v3644 = vand.u32 %v2535, 4294901760
        %3645 = vmatmul.f32.gmra.mxu0 %v3644
        %v3646 = vpop.f32.mrf.mxu0
        %v3647 = vadd.f32 %v3614, %v3646
        %v3648 = vand.u32 %v2538, 4294901760
        %3649 = vmatmul.f32.gmra.mxu0 %v3648
        %v3650 = vpop.f32.mrf.mxu0
        %v3651 = vadd.f32 %v3620, %v3650
        %3652 = vdwg.mxu0
        %3653 = vmatpush.msra.mxu0 0.0
        %3654 = vmatpush.msra.mxu0 0.0
        %3655 = vmatpush.msra.mxu0 0.0
        %3656 = vmatpush.msra.mxu0 0.0
        %3657 = vmatpush.msra.mxu0 0.0
        %3658 = vmatpush.msra.mxu0 0.0
        %3659 = vmatpush.msra.mxu0 0.0
        %3660 = vmatpush.msra.mxu0 0.0
        %3661 = vmatpush.msra.mxu0 0.0
        %3662 = vmatpush.msra.mxu0 0.0
        %3663 = vmatpush.msra.mxu0 0.0
        %3664 = vmatpush.msra.mxu0 0.0
        %3665 = vmatpush.msra.mxu0 0.0
        %3666 = vmatpush.msra.mxu0 0.0
        %v3667 = vand.u32 %v232, 4294901760
        %3668 = vmatpush.msra.mxu0 %v3667
        %v3669 = vand.u32 %v230, 4294901760
        %3670 = vmatpush.msra.mxu0 %v3669
        %v3671 = vand.u32 %v2535, 4294901760
        %3672 = vmatmul.f32.gmra.mxu0 %v3671
        %v3673 = vpop.f32.mrf.mxu0
        %v3674 = vadd.f32 %v3647, %v3673
        %v3675 = vand.u32 %v2538, 4294901760
        %3676 = vmatmul.f32.gmra.mxu0 %v3675
        %v3677 = vpop.f32.mrf.mxu0
        %v3678 = vadd.f32 %v3651, %v3677
        %3679 = vdwg.mxu0
        %v3680 = vmul.f32 %v806, %v2335
        %v3681 = vmul.f32 %v996, %v2525
        %v3682 = vmul.f32 %v810, %v2339
        %v3683 = vmul.f32 %v1000, %v2529
        %v3684 = vmul.f32 %v1186, %v1955
        %v3685 = vmul.f32 %v1376, %v2145
        %v3686 = vmul.f32 %v1190, %v1959
        %v3687 = vmul.f32 %v1380, %v2149
        %v3688 = vsub.f32 %v3680, %v3684
        %v3689 = vsub.f32 %v3681, %v3685
        %v3690 = vsub.f32 %v3682, %v3686
        %v3691 = vsub.f32 %v3683, %v3687
        %v3692 = vmul.f32 %v1186, %v1575
        %v3693 = vmul.f32 %v1376, %v1765
        %v3694 = vmul.f32 %v1190, %v1579
        %v3695 = vmul.f32 %v1380, %v1769
        %v3696 = vmul.f32 %v426, %v2335
        %v3697 = vmul.f32 %v616, %v2525
        %v3698 = vmul.f32 %v430, %v2339
        %v3699 = vmul.f32 %v620, %v2529
        %v3700 = vsub.f32 %v3692, %v3696
        %v3701 = vsub.f32 %v3693, %v3697
        %v3702 = vsub.f32 %v3694, %v3698
        %v3703 = vsub.f32 %v3695, %v3699
        %v3704 = vmul.f32 %v426, %v1955
        %v3705 = vmul.f32 %v616, %v2145
        %v3706 = vmul.f32 %v430, %v1959
        %v3707 = vmul.f32 %v620, %v2149
        %v3708 = vmul.f32 %v806, %v1575
        %v3709 = vmul.f32 %v996, %v1765
        %v3710 = vmul.f32 %v810, %v1579
        %v3711 = vmul.f32 %v1000, %v1769
        %v3712 = vsub.f32 %v3704, %v3708
        %v3713 = vsub.f32 %v3705, %v3709
        %v3714 = vsub.f32 %v3706, %v3710
        %v3715 = vsub.f32 %v3707, %v3711
        %v3716 = vmul.f32 %v1955, %v3484
        %v3717 = vmul.f32 %v2145, %v3674
        %v3718 = vmul.f32 %v1959, %v3488
        %v3719 = vmul.f32 %v2149, %v3678
        %v3720 = vmul.f32 %v2335, %v3104
        %v3721 = vmul.f32 %v2525, %v3294
        %v3722 = vmul.f32 %v2339, %v3108
        %v3723 = vmul.f32 %v2529, %v3298
        %v3724 = vsub.f32 %v3716, %v3720
        %v3725 = vsub.f32 %v3717, %v3721
        %v3726 = vsub.f32 %v3718, %v3722
        %v3727 = vsub.f32 %v3719, %v3723
        %v3728 = vmul.f32 %v2335, %v2724
        %v3729 = vmul.f32 %v2525, %v2914
        %v3730 = vmul.f32 %v2339, %v2728
        %v3731 = vmul.f32 %v2529, %v2918
        %v3732 = vmul.f32 %v1575, %v3484
        %v3733 = vmul.f32 %v1765, %v3674
        %v3734 = vmul.f32 %v1579, %v3488
        %v3735 = vmul.f32 %v1769, %v3678
        %v3736 = vsub.f32 %v3728, %v3732
        %v3737 = vsub.f32 %v3729, %v3733
        %v3738 = vsub.f32 %v3730, %v3734
        %v3739 = vsub.f32 %v3731, %v3735
        %v3740 = vmul.f32 %v1575, %v3104
        %v3741 = vmul.f32 %v1765, %v3294
        %v3742 = vmul.f32 %v1579, %v3108
        %v3743 = vmul.f32 %v1769, %v3298
        %v3744 = vmul.f32 %v1955, %v2724
        %v3745 = vmul.f32 %v2145, %v2914
        %v3746 = vmul.f32 %v1959, %v2728
        %v3747 = vmul.f32 %v2149, %v2918
        %v3748 = vsub.f32 %v3740, %v3744
        %v3749 = vsub.f32 %v3741, %v3745
        %v3750 = vsub.f32 %v3742, %v3746
        %v3751 = vsub.f32 %v3743, %v3747
        %v3752 = vmul.f32 %v3700, %v2335
        %v3753 = vmul.f32 %v3701, %v2525
        %v3754 = vmul.f32 %v3702, %v2339
        %v3755 = vmul.f32 %v3703, %v2529
        %v3756 = vmul.f32 %v3712, %v1955
        %v3757 = vmul.f32 %v3713, %v2145
        %v3758 = vmul.f32 %v3714, %v1959
        %v3759 = vmul.f32 %v3715, %v2149
        %v3760 = vsub.f32 %v3752, %v3756
        %v3761 = vsub.f32 %v3753, %v3757
        %v3762 = vsub.f32 %v3754, %v3758
        %v3763 = vsub.f32 %v3755, %v3759
        %v3764 = vmul.f32 %v3712, %v1575
        %v3765 = vmul.f32 %v3713, %v1765
        %v3766 = vmul.f32 %v3714, %v1579
        %v3767 = vmul.f32 %v3715, %v1769
        %v3768 = vmul.f32 %v3688, %v2335
        %v3769 = vmul.f32 %v3689, %v2525
        %v3770 = vmul.f32 %v3690, %v2339
        %v3771 = vmul.f32 %v3691, %v2529
        %v3772 = vsub.f32 %v3764, %v3768
        %v3773 = vsub.f32 %v3765, %v3769
        %v3774 = vsub.f32 %v3766, %v3770
        %v3775 = vsub.f32 %v3767, %v3771
        %v3776 = vmul.f32 %v3688, %v1955
        %v3777 = vmul.f32 %v3689, %v2145
        %v3778 = vmul.f32 %v3690, %v1959
        %v3779 = vmul.f32 %v3691, %v2149
        %v3780 = vmul.f32 %v3700, %v1575
        %v3781 = vmul.f32 %v3701, %v1765
        %v3782 = vmul.f32 %v3702, %v1579
        %v3783 = vmul.f32 %v3703, %v1769
        %v3784 = vsub.f32 %v3776, %v3780
        %v3785 = vsub.f32 %v3777, %v3781
        %v3786 = vsub.f32 %v3778, %v3782
        %v3787 = vsub.f32 %v3779, %v3783
        %v3788 = vmul.f32 %v3688, %v3688
        %v3789 = vmul.f32 %v3689, %v3689
        %v3790 = vmul.f32 %v3690, %v3690
        %v3791 = vmul.f32 %v3691, %v3691
        %v3792 = vmul.f32 %v3700, %v3700
        %v3793 = vmul.f32 %v3701, %v3701
        %v3794 = vmul.f32 %v3702, %v3702
        %v3795 = vmul.f32 %v3703, %v3703
        %v3796 = vadd.f32 %v3788, %v3792
        %v3797 = vadd.f32 %v3789, %v3793
        %v3798 = vadd.f32 %v3790, %v3794
        %v3799 = vadd.f32 %v3791, %v3795
        %v3800 = vmul.f32 %v3712, %v3712
        %v3801 = vmul.f32 %v3713, %v3713
        %v3802 = vmul.f32 %v3714, %v3714
        %v3803 = vmul.f32 %v3715, %v3715
        %v3804 = vadd.f32 %v3796, %v3800
        %v3805 = vadd.f32 %v3797, %v3801
        %v3806 = vadd.f32 %v3798, %v3802
        %v3807 = vadd.f32 %v3799, %v3803
        %v3808 = vmax.f32 %v3804, 1e-24
        %v3809 = vmax.f32 %v3805, 1e-24
        %v3810 = vmax.f32 %v3806, 1e-24
        %v3811 = vmax.f32 %v3807, 1e-24
        %v3812 = vrsqrt.pop %v3808
        %v3813 = vmul.f32 %v3812, %v3808
        %v3814 = vmul.f32 %v3813, %v3812
        %v3815 = vmul.f32 0.5, %v3814
        %v3816 = vsub.f32 1.5, %v3815
        %v3817 = vmul.f32 %v3812, %v3816
        %vm3818 = vweird.f32 %v3808
        %vm3819 = vweird.f32 %v3812
        %vm3820 = vmor %vm3818, %vm3819
        %v3821 = vsel %vm3820, %v3812, %v3817
        %v3822 = vrsqrt.pop %v3809
        %v3823 = vmul.f32 %v3822, %v3809
        %v3824 = vmul.f32 %v3823, %v3822
        %v3825 = vmul.f32 0.5, %v3824
        %v3826 = vsub.f32 1.5, %v3825
        %v3827 = vmul.f32 %v3822, %v3826
        %vm3828 = vweird.f32 %v3809
        %vm3829 = vweird.f32 %v3822
        %vm3830 = vmor %vm3828, %vm3829
        %v3831 = vsel %vm3830, %v3822, %v3827
        %v3832 = vrsqrt.pop %v3810
        %v3833 = vmul.f32 %v3832, %v3810
        %v3834 = vmul.f32 %v3833, %v3832
        %v3835 = vmul.f32 0.5, %v3834
        %v3836 = vsub.f32 1.5, %v3835
        %v3837 = vmul.f32 %v3832, %v3836
        %vm3838 = vweird.f32 %v3810
        %vm3839 = vweird.f32 %v3832
        %vm3840 = vmor %vm3838, %vm3839
        %v3841 = vsel %vm3840, %v3832, %v3837
        %v3842 = vrsqrt.pop %v3811
        %v3843 = vmul.f32 %v3842, %v3811
        %v3844 = vmul.f32 %v3843, %v3842
        %v3845 = vmul.f32 0.5, %v3844
        %v3846 = vsub.f32 1.5, %v3845
        %v3847 = vmul.f32 %v3842, %v3846
        %vm3848 = vweird.f32 %v3811
        %vm3849 = vweird.f32 %v3842
        %vm3850 = vmor %vm3848, %vm3849
        %v3851 = vsel %vm3850, %v3842, %v3847
        %v3852 = vmul.f32 %v3724, %v3724
        %v3853 = vmul.f32 %v3725, %v3725
        %v3854 = vmul.f32 %v3726, %v3726
        %v3855 = vmul.f32 %v3727, %v3727
        %v3856 = vmul.f32 %v3736, %v3736
        %v3857 = vmul.f32 %v3737, %v3737
        %v3858 = vmul.f32 %v3738, %v3738
        %v3859 = vmul.f32 %v3739, %v3739
        %v3860 = vadd.f32 %v3852, %v3856
        %v3861 = vadd.f32 %v3853, %v3857
        %v3862 = vadd.f32 %v3854, %v3858
        %v3863 = vadd.f32 %v3855, %v3859
        %v3864 = vmul.f32 %v3748, %v3748
        %v3865 = vmul.f32 %v3749, %v3749
        %v3866 = vmul.f32 %v3750, %v3750
        %v3867 = vmul.f32 %v3751, %v3751
        %v3868 = vadd.f32 %v3860, %v3864
        %v3869 = vadd.f32 %v3861, %v3865
        %v3870 = vadd.f32 %v3862, %v3866
        %v3871 = vadd.f32 %v3863, %v3867
        %v3872 = vmax.f32 %v3868, 1e-24
        %v3873 = vmax.f32 %v3869, 1e-24
        %v3874 = vmax.f32 %v3870, 1e-24
        %v3875 = vmax.f32 %v3871, 1e-24
        %v3876 = vrsqrt.pop %v3872
        %v3877 = vmul.f32 %v3876, %v3872
        %v3878 = vmul.f32 %v3877, %v3876
        %v3879 = vmul.f32 0.5, %v3878
        %v3880 = vsub.f32 1.5, %v3879
        %v3881 = vmul.f32 %v3876, %v3880
        %vm3882 = vweird.f32 %v3872
        %vm3883 = vweird.f32 %v3876
        %vm3884 = vmor %vm3882, %vm3883
        %v3885 = vsel %vm3884, %v3876, %v3881
        %v3886 = vrsqrt.pop %v3873
        %v3887 = vmul.f32 %v3886, %v3873
        %v3888 = vmul.f32 %v3887, %v3886
        %v3889 = vmul.f32 0.5, %v3888
        %v3890 = vsub.f32 1.5, %v3889
        %v3891 = vmul.f32 %v3886, %v3890
        %vm3892 = vweird.f32 %v3873
        %vm3893 = vweird.f32 %v3886
        %vm3894 = vmor %vm3892, %vm3893
        %v3895 = vsel %vm3894, %v3886, %v3891
        %v3896 = vrsqrt.pop %v3874
        %v3897 = vmul.f32 %v3896, %v3874
        %v3898 = vmul.f32 %v3897, %v3896
        %v3899 = vmul.f32 0.5, %v3898
        %v3900 = vsub.f32 1.5, %v3899
        %v3901 = vmul.f32 %v3896, %v3900
        %vm3902 = vweird.f32 %v3874
        %vm3903 = vweird.f32 %v3896
        %vm3904 = vmor %vm3902, %vm3903
        %v3905 = vsel %vm3904, %v3896, %v3901
        %v3906 = vrsqrt.pop %v3875
        %v3907 = vmul.f32 %v3906, %v3875
        %v3908 = vmul.f32 %v3907, %v3906
        %v3909 = vmul.f32 0.5, %v3908
        %v3910 = vsub.f32 1.5, %v3909
        %v3911 = vmul.f32 %v3906, %v3910
        %vm3912 = vweird.f32 %v3875
        %vm3913 = vweird.f32 %v3906
        %vm3914 = vmor %vm3912, %vm3913
        %v3915 = vsel %vm3914, %v3906, %v3911
        %v3916 = vmul.f32 %v3760, %v3760
        %v3917 = vmul.f32 %v3761, %v3761
        %v3918 = vmul.f32 %v3762, %v3762
        %v3919 = vmul.f32 %v3763, %v3763
        %v3920 = vmul.f32 %v3772, %v3772
        %v3921 = vmul.f32 %v3773, %v3773
        %v3922 = vmul.f32 %v3774, %v3774
        %v3923 = vmul.f32 %v3775, %v3775
        %v3924 = vadd.f32 %v3916, %v3920
        %v3925 = vadd.f32 %v3917, %v3921
        %v3926 = vadd.f32 %v3918, %v3922
        %v3927 = vadd.f32 %v3919, %v3923
        %v3928 = vmul.f32 %v3784, %v3784
        %v3929 = vmul.f32 %v3785, %v3785
        %v3930 = vmul.f32 %v3786, %v3786
        %v3931 = vmul.f32 %v3787, %v3787
        %v3932 = vadd.f32 %v3924, %v3928
        %v3933 = vadd.f32 %v3925, %v3929
        %v3934 = vadd.f32 %v3926, %v3930
        %v3935 = vadd.f32 %v3927, %v3931
        %v3936 = vmax.f32 %v3932, 1e-24
        %v3937 = vmax.f32 %v3933, 1e-24
        %v3938 = vmax.f32 %v3934, 1e-24
        %v3939 = vmax.f32 %v3935, 1e-24
        %v3940 = vrsqrt.pop %v3936
        %v3941 = vmul.f32 %v3940, %v3936
        %v3942 = vmul.f32 %v3941, %v3940
        %v3943 = vmul.f32 0.5, %v3942
        %v3944 = vsub.f32 1.5, %v3943
        %v3945 = vmul.f32 %v3940, %v3944
        %vm3946 = vweird.f32 %v3936
        %vm3947 = vweird.f32 %v3940
        %vm3948 = vmor %vm3946, %vm3947
        %v3949 = vsel %vm3948, %v3940, %v3945
        %v3950 = vrsqrt.pop %v3937
        %v3951 = vmul.f32 %v3950, %v3937
        %v3952 = vmul.f32 %v3951, %v3950
        %v3953 = vmul.f32 0.5, %v3952
        %v3954 = vsub.f32 1.5, %v3953
        %v3955 = vmul.f32 %v3950, %v3954
        %vm3956 = vweird.f32 %v3937
        %vm3957 = vweird.f32 %v3950
        %vm3958 = vmor %vm3956, %vm3957
        %v3959 = vsel %vm3958, %v3950, %v3955
        %v3960 = vrsqrt.pop %v3938
        %v3961 = vmul.f32 %v3960, %v3938
        %v3962 = vmul.f32 %v3961, %v3960
        %v3963 = vmul.f32 0.5, %v3962
        %v3964 = vsub.f32 1.5, %v3963
        %v3965 = vmul.f32 %v3960, %v3964
        %vm3966 = vweird.f32 %v3938
        %vm3967 = vweird.f32 %v3960
        %vm3968 = vmor %vm3966, %vm3967
        %v3969 = vsel %vm3968, %v3960, %v3965
        %v3970 = vrsqrt.pop %v3939
        %v3971 = vmul.f32 %v3970, %v3939
        %v3972 = vmul.f32 %v3971, %v3970
        %v3973 = vmul.f32 0.5, %v3972
        %v3974 = vsub.f32 1.5, %v3973
        %v3975 = vmul.f32 %v3970, %v3974
        %vm3976 = vweird.f32 %v3939
        %vm3977 = vweird.f32 %v3970
        %vm3978 = vmor %vm3976, %vm3977
        %v3979 = vsel %vm3978, %v3970, %v3975
        %v3980 = vmul.f32 %v3688, %v3724
        %v3981 = vmul.f32 %v3689, %v3725
        %v3982 = vmul.f32 %v3690, %v3726
        %v3983 = vmul.f32 %v3691, %v3727
        %v3984 = vmul.f32 %v3700, %v3736
        %v3985 = vmul.f32 %v3701, %v3737
        %v3986 = vmul.f32 %v3702, %v3738
        %v3987 = vmul.f32 %v3703, %v3739
        %v3988 = vadd.f32 %v3980, %v3984
        %v3989 = vadd.f32 %v3981, %v3985
        %v3990 = vadd.f32 %v3982, %v3986
        %v3991 = vadd.f32 %v3983, %v3987
        %v3992 = vmul.f32 %v3712, %v3748
        %v3993 = vmul.f32 %v3713, %v3749
        %v3994 = vmul.f32 %v3714, %v3750
        %v3995 = vmul.f32 %v3715, %v3751
        %v3996 = vadd.f32 %v3988, %v3992
        %v3997 = vadd.f32 %v3989, %v3993
        %v3998 = vadd.f32 %v3990, %v3994
        %v3999 = vadd.f32 %v3991, %v3995
        %v4000 = vmul.f32 %v3821, %v3885
        %v4001 = vmul.f32 %v3831, %v3895
        %v4002 = vmul.f32 %v3841, %v3905
        %v4003 = vmul.f32 %v3851, %v3915
        %v4004 = vmul.f32 %v3996, %v4000
        %v4005 = vmul.f32 %v3997, %v4001
        %v4006 = vmul.f32 %v3998, %v4002
        %v4007 = vmul.f32 %v3999, %v4003
        %v4008 = vmul.f32 %v3760, %v3724
        %v4009 = vmul.f32 %v3761, %v3725
        %v4010 = vmul.f32 %v3762, %v3726
        %v4011 = vmul.f32 %v3763, %v3727
        %v4012 = vmul.f32 %v3772, %v3736
        %v4013 = vmul.f32 %v3773, %v3737
        %v4014 = vmul.f32 %v3774, %v3738
        %v4015 = vmul.f32 %v3775, %v3739
        %v4016 = vadd.f32 %v4008, %v4012
        %v4017 = vadd.f32 %v4009, %v4013
        %v4018 = vadd.f32 %v4010, %v4014
        %v4019 = vadd.f32 %v4011, %v4015
        %v4020 = vmul.f32 %v3784, %v3748
        %v4021 = vmul.f32 %v3785, %v3749
        %v4022 = vmul.f32 %v3786, %v3750
        %v4023 = vmul.f32 %v3787, %v3751
        %v4024 = vadd.f32 %v4016, %v4020
        %v4025 = vadd.f32 %v4017, %v4021
        %v4026 = vadd.f32 %v4018, %v4022
        %v4027 = vadd.f32 %v4019, %v4023
        %v4028 = vmul.f32 %v3949, %v3885
        %v4029 = vmul.f32 %v3959, %v3895
        %v4030 = vmul.f32 %v3969, %v3905
        %v4031 = vmul.f32 %v3979, %v3915
        %v4032 = vmul.f32 %v4024, %v4028
        %v4033 = vmul.f32 %v4025, %v4029
        %v4034 = vmul.f32 %v4026, %v4030
        %v4035 = vmul.f32 %v4027, %v4031
        %v4036 = vsub.f32 0.0, %v4032
        %v4037 = vsub.f32 0.0, %v4033
        %v4038 = vsub.f32 0.0, %v4034
        %v4039 = vsub.f32 0.0, %v4035
        %4040 = vst [vmem:[%s209] sm:$0xff] %v4036
        %4041 = vst [vmem:[%s209 + $0x8] sm:$0xff] %v4037
        %4042 = vst [vmem:[%s209 + $0x10] sm:$0xff] %v4038
        %4043 = vst [vmem:[%s209 + $0x18] sm:$0xff] %v4039
        %s4044 = scalar_lea.vmem %s209, 32 [#allocation3]
        %4045 = vst [vmem:[%s4044] sm:$0xff] %v4004
        %4046 = vst [vmem:[%s4044 + $0x8] sm:$0xff] %v4005
        %4047 = vst [vmem:[%s4044 + $0x10] sm:$0xff] %v4006
        %4048 = vst [vmem:[%s4044 + $0x18] sm:$0xff] %v4007
        %s4049 = sand.u32 %s87, 1
        %s4050 = sand.u32 %s87, 1
        %s4051 = smul.addr %s4050, 64
        %s4052 = scalar_lea.vmem [#allocation3], %s4051
        // Predicated region
        $region52: #{_lambda_.1} parent=46 // pred_check
          %p4053 = pneg %p97
        $region53: #{_lambda_.1} parent=46 // pred_check_branch
          %4055 = sbr.rel (%p4053) target = $region55
        $region54: #{_lambda_.1} parent=46 // pred_region
          %s4056 = smul.u32 2, %s18
          %s4057 = smul.u32 2, %s17
          %s4058 = smul.addr %s4056, 4
          %s4059 = sadd.s32 %s4057, %s4058
          %s4060 = smul.addr %s4059, 8
          %s4061 = scalar_lea.vmem %s2, %s4060
          // Predicated region
          $region56: #{_lambda_.1} parent=54 // pred_check
            _
          $region57: #{_lambda_.1} parent=54 // pred_check_branch
            %4063 = sbr.rel (0) target = $region59
          $region58: #{_lambda_.1} parent=54 // pred_region
            // Predicated region
            $region60: #{_lambda_.1} parent=58 // pred_check
              _
            $region61: #{_lambda_.1} parent=58 // pred_check_branch
              %4065 = sbr.rel (0) target = $region63
            $region62: #{_lambda_.1} parent=58 // pred_region
              loop: start=0, step=1, limit=1
              $region64: #{_lambda_.1} parent=62 // loop_pre_header
                _
              $region65: #{_lambda_.1} parent=62 // loop_header
                %s4067 = sphi 0, %s4071
                %p4068 = scmp.ge.s32.totalorder %s4067, 1
                %s4072 = sphi %s4052, %s4052
                %s4073 = sphi %s4061, %s4061
              $region66: #{_lambda_.1} parent=62 // loop_header_branch
                %4070 = sbr.rel (%p4068) target = $region70
              $region67: #{_lambda_.1} parent=62 // loop_body
                %v4074 = vld [vmem:[%s4072] sm:$0xff]
                %4075 = vst [vmem:[%s4073] sm:$0xff] %v4074
                %v4076 = vld [vmem:[%s4072 + $0x8] sm:$0xff]
                %4077 = vst [vmem:[%s4073 + $0x8] sm:$0xff] %v4076
                %v4078 = vld [vmem:[%s4072 + $0x10] sm:$0xff]
                %4079 = vst [vmem:[%s4073 + $0x20] sm:$0xff] %v4078
                %v4080 = vld [vmem:[%s4072 + $0x18] sm:$0xff]
                %4081 = vst [vmem:[%s4073 + $0x28] sm:$0xff] %v4080
                %v4082 = vld [vmem:[%s4072 + $0x20] sm:$0xff]
                %4083 = vst [vmem:[%s4073 + $0x40] sm:$0xff] %v4082
                %v4084 = vld [vmem:[%s4072 + $0x28] sm:$0xff]
                %4085 = vst [vmem:[%s4073 + $0x48] sm:$0xff] %v4084
                %v4086 = vld [vmem:[%s4072 + $0x30] sm:$0xff]
                %4087 = vst [vmem:[%s4073 + $0x60] sm:$0xff] %v4086
                %v4088 = vld [vmem:[%s4072 + $0x38] sm:$0xff]
                %4089 = vst [vmem:[%s4073 + $0x68] sm:$0xff] %v4088
              $region68: #{_lambda_.1} parent=62 // loop_footer
                %s4071 = sadd.s32 1, %s4067
              $region69: #{_lambda_.1} parent=62 // loop_footer_branch
                %4066 = sbr.rel target = $region65
              $region70: #{_lambda_.1} parent=62 // loop_exit
                _
            $region63: #{_lambda_.1} parent=58 // pred_fallthru
              _
            // Predicated region
            $region71: #{_lambda_.1} parent=58 // pred_check
              _
            $region72: #{_lambda_.1} parent=58 // pred_check_branch
              %4091 = sbr.rel target = $region74
            $region73: #{_lambda_.1} parent=58 // pred_region
              _
            $region74: #{_lambda_.1} parent=58 // pred_fallthru
              _
          $region59: #{_lambda_.1} parent=54 // pred_fallthru
            _
          %4092 = vnop
        $region55: #{_lambda_.1} parent=46 // pred_fallthru
          _
      $region47: #{_lambda_.1} parent=5 // pred_fallthru
        _
      %p4093 = scmp.le.s32.totalorder 2, %s8
      // Predicated region
      $region75: #{_lambda_.1} parent=5 // pred_check
        %p4094 = pneg %p4093
      $region76: #{_lambda_.1} parent=5 // pred_check_branch
        %4096 = sbr.rel (%p4094) target = $region78
      $region77: #{_lambda_.1} parent=5 // pred_region
        %s4097 = ssub.s32 %s8, 2
        // Predicated region
        $region79: #{_lambda_.1} parent=77 // pred_check
          %p4098 = pneg %p103
        $region80: #{_lambda_.1} parent=77 // pred_check_branch
          %4100 = sbr.rel (%p4098) target = $region82
        $region81: #{_lambda_.1} parent=77 // pred_region
          %s4101 = sand.u32 %s88, 1
          %s4102 = sand.u32 %s88, 1
          %s4103 = smul.addr %s4102, 64
          %s4104 = scalar_lea.vmem [#allocation3], %s4103
        $region82: #{_lambda_.1} parent=77 // pred_fallthru
          _
      $region78: #{_lambda_.1} parent=5 // pred_fallthru
        _
    $region6: #{_lambda_.1} parent=1 // loop_footer
      %s12 = sadd.s32 1, %s8
    $region7: #{_lambda_.1} parent=1 // loop_footer_branch
      %7 = sbr.rel target = $region3
    $region8: #{_lambda_.1} parent=1 // loop_exit
      _

</llo_original>
